<compile_context>
chip_gen: v7x
topology: tpu7x:2x2x1
jax: 0.10.0
libtpu: 0.0.40
codegen_flags: <defaults>
</compile_context>

<pallas_src>
import functools

import jax
import jax.numpy as jnp
from jax.experimental import pallas as pl
from jax.experimental.pallas import tpu as pltpu

# ----------------------------- configuration --------------------------------
IMAGE_SIZE = 16
PATCH = 8
CHANNELS = 1
DIM = 32
DEPTH = 2
HEADS = 2
DIM_HEAD = 16
INNER = HEADS * DIM_HEAD          # 32
MLP_DIM = 64
HEAD_HIDDEN = 64
NUM_CLASSES = 8
NUM_PATCHES = (IMAGE_SIZE // PATCH) * (IMAGE_SIZE // PATCH)   # 4
PATCH_DIM = CHANNELS * PATCH * PATCH                          # 64
SEQ = NUM_PATCHES + 1                                         # 5  (cls + patches)
EPS = 1e-5
MAX_B_TILE = 32                   # images per grid step (multiple of 8)

# weights passed to the kernel (cls & pos are folded into pos_full in wrapper)
PARAM_ORDER_KERNEL = [
    "w_emb", "b_emb",
    "ln1g", "ln1b", "wqkv", "wo", "bo",
    "ln2g", "ln2b", "w1", "b1", "w2", "b2",
    "lnfg", "lnfb",
    "lnhg", "lnhb", "wh1", "bh1", "wh2", "bh2",
]


def _layernorm(x, g, b):
    mu = jnp.mean(x, axis=-1, keepdims=True)
    var = jnp.mean((x - mu) ** 2, axis=-1, keepdims=True)
    return (x - mu) * jax.lax.rsqrt(var + EPS) * g + b


def _gelu(x):
    # TODO(synk): PyTorch nn.GELU default uses exact erf; tanh approximation is
    # used here (and in the reference) for Mosaic-safe lowering.
    return jax.nn.gelu(x, approximate=True)


# ------------------------------- the kernel ---------------------------------
def vit_kernel(b_tile,
               patch_ref, bias_ref, pos_full_ref,
               w_emb, b_emb,
               ln1g, ln1b, wqkv, wo, bo,
               ln2g, ln2b, w1, b1, w2, b2,
               lnfg, lnfb,
               lnhg, lnhb, wh1, bh1, wh2, bh2,
               out_ref):
    R = SEQ * b_tile                      # total token rows in this tile

    # ---- patch embedding: one (NUM_PATCHES*b_tile, 64) x (64, 32) matmul -----
    patches = patch_ref[...].reshape(NUM_PATCHES * b_tile, PATCH_DIM)
    emb = jnp.dot(patches, w_emb[...],
                  preferred_element_type=jnp.float32) + b_emb[...]

    # ---- cls token + positional embedding (pre-folded into pos_full) ---------
    # rows [0, b_tile)           : cls + pos[0]        (constant per image)
    # rows [b_tile, SEQ*b_tile)  : patch tokens + pos[1..]
    x = jnp.concatenate(
        [pos_full_ref[0:b_tile, :], emb + pos_full_ref[b_tile:R, :]], axis=0)

    bias = bias_ref[...]                  # (R, R) block-diagonal additive mask
    scale = DIM_HEAD ** -0.5

    for l in range(DEPTH):
        # ---------------- multi-head self-attention (pre-LN) -----------------
        h = _layernorm(x, ln1g[l], ln1b[l])
        qkv = jnp.dot(h, wqkv[l], preferred_element_type=jnp.float32)  # (R, 96)
        q = qkv[:, 0 * INNER:1 * INNER] * scale     # fold scale into q once
        k = qkv[:, 1 * INNER:2 * INNER]
        v = qkv[:, 2 * INNER:3 * INNER]

        heads_out = []
        for hd in range(HEADS):
            lo, hi = hd * DIM_HEAD, (hd + 1) * DIM_HEAD
            qh, kh, vh = q[:, lo:hi], k[:, lo:hi], v[:, lo:hi]
            s = jax.lax.dot_general(qh, kh, (((1,), (1,)), ((), ())),
                                    preferred_element_type=jnp.float32) + bias
            s = s - jnp.max(s, axis=-1, keepdims=True)
            p = jnp.exp(s)
            p = p * pl.reciprocal(jnp.sum(p, axis=-1, keepdims=True), approx=True)
            heads_out.append(jnp.dot(p, vh, preferred_element_type=jnp.float32))

        attn = jnp.concatenate(heads_out, axis=-1)                      # (R, INNER)
        x = x + jnp.dot(attn, wo[l], preferred_element_type=jnp.float32) + bo[l]

        # ---------------- feed-forward (pre-LN, GELU) -------------------------
        h = _layernorm(x, ln2g[l], ln2b[l])
        hh = jnp.dot(h, w1[l], preferred_element_type=jnp.float32) + b1[l]
        hh = _gelu(hh)
        x = x + jnp.dot(hh, w2[l], preferred_element_type=jnp.float32) + b2[l]

    # ---- pool='cls': cls rows are rows [0, b_tile); slice BEFORE final LN ----
    c = x[0:b_tile, :]                                                  # (b_tile, DIM)
    c = _layernorm(c, lnfg[...], lnfb[...])

    # ---- mlp_head: LN -> Linear(dim,64) -> ReLU -> Linear(64,num_classes) ----
    hh = _layernorm(c, lnhg[...], lnhb[...])
    hh = jnp.dot(hh, wh1[...], preferred_element_type=jnp.float32) + bh1[...]
    hh = jnp.maximum(hh, 0.0)
    logits = jnp.dot(hh, wh2[...], preferred_element_type=jnp.float32) + bh2[...]
    out_ref[...] = logits                                               # (b_tile, 8)


# ------------------------------ glue / wrapper -------------------------------
def to_patches(img, p):
    """Rearrange 'b c (h p1) (w p2) -> b (h w) (p1 p2 c)'."""
    b, c, H, W = img.shape
    h, w = H // p, W // p
    x = img.reshape(b, c, h, p, w, p)
    x = jnp.transpose(x, (0, 2, 4, 3, 5, 1))         # b h w p1 p2 c
    return x.reshape(b, h * w, p * p * c)


def _full_spec(arr):
    nd = arr.ndim
    return pl.BlockSpec(arr.shape, lambda i, _nd=nd: (0,) * _nd)


def _choose_b_tile(B):
    if B >= MAX_B_TILE:
        return MAX_B_TILE
    return max(8, ((B + 7) // 8) * 8)     # multiple of 8 (sublane alignment)


@jax.jit
def wdmcnet_forward(img, params):
    patches = to_patches(img, PATCH).astype(jnp.float32)   # (B, N, PATCH_DIM)
    B = patches.shape[0]
    b_tile = _choose_b_tile(B)
    b_pad = ((B + b_tile - 1) // b_tile) * b_tile
    if b_pad != B:
        patches = jnp.pad(patches, ((0, b_pad - B), (0, 0), (0, 0)))
    # patch-major / batch-minor layout so the kernel can flatten (p, b) cleanly
    patches_t = jnp.transpose(patches, (1, 0, 2))           # (N, B_pad, PATCH_DIM)

    R = SEQ * b_tile
    # additive base: row s*b_tile + b gets pos[s]; cls folded into rows of s=0
    pos_full = jnp.repeat(params["pos"], b_tile, axis=0)    # (R, DIM)
    pos_full = pos_full.at[:b_tile].add(params["cls"])
    # block-diagonal attention bias: tokens of different images get -1e30
    img_id = jnp.arange(R, dtype=jnp.int32) % b_tile
    bias = jnp.where(img_id[:, None] == img_id[None, :], 0.0, -1e30)
    bias = bias.astype(jnp.float32)

    weights = [params[k] for k in PARAM_ORDER_KERNEL]
    kern = functools.partial(vit_kernel, b_tile)

    in_specs = [pl.BlockSpec((NUM_PATCHES, b_tile, PATCH_DIM), lambda i: (0, i, 0)),
                _full_spec(bias), _full_spec(pos_full)]
    in_specs += [_full_spec(w) for w in weights]

    out = pl.pallas_call(
        kern,
        out_shape=jax.ShapeDtypeStruct((b_pad, NUM_CLASSES), jnp.float32),
        grid_spec=pltpu.PrefetchScalarGridSpec(
            num_scalar_prefetch=0,
            grid=(b_pad // b_tile,),
            in_specs=in_specs,
            out_specs=pl.BlockSpec((b_tile, NUM_CLASSES), lambda i: (i, 0)),
        ),
        compiler_params=pltpu.CompilerParams(dimension_semantics=("parallel",)),
    )(patches_t, bias, pos_full, *weights)
    return out[:B]


# --------------------------- deterministic params ----------------------------
def init_params(key):
    ks = jax.random.split(key, 16)

    def nrm(k, shape, scale=0.05):
        return (scale * jax.random.normal(k, shape)).astype(jnp.float32)

    p = {}
    p["w_emb"] = nrm(ks[0], (PATCH_DIM, DIM))
    p["b_emb"] = nrm(ks[1], (1, DIM))
    p["cls"]   = nrm(ks[2], (1, DIM), 1.0)
    p["pos"]   = nrm(ks[3], (SEQ, DIM), 1.0)
    p["ln1g"]  = 1.0 + nrm(ks[4], (DEPTH, 1, DIM), 0.1)
    p["ln1b"]  = nrm(ks[5], (DEPTH, 1, DIM), 0.1)
    p["wqkv"]  = nrm(ks[6], (DEPTH, DIM, 3 * INNER))
    p["wo"]    = nrm(ks[7], (DEPTH, INNER, DIM))
    p["bo"]    = nrm(ks[8], (DEPTH, 1, DIM), 0.02)
    p["ln2g"]  = 1.0 + nrm(ks[9], (DEPTH, 1, DIM), 0.1)
    p["ln2b"]  = nrm(ks[10], (DEPTH, 1, DIM), 0.1)
    p["w1"]    = nrm(ks[11], (DEPTH, DIM, MLP_DIM))
    p["b1"]    = nrm(ks[12], (DEPTH, 1, MLP_DIM), 0.02)
    p["w2"]    = nrm(ks[13], (DEPTH, MLP_DIM, DIM))
    p["b2"]    = nrm(ks[14], (DEPTH, 1, DIM), 0.02)
    p["lnfg"]  = jnp.ones((1, DIM), jnp.float32)
    p["lnfb"]  = jnp.zeros((1, DIM), jnp.float32)
    p["lnhg"]  = jnp.ones((1, DIM), jnp.float32)
    p["lnhb"]  = jnp.zeros((1, DIM), jnp.float32)
    p["wh1"]   = nrm(ks[15], (DIM, HEAD_HIDDEN))
    p["bh1"]   = jnp.zeros((1, HEAD_HIDDEN), jnp.float32)
    p["wh2"]   = nrm(jax.random.fold_in(key, 99), (HEAD_HIDDEN, NUM_CLASSES))
    p["bh2"]   = jnp.zeros((1, NUM_CLASSES), jnp.float32)
    return p


# ------------------------------ pure-JAX reference ---------------------------
def reference_forward(img, p):
    x = to_patches(img, PATCH).astype(jnp.float32)
    emb = x @ p["w_emb"] + p["b_emb"]                          # (B, N, DIM)
    B = emb.shape[0]
    cls = jnp.broadcast_to(p["cls"][None], (B, 1, DIM))
    x = jnp.concatenate([cls, emb], axis=1) + p["pos"][None]   # (B, SEQ, DIM)

    for l in range(DEPTH):
        h = _layernorm(x, p["ln1g"][l], p["ln1b"][l])
        qkv = h @ p["wqkv"][l]
        q, k, v = jnp.split(qkv, 3, axis=-1)
        sh = lambda t: t.reshape(B, SEQ, HEADS, DIM_HEAD).transpose(0, 2, 1, 3)
        q, k, v = sh(q), sh(k), sh(v)
        s = jnp.einsum("bhqd,bhkd->bhqk", q, k) * (DIM_HEAD ** -0.5)
        a = jax.nn.softmax(s, axis=-1)
        o = jnp.einsum("bhqk,bhkd->bhqd", a, v).transpose(0, 2, 1, 3).reshape(B, SEQ, INNER)
        x = x + o @ p["wo"][l] + p["bo"][l]
        h = _layernorm(x, p["ln2g"][l], p["ln2b"][l])
        h = _gelu(h @ p["w1"][l] + p["b1"][l])
        x = x + h @ p["w2"][l] + p["b2"][l]

    x = _layernorm(x, p["lnfg"], p["lnfb"])
    c = x[:, 0]                                                # pool='cls'
    h = _layernorm(c, p["lnhg"], p["lnhb"])
    h = jnp.maximum(h @ p["wh1"] + p["bh1"], 0.0)
    return h @ p["wh2"] + p["bh2"]


# ----------------------------------- main ------------------------------------
if __name__ == "__main__":
    key = jax.random.PRNGKey(0)
    kimg, kparam = jax.random.split(key)
    img = jax.random.normal(kimg, (2, CHANNELS, IMAGE_SIZE, IMAGE_SIZE), jnp.float32)
    params = init_params(kparam)

    out = wdmcnet_forward(img, params)
    out = jax.block_until_ready(out)
    assert out.shape == (2, NUM_CLASSES)

    ref = reference_forward(img, params)
    if not jnp.allclose(out, ref, atol=2e-2, rtol=2e-2):
        raise AssertionError(f"mismatch: max abs err = {jnp.max(jnp.abs(out - ref))}")

    print("KERNEL_OK")
</pallas_src>

<mosaic_0001>
module attributes {stable_mosaic.version = 11 : i64} {
  func.func @vit_kernel(%arg0: i32, %arg1: memref<4x8x64xf32, #tpu.memory_space<vmem>>, %arg2: memref<40x40xf32, #tpu.memory_space<vmem>>, %arg3: memref<40x32xf32, #tpu.memory_space<vmem>>, %arg4: memref<64x32xf32, #tpu.memory_space<vmem>>, %arg5: memref<1x32xf32, #tpu.memory_space<vmem>>, %arg6: memref<2x1x32xf32, #tpu.memory_space<vmem>>, %arg7: memref<2x1x32xf32, #tpu.memory_space<vmem>>, %arg8: memref<2x32x96xf32, #tpu.memory_space<vmem>>, %arg9: memref<2x32x32xf32, #tpu.memory_space<vmem>>, %arg10: memref<2x1x32xf32, #tpu.memory_space<vmem>>, %arg11: memref<2x1x32xf32, #tpu.memory_space<vmem>>, %arg12: memref<2x1x32xf32, #tpu.memory_space<vmem>>, %arg13: memref<2x32x64xf32, #tpu.memory_space<vmem>>, %arg14: memref<2x1x64xf32, #tpu.memory_space<vmem>>, %arg15: memref<2x64x32xf32, #tpu.memory_space<vmem>>, %arg16: memref<2x1x32xf32, #tpu.memory_space<vmem>>, %arg17: memref<1x32xf32, #tpu.memory_space<vmem>>, %arg18: memref<1x32xf32, #tpu.memory_space<vmem>>, %arg19: memref<1x32xf32, #tpu.memory_space<vmem>>, %arg20: memref<1x32xf32, #tpu.memory_space<vmem>>, %arg21: memref<32x64xf32, #tpu.memory_space<vmem>>, %arg22: memref<1x64xf32, #tpu.memory_space<vmem>>, %arg23: memref<64x8xf32, #tpu.memory_space<vmem>>, %arg24: memref<1x8xf32, #tpu.memory_space<vmem>>, %arg25: memref<8x8xf32, #tpu.memory_space<vmem>>) attributes {dimension_semantics = [#tpu.dimension_semantics<parallel>], iteration_bounds = array<i64: 1>, scalar_prefetch = 0 : i64, scratch_operands = 0 : i64, tpu.core_type = #tpu.core_type<tc>, window_params = [{transform_indices = @transform_0, window_bounds = array<i64: 4, 8, 64>}, {pipeline_mode = #tpu.pipeline_mode<synchronous>, transform_indices = @transform_1, window_bounds = array<i64: 40, 40>}, {pipeline_mode = #tpu.pipeline_mode<synchronous>, transform_indices = @transform_2, window_bounds = array<i64: 40, 32>}, {pipeline_mode = #tpu.pipeline_mode<synchronous>, transform_indices = @transform_3, window_bounds = array<i64: 64, 32>}, {pipeline_mode = #tpu.pipeline_mode<synchronous>, transform_indices = @transform_4, window_bounds = array<i64: 1, 32>}, {pipeline_mode = #tpu.pipeline_mode<synchronous>, transform_indices = @transform_5, window_bounds = array<i64: 2, 1, 32>}, {pipeline_mode = #tpu.pipeline_mode<synchronous>, transform_indices = @transform_6, window_bounds = array<i64: 2, 1, 32>}, {pipeline_mode = #tpu.pipeline_mode<synchronous>, transform_indices = @transform_7, window_bounds = array<i64: 2, 32, 96>}, {pipeline_mode = #tpu.pipeline_mode<synchronous>, transform_indices = @transform_8, window_bounds = array<i64: 2, 32, 32>}, {pipeline_mode = #tpu.pipeline_mode<synchronous>, transform_indices = @transform_9, window_bounds = array<i64: 2, 1, 32>}, {pipeline_mode = #tpu.pipeline_mode<synchronous>, transform_indices = @transform_10, window_bounds = array<i64: 2, 1, 32>}, {pipeline_mode = #tpu.pipeline_mode<synchronous>, transform_indices = @transform_11, window_bounds = array<i64: 2, 1, 32>}, {pipeline_mode = #tpu.pipeline_mode<synchronous>, transform_indices = @transform_12, window_bounds = array<i64: 2, 32, 64>}, {pipeline_mode = #tpu.pipeline_mode<synchronous>, transform_indices = @transform_13, window_bounds = array<i64: 2, 1, 64>}, {pipeline_mode = #tpu.pipeline_mode<synchronous>, transform_indices = @transform_14, window_bounds = array<i64: 2, 64, 32>}, {pipeline_mode = #tpu.pipeline_mode<synchronous>, transform_indices = @transform_15, window_bounds = array<i64: 2, 1, 32>}, {pipeline_mode = #tpu.pipeline_mode<synchronous>, transform_indices = @transform_16, window_bounds = array<i64: 1, 32>}, {pipeline_mode = #tpu.pipeline_mode<synchronous>, transform_indices = @transform_17, window_bounds = array<i64: 1, 32>}, {pipeline_mode = #tpu.pipeline_mode<synchronous>, transform_indices = @transform_18, window_bounds = array<i64: 1, 32>}, {pipeline_mode = #tpu.pipeline_mode<synchronous>, transform_indices = @transform_19, window_bounds = array<i64: 1, 32>}, {pipeline_mode = #tpu.pipeline_mode<synchronous>, transform_indices = @transform_20, window_bounds = array<i64: 32, 64>}, {pipeline_mode = #tpu.pipeline_mode<synchronous>, transform_indices = @transform_21, window_bounds = array<i64: 1, 64>}, {pipeline_mode = #tpu.pipeline_mode<synchronous>, transform_indices = @transform_22, window_bounds = array<i64: 64, 8>}, {pipeline_mode = #tpu.pipeline_mode<synchronous>, transform_indices = @transform_23, window_bounds = array<i64: 1, 8>}, {transform_indices = @transform_24, window_bounds = array<i64: 8, 8>}]} {
    %c0 = arith.constant 0 : index
    %c0_0 = arith.constant 0 : index
    %c0_1 = arith.constant 0 : index
    %0 = vector.load %arg1[%c0, %c0_0, %c0_1] : memref<4x8x64xf32, #tpu.memory_space<vmem>>, vector<4x8x64xf32>
    %1 = vector.shape_cast %0 : vector<4x8x64xf32> to vector<32x64xf32>
    %c0_2 = arith.constant 0 : index
    %c0_3 = arith.constant 0 : index
    %2 = vector.load %arg4[%c0_2, %c0_3] : memref<64x32xf32, #tpu.memory_space<vmem>>, vector<64x32xf32>
    %cst = arith.constant dense<0.000000e+00> : vector<32x32xf32>
    %3 = tpu.matmul %1, %2, %cst {dimension_numbers = #tpu.dot_dimension_numbers<[1], [0], [0], [1], [0, 0, 1, 1], [], []>} : vector<32x64xf32>, vector<64x32xf32>, vector<32x32xf32> -> vector<32x32xf32>
    %c0_4 = arith.constant 0 : index
    %c0_5 = arith.constant 0 : index
    %4 = vector.load %arg5[%c0_4, %c0_5] : memref<1x32xf32, #tpu.memory_space<vmem>>, vector<1x32xf32>
    %5 = vector.broadcast %4 : vector<1x32xf32> to vector<32x32xf32>
    %6 = arith.addf %3, %5 : vector<32x32xf32>
    %c0_6 = arith.constant 0 : index
    %c0_7 = arith.constant 0 : index
    %7 = vector.load %arg3[%c0_6, %c0_7] : memref<40x32xf32, #tpu.memory_space<vmem>>, vector<8x32xf32>
    %c8 = arith.constant 8 : index
    %c0_8 = arith.constant 0 : index
    %8 = vector.load %arg3[%c8, %c0_8] : memref<40x32xf32, #tpu.memory_space<vmem>>, vector<32x32xf32>
    %9 = arith.addf %6, %8 : vector<32x32xf32>
    %10 = tpu.concatenate %7, %9 in 0 : vector<8x32xf32>, vector<32x32xf32> -> vector<40x32xf32>
    %c0_9 = arith.constant 0 : index
    %c0_10 = arith.constant 0 : index
    %11 = vector.load %arg2[%c0_9, %c0_10] : memref<40x40xf32, #tpu.memory_space<vmem>>, vector<40x40xf32>
    %c0_11 = arith.constant 0 : index
    %c0_12 = arith.constant 0 : index
    %c0_13 = arith.constant 0 : index
    %12 = vector.load %arg6[%c0_11, %c0_12, %c0_13] : memref<2x1x32xf32, #tpu.memory_space<vmem>>, vector<1x1x32xf32>
    %13 = vector.shape_cast %12 : vector<1x1x32xf32> to vector<1x32xf32>
    %c0_14 = arith.constant 0 : index
    %c0_15 = arith.constant 0 : index
    %c0_16 = arith.constant 0 : index
    %14 = vector.load %arg7[%c0_14, %c0_15, %c0_16] : memref<2x1x32xf32, #tpu.memory_space<vmem>>, vector<1x1x32xf32>
    %15 = vector.shape_cast %14 : vector<1x1x32xf32> to vector<1x32xf32>
    %cst_17 = arith.constant dense<0.000000e+00> : vector<40xf32>
    %16 = vector.multi_reduction <add>, %10, %cst_17 [1] : vector<40x32xf32> to vector<40xf32>
    %17 = vector.shape_cast %16 : vector<40xf32> to vector<40x1xf32>
    %cst_18 = arith.constant 3.200000e+01 : f32
    %18 = vector.broadcast %cst_18 : f32 to vector<40x1xf32>
    %19 = arith.divf %17, %18 : vector<40x1xf32>
    %20 = vector.broadcast %19 : vector<40x1xf32> to vector<40x32xf32>
    %21 = arith.subf %10, %20 : vector<40x32xf32>
    %22 = arith.mulf %21, %21 : vector<40x32xf32>
    %cst_19 = arith.constant dense<0.000000e+00> : vector<40xf32>
    %23 = vector.multi_reduction <add>, %22, %cst_19 [1] : vector<40x32xf32> to vector<40xf32>
    %24 = vector.shape_cast %23 : vector<40xf32> to vector<40x1xf32>
    %cst_20 = arith.constant 3.200000e+01 : f32
    %25 = vector.broadcast %cst_20 : f32 to vector<40x1xf32>
    %26 = arith.divf %24, %25 : vector<40x1xf32>
    %27 = vector.broadcast %19 : vector<40x1xf32> to vector<40x32xf32>
    %28 = arith.subf %10, %27 : vector<40x32xf32>
    %cst_21 = arith.constant 9.99999974E-6 : f32
    %29 = vector.broadcast %cst_21 : f32 to vector<40x1xf32>
    %30 = arith.addf %26, %29 : vector<40x1xf32>
    %31 = math.rsqrt %30 : vector<40x1xf32>
    %32 = vector.broadcast %31 : vector<40x1xf32> to vector<40x32xf32>
    %33 = arith.mulf %28, %32 : vector<40x32xf32>
    %34 = vector.broadcast %13 : vector<1x32xf32> to vector<40x32xf32>
    %35 = arith.mulf %33, %34 : vector<40x32xf32>
    %36 = vector.broadcast %15 : vector<1x32xf32> to vector<40x32xf32>
    %37 = arith.addf %35, %36 : vector<40x32xf32>
    %c0_22 = arith.constant 0 : index
    %c0_23 = arith.constant 0 : index
    %c0_24 = arith.constant 0 : index
    %38 = vector.load %arg8[%c0_22, %c0_23, %c0_24] : memref<2x32x96xf32, #tpu.memory_space<vmem>>, vector<1x32x96xf32>
    %39 = vector.shape_cast %38 : vector<1x32x96xf32> to vector<32x96xf32>
    %cst_25 = arith.constant dense<0.000000e+00> : vector<40x96xf32>
    %40 = tpu.matmul %37, %39, %cst_25 {dimension_numbers = #tpu.dot_dimension_numbers<[1], [0], [0], [1], [0, 0, 1, 1], [], []>} : vector<40x32xf32>, vector<32x96xf32>, vector<40x96xf32> -> vector<40x96xf32>
    %41 = vector.extract_strided_slice %40 {offsets = [0, 0], sizes = [40, 32], strides = [1, 1]} : vector<40x96xf32> to vector<40x32xf32>
    %cst_26 = arith.constant 2.500000e-01 : f32
    %42 = vector.broadcast %cst_26 : f32 to vector<40x32xf32>
    %43 = arith.mulf %41, %42 : vector<40x32xf32>
    %44 = vector.extract_strided_slice %40 {offsets = [0, 32], sizes = [40, 32], strides = [1, 1]} : vector<40x96xf32> to vector<40x32xf32>
    %45 = vector.extract_strided_slice %40 {offsets = [0, 64], sizes = [40, 32], strides = [1, 1]} : vector<40x96xf32> to vector<40x32xf32>
    %46 = vector.extract_strided_slice %43 {offsets = [0, 0], sizes = [40, 16], strides = [1, 1]} : vector<40x32xf32> to vector<40x16xf32>
    %47 = vector.extract_strided_slice %44 {offsets = [0, 0], sizes = [40, 16], strides = [1, 1]} : vector<40x32xf32> to vector<40x16xf32>
    %48 = vector.extract_strided_slice %45 {offsets = [0, 0], sizes = [40, 16], strides = [1, 1]} : vector<40x32xf32> to vector<40x16xf32>
    %cst_27 = arith.constant dense<0.000000e+00> : vector<40x40xf32>
    %49 = tpu.matmul %46, %47, %cst_27 {dimension_numbers = #tpu.dot_dimension_numbers<[1], [1], [0], [0], [0, 0, 1, 0], [], []>} : vector<40x16xf32>, vector<40x16xf32>, vector<40x40xf32> -> vector<40x40xf32>
    %50 = arith.addf %49, %11 : vector<40x40xf32>
    %cst_28 = arith.constant dense<0xFF800000> : vector<40xf32>
    %51 = vector.multi_reduction <maximumf>, %50, %cst_28 [1] : vector<40x40xf32> to vector<40xf32>
    %52 = vector.shape_cast %51 : vector<40xf32> to vector<40x1xf32>
    %53 = vector.broadcast %52 : vector<40x1xf32> to vector<40x40xf32>
    %54 = arith.subf %50, %53 : vector<40x40xf32>
    %55 = math.exp %54 : vector<40x40xf32>
    %cst_29 = arith.constant dense<0.000000e+00> : vector<40xf32>
    %56 = vector.multi_reduction <add>, %55, %cst_29 [1] : vector<40x40xf32> to vector<40xf32>
    %57 = vector.shape_cast %56 : vector<40xf32> to vector<40x1xf32>
    %58 = tpu.reciprocal %57 {approx = true} : vector<40x1xf32> -> vector<40x1xf32>
    %59 = vector.broadcast %58 : vector<40x1xf32> to vector<40x40xf32>
    %60 = arith.mulf %55, %59 : vector<40x40xf32>
    %cst_30 = arith.constant dense<0.000000e+00> : vector<40x16xf32>
    %61 = tpu.matmul %60, %48, %cst_30 {dimension_numbers = #tpu.dot_dimension_numbers<[1], [0], [0], [1], [0, 0, 1, 1], [], []>} : vector<40x40xf32>, vector<40x16xf32>, vector<40x16xf32> -> vector<40x16xf32>
    %62 = vector.extract_strided_slice %43 {offsets = [0, 16], sizes = [40, 16], strides = [1, 1]} : vector<40x32xf32> to vector<40x16xf32>
    %63 = vector.extract_strided_slice %44 {offsets = [0, 16], sizes = [40, 16], strides = [1, 1]} : vector<40x32xf32> to vector<40x16xf32>
    %64 = vector.extract_strided_slice %45 {offsets = [0, 16], sizes = [40, 16], strides = [1, 1]} : vector<40x32xf32> to vector<40x16xf32>
    %cst_31 = arith.constant dense<0.000000e+00> : vector<40x40xf32>
    %65 = tpu.matmul %62, %63, %cst_31 {dimension_numbers = #tpu.dot_dimension_numbers<[1], [1], [0], [0], [0, 0, 1, 0], [], []>} : vector<40x16xf32>, vector<40x16xf32>, vector<40x40xf32> -> vector<40x40xf32>
    %66 = arith.addf %65, %11 : vector<40x40xf32>
    %cst_32 = arith.constant dense<0xFF800000> : vector<40xf32>
    %67 = vector.multi_reduction <maximumf>, %66, %cst_32 [1] : vector<40x40xf32> to vector<40xf32>
    %68 = vector.shape_cast %67 : vector<40xf32> to vector<40x1xf32>
    %69 = vector.broadcast %68 : vector<40x1xf32> to vector<40x40xf32>
    %70 = arith.subf %66, %69 : vector<40x40xf32>
    %71 = math.exp %70 : vector<40x40xf32>
    %cst_33 = arith.constant dense<0.000000e+00> : vector<40xf32>
    %72 = vector.multi_reduction <add>, %71, %cst_33 [1] : vector<40x40xf32> to vector<40xf32>
    %73 = vector.shape_cast %72 : vector<40xf32> to vector<40x1xf32>
    %74 = tpu.reciprocal %73 {approx = true} : vector<40x1xf32> -> vector<40x1xf32>
    %75 = vector.broadcast %74 : vector<40x1xf32> to vector<40x40xf32>
    %76 = arith.mulf %71, %75 : vector<40x40xf32>
    %cst_34 = arith.constant dense<0.000000e+00> : vector<40x16xf32>
    %77 = tpu.matmul %76, %64, %cst_34 {dimension_numbers = #tpu.dot_dimension_numbers<[1], [0], [0], [1], [0, 0, 1, 1], [], []>} : vector<40x40xf32>, vector<40x16xf32>, vector<40x16xf32> -> vector<40x16xf32>
    %78 = tpu.concatenate %61, %77 in 1 : vector<40x16xf32>, vector<40x16xf32> -> vector<40x32xf32>
    %c0_35 = arith.constant 0 : index
    %c0_36 = arith.constant 0 : index
    %c0_37 = arith.constant 0 : index
    %79 = vector.load %arg9[%c0_35, %c0_36, %c0_37] : memref<2x32x32xf32, #tpu.memory_space<vmem>>, vector<1x32x32xf32>
    %80 = vector.shape_cast %79 : vector<1x32x32xf32> to vector<32x32xf32>
    %cst_38 = arith.constant dense<0.000000e+00> : vector<40x32xf32>
    %81 = tpu.matmul %78, %80, %cst_38 {dimension_numbers = #tpu.dot_dimension_numbers<[1], [0], [0], [1], [0, 0, 1, 1], [], []>} : vector<40x32xf32>, vector<32x32xf32>, vector<40x32xf32> -> vector<40x32xf32>
    %82 = arith.addf %10, %81 : vector<40x32xf32>
    %c0_39 = arith.constant 0 : index
    %c0_40 = arith.constant 0 : index
    %c0_41 = arith.constant 0 : index
    %83 = vector.load %arg10[%c0_39, %c0_40, %c0_41] : memref<2x1x32xf32, #tpu.memory_space<vmem>>, vector<1x1x32xf32>
    %84 = vector.shape_cast %83 : vector<1x1x32xf32> to vector<1x32xf32>
    %85 = vector.broadcast %84 : vector<1x32xf32> to vector<40x32xf32>
    %86 = arith.addf %82, %85 : vector<40x32xf32>
    %c0_42 = arith.constant 0 : index
    %c0_43 = arith.constant 0 : index
    %c0_44 = arith.constant 0 : index
    %87 = vector.load %arg11[%c0_42, %c0_43, %c0_44] : memref<2x1x32xf32, #tpu.memory_space<vmem>>, vector<1x1x32xf32>
    %88 = vector.shape_cast %87 : vector<1x1x32xf32> to vector<1x32xf32>
    %c0_45 = arith.constant 0 : index
    %c0_46 = arith.constant 0 : index
    %c0_47 = arith.constant 0 : index
    %89 = vector.load %arg12[%c0_45, %c0_46, %c0_47] : memref<2x1x32xf32, #tpu.memory_space<vmem>>, vector<1x1x32xf32>
    %90 = vector.shape_cast %89 : vector<1x1x32xf32> to vector<1x32xf32>
    %cst_48 = arith.constant dense<0.000000e+00> : vector<40xf32>
    %91 = vector.multi_reduction <add>, %86, %cst_48 [1] : vector<40x32xf32> to vector<40xf32>
    %92 = vector.shape_cast %91 : vector<40xf32> to vector<40x1xf32>
    %cst_49 = arith.constant 3.200000e+01 : f32
    %93 = vector.broadcast %cst_49 : f32 to vector<40x1xf32>
    %94 = arith.divf %92, %93 : vector<40x1xf32>
    %95 = vector.broadcast %94 : vector<40x1xf32> to vector<40x32xf32>
    %96 = arith.subf %86, %95 : vector<40x32xf32>
    %97 = arith.mulf %96, %96 : vector<40x32xf32>
    %cst_50 = arith.constant dense<0.000000e+00> : vector<40xf32>
    %98 = vector.multi_reduction <add>, %97, %cst_50 [1] : vector<40x32xf32> to vector<40xf32>
    %99 = vector.shape_cast %98 : vector<40xf32> to vector<40x1xf32>
    %cst_51 = arith.constant 3.200000e+01 : f32
    %100 = vector.broadcast %cst_51 : f32 to vector<40x1xf32>
    %101 = arith.divf %99, %100 : vector<40x1xf32>
    %102 = vector.broadcast %94 : vector<40x1xf32> to vector<40x32xf32>
    %103 = arith.subf %86, %102 : vector<40x32xf32>
    %cst_52 = arith.constant 9.99999974E-6 : f32
    %104 = vector.broadcast %cst_52 : f32 to vector<40x1xf32>
    %105 = arith.addf %101, %104 : vector<40x1xf32>
    %106 = math.rsqrt %105 : vector<40x1xf32>
    %107 = vector.broadcast %106 : vector<40x1xf32> to vector<40x32xf32>
    %108 = arith.mulf %103, %107 : vector<40x32xf32>
    %109 = vector.broadcast %88 : vector<1x32xf32> to vector<40x32xf32>
    %110 = arith.mulf %108, %109 : vector<40x32xf32>
    %111 = vector.broadcast %90 : vector<1x32xf32> to vector<40x32xf32>
    %112 = arith.addf %110, %111 : vector<40x32xf32>
    %c0_53 = arith.constant 0 : index
    %c0_54 = arith.constant 0 : index
    %c0_55 = arith.constant 0 : index
    %113 = vector.load %arg13[%c0_53, %c0_54, %c0_55] : memref<2x32x64xf32, #tpu.memory_space<vmem>>, vector<1x32x64xf32>
    %114 = vector.shape_cast %113 : vector<1x32x64xf32> to vector<32x64xf32>
    %cst_56 = arith.constant dense<0.000000e+00> : vector<40x64xf32>
    %115 = tpu.matmul %112, %114, %cst_56 {dimension_numbers = #tpu.dot_dimension_numbers<[1], [0], [0], [1], [0, 0, 1, 1], [], []>} : vector<40x32xf32>, vector<32x64xf32>, vector<40x64xf32> -> vector<40x64xf32>
    %c0_57 = arith.constant 0 : index
    %c0_58 = arith.constant 0 : index
    %c0_59 = arith.constant 0 : index
    %116 = vector.load %arg14[%c0_57, %c0_58, %c0_59] : memref<2x1x64xf32, #tpu.memory_space<vmem>>, vector<1x1x64xf32>
    %117 = vector.shape_cast %116 : vector<1x1x64xf32> to vector<1x64xf32>
    %118 = vector.broadcast %117 : vector<1x64xf32> to vector<40x64xf32>
    %119 = arith.addf %115, %118 : vector<40x64xf32>
    %120 = arith.mulf %119, %119 : vector<40x64xf32>
    %121 = arith.mulf %119, %120 : vector<40x64xf32>
    %cst_60 = arith.constant 4.471500e-02 : f32
    %122 = vector.broadcast %cst_60 : f32 to vector<40x64xf32>
    %123 = arith.mulf %122, %121 : vector<40x64xf32>
    %124 = arith.addf %119, %123 : vector<40x64xf32>
    %cst_61 = arith.constant 0.797884583 : f32
    %125 = vector.broadcast %cst_61 : f32 to vector<40x64xf32>
    %126 = arith.mulf %125, %124 : vector<40x64xf32>
    %127 = math.tanh %126 : vector<40x64xf32>
    %cst_62 = arith.constant 1.000000e+00 : f32
    %128 = vector.broadcast %cst_62 : f32 to vector<40x64xf32>
    %129 = arith.addf %128, %127 : vector<40x64xf32>
    %cst_63 = arith.constant 5.000000e-01 : f32
    %130 = vector.broadcast %cst_63 : f32 to vector<40x64xf32>
    %131 = arith.mulf %130, %129 : vector<40x64xf32>
    %132 = arith.mulf %119, %131 : vector<40x64xf32>
    %c0_64 = arith.constant 0 : index
    %c0_65 = arith.constant 0 : index
    %c0_66 = arith.constant 0 : index
    %133 = vector.load %arg15[%c0_64, %c0_65, %c0_66] : memref<2x64x32xf32, #tpu.memory_space<vmem>>, vector<1x64x32xf32>
    %134 = vector.shape_cast %133 : vector<1x64x32xf32> to vector<64x32xf32>
    %cst_67 = arith.constant dense<0.000000e+00> : vector<40x32xf32>
    %135 = tpu.matmul %132, %134, %cst_67 {dimension_numbers = #tpu.dot_dimension_numbers<[1], [0], [0], [1], [0, 0, 1, 1], [], []>} : vector<40x64xf32>, vector<64x32xf32>, vector<40x32xf32> -> vector<40x32xf32>
    %136 = arith.addf %86, %135 : vector<40x32xf32>
    %c0_68 = arith.constant 0 : index
    %c0_69 = arith.constant 0 : index
    %c0_70 = arith.constant 0 : index
    %137 = vector.load %arg16[%c0_68, %c0_69, %c0_70] : memref<2x1x32xf32, #tpu.memory_space<vmem>>, vector<1x1x32xf32>
    %138 = vector.shape_cast %137 : vector<1x1x32xf32> to vector<1x32xf32>
    %139 = vector.broadcast %138 : vector<1x32xf32> to vector<40x32xf32>
    %140 = arith.addf %136, %139 : vector<40x32xf32>
    %c1 = arith.constant 1 : index
    %c0_71 = arith.constant 0 : index
    %c0_72 = arith.constant 0 : index
    %141 = vector.load %arg6[%c1, %c0_71, %c0_72] : memref<2x1x32xf32, #tpu.memory_space<vmem>>, vector<1x1x32xf32>
    %142 = vector.shape_cast %141 : vector<1x1x32xf32> to vector<1x32xf32>
    %c1_73 = arith.constant 1 : index
    %c0_74 = arith.constant 0 : index
    %c0_75 = arith.constant 0 : index
    %143 = vector.load %arg7[%c1_73, %c0_74, %c0_75] : memref<2x1x32xf32, #tpu.memory_space<vmem>>, vector<1x1x32xf32>
    %144 = vector.shape_cast %143 : vector<1x1x32xf32> to vector<1x32xf32>
    %cst_76 = arith.constant dense<0.000000e+00> : vector<40xf32>
    %145 = vector.multi_reduction <add>, %140, %cst_76 [1] : vector<40x32xf32> to vector<40xf32>
    %146 = vector.shape_cast %145 : vector<40xf32> to vector<40x1xf32>
    %cst_77 = arith.constant 3.200000e+01 : f32
    %147 = vector.broadcast %cst_77 : f32 to vector<40x1xf32>
    %148 = arith.divf %146, %147 : vector<40x1xf32>
    %149 = vector.broadcast %148 : vector<40x1xf32> to vector<40x32xf32>
    %150 = arith.subf %140, %149 : vector<40x32xf32>
    %151 = arith.mulf %150, %150 : vector<40x32xf32>
    %cst_78 = arith.constant dense<0.000000e+00> : vector<40xf32>
    %152 = vector.multi_reduction <add>, %151, %cst_78 [1] : vector<40x32xf32> to vector<40xf32>
    %153 = vector.shape_cast %152 : vector<40xf32> to vector<40x1xf32>
    %cst_79 = arith.constant 3.200000e+01 : f32
    %154 = vector.broadcast %cst_79 : f32 to vector<40x1xf32>
    %155 = arith.divf %153, %154 : vector<40x1xf32>
    %156 = vector.broadcast %148 : vector<40x1xf32> to vector<40x32xf32>
    %157 = arith.subf %140, %156 : vector<40x32xf32>
    %cst_80 = arith.constant 9.99999974E-6 : f32
    %158 = vector.broadcast %cst_80 : f32 to vector<40x1xf32>
    %159 = arith.addf %155, %158 : vector<40x1xf32>
    %160 = math.rsqrt %159 : vector<40x1xf32>
    %161 = vector.broadcast %160 : vector<40x1xf32> to vector<40x32xf32>
    %162 = arith.mulf %157, %161 : vector<40x32xf32>
    %163 = vector.broadcast %142 : vector<1x32xf32> to vector<40x32xf32>
    %164 = arith.mulf %162, %163 : vector<40x32xf32>
    %165 = vector.broadcast %144 : vector<1x32xf32> to vector<40x32xf32>
    %166 = arith.addf %164, %165 : vector<40x32xf32>
    %c1_81 = arith.constant 1 : index
    %c0_82 = arith.constant 0 : index
    %c0_83 = arith.constant 0 : index
    %167 = vector.load %arg8[%c1_81, %c0_82, %c0_83] : memref<2x32x96xf32, #tpu.memory_space<vmem>>, vector<1x32x96xf32>
    %168 = vector.shape_cast %167 : vector<1x32x96xf32> to vector<32x96xf32>
    %cst_84 = arith.constant dense<0.000000e+00> : vector<40x96xf32>
    %169 = tpu.matmul %166, %168, %cst_84 {dimension_numbers = #tpu.dot_dimension_numbers<[1], [0], [0], [1], [0, 0, 1, 1], [], []>} : vector<40x32xf32>, vector<32x96xf32>, vector<40x96xf32> -> vector<40x96xf32>
    %170 = vector.extract_strided_slice %169 {offsets = [0, 0], sizes = [40, 32], strides = [1, 1]} : vector<40x96xf32> to vector<40x32xf32>
    %cst_85 = arith.constant 2.500000e-01 : f32
    %171 = vector.broadcast %cst_85 : f32 to vector<40x32xf32>
    %172 = arith.mulf %170, %171 : vector<40x32xf32>
    %173 = vector.extract_strided_slice %169 {offsets = [0, 32], sizes = [40, 32], strides = [1, 1]} : vector<40x96xf32> to vector<40x32xf32>
    %174 = vector.extract_strided_slice %169 {offsets = [0, 64], sizes = [40, 32], strides = [1, 1]} : vector<40x96xf32> to vector<40x32xf32>
    %175 = vector.extract_strided_slice %172 {offsets = [0, 0], sizes = [40, 16], strides = [1, 1]} : vector<40x32xf32> to vector<40x16xf32>
    %176 = vector.extract_strided_slice %173 {offsets = [0, 0], sizes = [40, 16], strides = [1, 1]} : vector<40x32xf32> to vector<40x16xf32>
    %177 = vector.extract_strided_slice %174 {offsets = [0, 0], sizes = [40, 16], strides = [1, 1]} : vector<40x32xf32> to vector<40x16xf32>
    %cst_86 = arith.constant dense<0.000000e+00> : vector<40x40xf32>
    %178 = tpu.matmul %175, %176, %cst_86 {dimension_numbers = #tpu.dot_dimension_numbers<[1], [1], [0], [0], [0, 0, 1, 0], [], []>} : vector<40x16xf32>, vector<40x16xf32>, vector<40x40xf32> -> vector<40x40xf32>
    %179 = arith.addf %178, %11 : vector<40x40xf32>
    %cst_87 = arith.constant dense<0xFF800000> : vector<40xf32>
    %180 = vector.multi_reduction <maximumf>, %179, %cst_87 [1] : vector<40x40xf32> to vector<40xf32>
    %181 = vector.shape_cast %180 : vector<40xf32> to vector<40x1xf32>
    %182 = vector.broadcast %181 : vector<40x1xf32> to vector<40x40xf32>
    %183 = arith.subf %179, %182 : vector<40x40xf32>
    %184 = math.exp %183 : vector<40x40xf32>
    %cst_88 = arith.constant dense<0.000000e+00> : vector<40xf32>
    %185 = vector.multi_reduction <add>, %184, %cst_88 [1] : vector<40x40xf32> to vector<40xf32>
    %186 = vector.shape_cast %185 : vector<40xf32> to vector<40x1xf32>
    %187 = tpu.reciprocal %186 {approx = true} : vector<40x1xf32> -> vector<40x1xf32>
    %188 = vector.broadcast %187 : vector<40x1xf32> to vector<40x40xf32>
    %189 = arith.mulf %184, %188 : vector<40x40xf32>
    %cst_89 = arith.constant dense<0.000000e+00> : vector<40x16xf32>
    %190 = tpu.matmul %189, %177, %cst_89 {dimension_numbers = #tpu.dot_dimension_numbers<[1], [0], [0], [1], [0, 0, 1, 1], [], []>} : vector<40x40xf32>, vector<40x16xf32>, vector<40x16xf32> -> vector<40x16xf32>
    %191 = vector.extract_strided_slice %172 {offsets = [0, 16], sizes = [40, 16], strides = [1, 1]} : vector<40x32xf32> to vector<40x16xf32>
    %192 = vector.extract_strided_slice %173 {offsets = [0, 16], sizes = [40, 16], strides = [1, 1]} : vector<40x32xf32> to vector<40x16xf32>
    %193 = vector.extract_strided_slice %174 {offsets = [0, 16], sizes = [40, 16], strides = [1, 1]} : vector<40x32xf32> to vector<40x16xf32>
    %cst_90 = arith.constant dense<0.000000e+00> : vector<40x40xf32>
    %194 = tpu.matmul %191, %192, %cst_90 {dimension_numbers = #tpu.dot_dimension_numbers<[1], [1], [0], [0], [0, 0, 1, 0], [], []>} : vector<40x16xf32>, vector<40x16xf32>, vector<40x40xf32> -> vector<40x40xf32>
    %195 = arith.addf %194, %11 : vector<40x40xf32>
    %cst_91 = arith.constant dense<0xFF800000> : vector<40xf32>
    %196 = vector.multi_reduction <maximumf>, %195, %cst_91 [1] : vector<40x40xf32> to vector<40xf32>
    %197 = vector.shape_cast %196 : vector<40xf32> to vector<40x1xf32>
    %198 = vector.broadcast %197 : vector<40x1xf32> to vector<40x40xf32>
    %199 = arith.subf %195, %198 : vector<40x40xf32>
    %200 = math.exp %199 : vector<40x40xf32>
    %cst_92 = arith.constant dense<0.000000e+00> : vector<40xf32>
    %201 = vector.multi_reduction <add>, %200, %cst_92 [1] : vector<40x40xf32> to vector<40xf32>
    %202 = vector.shape_cast %201 : vector<40xf32> to vector<40x1xf32>
    %203 = tpu.reciprocal %202 {approx = true} : vector<40x1xf32> -> vector<40x1xf32>
    %204 = vector.broadcast %203 : vector<40x1xf32> to vector<40x40xf32>
    %205 = arith.mulf %200, %204 : vector<40x40xf32>
    %cst_93 = arith.constant dense<0.000000e+00> : vector<40x16xf32>
    %206 = tpu.matmul %205, %193, %cst_93 {dimension_numbers = #tpu.dot_dimension_numbers<[1], [0], [0], [1], [0, 0, 1, 1], [], []>} : vector<40x40xf32>, vector<40x16xf32>, vector<40x16xf32> -> vector<40x16xf32>
    %207 = tpu.concatenate %190, %206 in 1 : vector<40x16xf32>, vector<40x16xf32> -> vector<40x32xf32>
    %c1_94 = arith.constant 1 : index
    %c0_95 = arith.constant 0 : index
    %c0_96 = arith.constant 0 : index
    %208 = vector.load %arg9[%c1_94, %c0_95, %c0_96] : memref<2x32x32xf32, #tpu.memory_space<vmem>>, vector<1x32x32xf32>
    %209 = vector.shape_cast %208 : vector<1x32x32xf32> to vector<32x32xf32>
    %cst_97 = arith.constant dense<0.000000e+00> : vector<40x32xf32>
    %210 = tpu.matmul %207, %209, %cst_97 {dimension_numbers = #tpu.dot_dimension_numbers<[1], [0], [0], [1], [0, 0, 1, 1], [], []>} : vector<40x32xf32>, vector<32x32xf32>, vector<40x32xf32> -> vector<40x32xf32>
    %211 = arith.addf %140, %210 : vector<40x32xf32>
    %c1_98 = arith.constant 1 : index
    %c0_99 = arith.constant 0 : index
    %c0_100 = arith.constant 0 : index
    %212 = vector.load %arg10[%c1_98, %c0_99, %c0_100] : memref<2x1x32xf32, #tpu.memory_space<vmem>>, vector<1x1x32xf32>
    %213 = vector.shape_cast %212 : vector<1x1x32xf32> to vector<1x32xf32>
    %214 = vector.broadcast %213 : vector<1x32xf32> to vector<40x32xf32>
    %215 = arith.addf %211, %214 : vector<40x32xf32>
    %c1_101 = arith.constant 1 : index
    %c0_102 = arith.constant 0 : index
    %c0_103 = arith.constant 0 : index
    %216 = vector.load %arg11[%c1_101, %c0_102, %c0_103] : memref<2x1x32xf32, #tpu.memory_space<vmem>>, vector<1x1x32xf32>
    %217 = vector.shape_cast %216 : vector<1x1x32xf32> to vector<1x32xf32>
    %c1_104 = arith.constant 1 : index
    %c0_105 = arith.constant 0 : index
    %c0_106 = arith.constant 0 : index
    %218 = vector.load %arg12[%c1_104, %c0_105, %c0_106] : memref<2x1x32xf32, #tpu.memory_space<vmem>>, vector<1x1x32xf32>
    %219 = vector.shape_cast %218 : vector<1x1x32xf32> to vector<1x32xf32>
    %cst_107 = arith.constant dense<0.000000e+00> : vector<40xf32>
    %220 = vector.multi_reduction <add>, %215, %cst_107 [1] : vector<40x32xf32> to vector<40xf32>
    %221 = vector.shape_cast %220 : vector<40xf32> to vector<40x1xf32>
    %cst_108 = arith.constant 3.200000e+01 : f32
    %222 = vector.broadcast %cst_108 : f32 to vector<40x1xf32>
    %223 = arith.divf %221, %222 : vector<40x1xf32>
    %224 = vector.broadcast %223 : vector<40x1xf32> to vector<40x32xf32>
    %225 = arith.subf %215, %224 : vector<40x32xf32>
    %226 = arith.mulf %225, %225 : vector<40x32xf32>
    %cst_109 = arith.constant dense<0.000000e+00> : vector<40xf32>
    %227 = vector.multi_reduction <add>, %226, %cst_109 [1] : vector<40x32xf32> to vector<40xf32>
    %228 = vector.shape_cast %227 : vector<40xf32> to vector<40x1xf32>
    %cst_110 = arith.constant 3.200000e+01 : f32
    %229 = vector.broadcast %cst_110 : f32 to vector<40x1xf32>
    %230 = arith.divf %228, %229 : vector<40x1xf32>
    %231 = vector.broadcast %223 : vector<40x1xf32> to vector<40x32xf32>
    %232 = arith.subf %215, %231 : vector<40x32xf32>
    %cst_111 = arith.constant 9.99999974E-6 : f32
    %233 = vector.broadcast %cst_111 : f32 to vector<40x1xf32>
    %234 = arith.addf %230, %233 : vector<40x1xf32>
    %235 = math.rsqrt %234 : vector<40x1xf32>
    %236 = vector.broadcast %235 : vector<40x1xf32> to vector<40x32xf32>
    %237 = arith.mulf %232, %236 : vector<40x32xf32>
    %238 = vector.broadcast %217 : vector<1x32xf32> to vector<40x32xf32>
    %239 = arith.mulf %237, %238 : vector<40x32xf32>
    %240 = vector.broadcast %219 : vector<1x32xf32> to vector<40x32xf32>
    %241 = arith.addf %239, %240 : vector<40x32xf32>
    %c1_112 = arith.constant 1 : index
    %c0_113 = arith.constant 0 : index
    %c0_114 = arith.constant 0 : index
    %242 = vector.load %arg13[%c1_112, %c0_113, %c0_114] : memref<2x32x64xf32, #tpu.memory_space<vmem>>, vector<1x32x64xf32>
    %243 = vector.shape_cast %242 : vector<1x32x64xf32> to vector<32x64xf32>
    %cst_115 = arith.constant dense<0.000000e+00> : vector<40x64xf32>
    %244 = tpu.matmul %241, %243, %cst_115 {dimension_numbers = #tpu.dot_dimension_numbers<[1], [0], [0], [1], [0, 0, 1, 1], [], []>} : vector<40x32xf32>, vector<32x64xf32>, vector<40x64xf32> -> vector<40x64xf32>
    %c1_116 = arith.constant 1 : index
    %c0_117 = arith.constant 0 : index
    %c0_118 = arith.constant 0 : index
    %245 = vector.load %arg14[%c1_116, %c0_117, %c0_118] : memref<2x1x64xf32, #tpu.memory_space<vmem>>, vector<1x1x64xf32>
    %246 = vector.shape_cast %245 : vector<1x1x64xf32> to vector<1x64xf32>
    %247 = vector.broadcast %246 : vector<1x64xf32> to vector<40x64xf32>
    %248 = arith.addf %244, %247 : vector<40x64xf32>
    %249 = arith.mulf %248, %248 : vector<40x64xf32>
    %250 = arith.mulf %248, %249 : vector<40x64xf32>
    %cst_119 = arith.constant 4.471500e-02 : f32
    %251 = vector.broadcast %cst_119 : f32 to vector<40x64xf32>
    %252 = arith.mulf %251, %250 : vector<40x64xf32>
    %253 = arith.addf %248, %252 : vector<40x64xf32>
    %cst_120 = arith.constant 0.797884583 : f32
    %254 = vector.broadcast %cst_120 : f32 to vector<40x64xf32>
    %255 = arith.mulf %254, %253 : vector<40x64xf32>
    %256 = math.tanh %255 : vector<40x64xf32>
    %cst_121 = arith.constant 1.000000e+00 : f32
    %257 = vector.broadcast %cst_121 : f32 to vector<40x64xf32>
    %258 = arith.addf %257, %256 : vector<40x64xf32>
    %cst_122 = arith.constant 5.000000e-01 : f32
    %259 = vector.broadcast %cst_122 : f32 to vector<40x64xf32>
    %260 = arith.mulf %259, %258 : vector<40x64xf32>
    %261 = arith.mulf %248, %260 : vector<40x64xf32>
    %c1_123 = arith.constant 1 : index
    %c0_124 = arith.constant 0 : index
    %c0_125 = arith.constant 0 : index
    %262 = vector.load %arg15[%c1_123, %c0_124, %c0_125] : memref<2x64x32xf32, #tpu.memory_space<vmem>>, vector<1x64x32xf32>
    %263 = vector.shape_cast %262 : vector<1x64x32xf32> to vector<64x32xf32>
    %cst_126 = arith.constant dense<0.000000e+00> : vector<40x32xf32>
    %264 = tpu.matmul %261, %263, %cst_126 {dimension_numbers = #tpu.dot_dimension_numbers<[1], [0], [0], [1], [0, 0, 1, 1], [], []>} : vector<40x64xf32>, vector<64x32xf32>, vector<40x32xf32> -> vector<40x32xf32>
    %265 = arith.addf %215, %264 : vector<40x32xf32>
    %c1_127 = arith.constant 1 : index
    %c0_128 = arith.constant 0 : index
    %c0_129 = arith.constant 0 : index
    %266 = vector.load %arg16[%c1_127, %c0_128, %c0_129] : memref<2x1x32xf32, #tpu.memory_space<vmem>>, vector<1x1x32xf32>
    %267 = vector.shape_cast %266 : vector<1x1x32xf32> to vector<1x32xf32>
    %268 = vector.broadcast %267 : vector<1x32xf32> to vector<40x32xf32>
    %269 = arith.addf %265, %268 : vector<40x32xf32>
    %270 = vector.extract_strided_slice %269 {offsets = [0, 0], sizes = [8, 32], strides = [1, 1]} : vector<40x32xf32> to vector<8x32xf32>
    %c0_130 = arith.constant 0 : index
    %c0_131 = arith.constant 0 : index
    %271 = vector.load %arg17[%c0_130, %c0_131] : memref<1x32xf32, #tpu.memory_space<vmem>>, vector<1x32xf32>
    %c0_132 = arith.constant 0 : index
    %c0_133 = arith.constant 0 : index
    %272 = vector.load %arg18[%c0_132, %c0_133] : memref<1x32xf32, #tpu.memory_space<vmem>>, vector<1x32xf32>
    %cst_134 = arith.constant dense<0.000000e+00> : vector<8xf32>
    %273 = vector.multi_reduction <add>, %270, %cst_134 [1] : vector<8x32xf32> to vector<8xf32>
    %274 = vector.shape_cast %273 : vector<8xf32> to vector<8x1xf32>
    %cst_135 = arith.constant 3.200000e+01 : f32
    %275 = vector.broadcast %cst_135 : f32 to vector<8x1xf32>
    %276 = arith.divf %274, %275 : vector<8x1xf32>
    %277 = vector.broadcast %276 : vector<8x1xf32> to vector<8x32xf32>
    %278 = arith.subf %270, %277 : vector<8x32xf32>
    %279 = arith.mulf %278, %278 : vector<8x32xf32>
    %cst_136 = arith.constant dense<0.000000e+00> : vector<8xf32>
    %280 = vector.multi_reduction <add>, %279, %cst_136 [1] : vector<8x32xf32> to vector<8xf32>
    %281 = vector.shape_cast %280 : vector<8xf32> to vector<8x1xf32>
    %cst_137 = arith.constant 3.200000e+01 : f32
    %282 = vector.broadcast %cst_137 : f32 to vector<8x1xf32>
    %283 = arith.divf %281, %282 : vector<8x1xf32>
    %284 = vector.broadcast %276 : vector<8x1xf32> to vector<8x32xf32>
    %285 = arith.subf %270, %284 : vector<8x32xf32>
    %cst_138 = arith.constant 9.99999974E-6 : f32
    %286 = vector.broadcast %cst_138 : f32 to vector<8x1xf32>
    %287 = arith.addf %283, %286 : vector<8x1xf32>
    %288 = math.rsqrt %287 : vector<8x1xf32>
    %289 = vector.broadcast %288 : vector<8x1xf32> to vector<8x32xf32>
    %290 = arith.mulf %285, %289 : vector<8x32xf32>
    %291 = vector.broadcast %271 : vector<1x32xf32> to vector<8x32xf32>
    %292 = arith.mulf %290, %291 : vector<8x32xf32>
    %293 = vector.broadcast %272 : vector<1x32xf32> to vector<8x32xf32>
    %294 = arith.addf %292, %293 : vector<8x32xf32>
    %c0_139 = arith.constant 0 : index
    %c0_140 = arith.constant 0 : index
    %295 = vector.load %arg19[%c0_139, %c0_140] : memref<1x32xf32, #tpu.memory_space<vmem>>, vector<1x32xf32>
    %c0_141 = arith.constant 0 : index
    %c0_142 = arith.constant 0 : index
    %296 = vector.load %arg20[%c0_141, %c0_142] : memref<1x32xf32, #tpu.memory_space<vmem>>, vector<1x32xf32>
    %cst_143 = arith.constant dense<0.000000e+00> : vector<8xf32>
    %297 = vector.multi_reduction <add>, %294, %cst_143 [1] : vector<8x32xf32> to vector<8xf32>
    %298 = vector.shape_cast %297 : vector<8xf32> to vector<8x1xf32>
    %cst_144 = arith.constant 3.200000e+01 : f32
    %299 = vector.broadcast %cst_144 : f32 to vector<8x1xf32>
    %300 = arith.divf %298, %299 : vector<8x1xf32>
    %301 = vector.broadcast %300 : vector<8x1xf32> to vector<8x32xf32>
    %302 = arith.subf %294, %301 : vector<8x32xf32>
    %303 = arith.mulf %302, %302 : vector<8x32xf32>
    %cst_145 = arith.constant dense<0.000000e+00> : vector<8xf32>
    %304 = vector.multi_reduction <add>, %303, %cst_145 [1] : vector<8x32xf32> to vector<8xf32>
    %305 = vector.shape_cast %304 : vector<8xf32> to vector<8x1xf32>
    %cst_146 = arith.constant 3.200000e+01 : f32
    %306 = vector.broadcast %cst_146 : f32 to vector<8x1xf32>
    %307 = arith.divf %305, %306 : vector<8x1xf32>
    %308 = vector.broadcast %300 : vector<8x1xf32> to vector<8x32xf32>
    %309 = arith.subf %294, %308 : vector<8x32xf32>
    %cst_147 = arith.constant 9.99999974E-6 : f32
    %310 = vector.broadcast %cst_147 : f32 to vector<8x1xf32>
    %311 = arith.addf %307, %310 : vector<8x1xf32>
    %312 = math.rsqrt %311 : vector<8x1xf32>
    %313 = vector.broadcast %312 : vector<8x1xf32> to vector<8x32xf32>
    %314 = arith.mulf %309, %313 : vector<8x32xf32>
    %315 = vector.broadcast %295 : vector<1x32xf32> to vector<8x32xf32>
    %316 = arith.mulf %314, %315 : vector<8x32xf32>
    %317 = vector.broadcast %296 : vector<1x32xf32> to vector<8x32xf32>
    %318 = arith.addf %316, %317 : vector<8x32xf32>
    %c0_148 = arith.constant 0 : index
    %c0_149 = arith.constant 0 : index
    %319 = vector.load %arg21[%c0_148, %c0_149] : memref<32x64xf32, #tpu.memory_space<vmem>>, vector<32x64xf32>
    %cst_150 = arith.constant dense<0.000000e+00> : vector<8x64xf32>
    %320 = tpu.matmul %318, %319, %cst_150 {dimension_numbers = #tpu.dot_dimension_numbers<[1], [0], [0], [1], [0, 0, 1, 1], [], []>} : vector<8x32xf32>, vector<32x64xf32>, vector<8x64xf32> -> vector<8x64xf32>
    %c0_151 = arith.constant 0 : index
    %c0_152 = arith.constant 0 : index
    %321 = vector.load %arg22[%c0_151, %c0_152] : memref<1x64xf32, #tpu.memory_space<vmem>>, vector<1x64xf32>
    %322 = vector.broadcast %321 : vector<1x64xf32> to vector<8x64xf32>
    %323 = arith.addf %320, %322 : vector<8x64xf32>
    %cst_153 = arith.constant 0.000000e+00 : f32
    %324 = vector.broadcast %cst_153 : f32 to vector<8x64xf32>
    %325 = arith.maximumf %323, %324 : vector<8x64xf32>
    %c0_154 = arith.constant 0 : index
    %c0_155 = arith.constant 0 : index
    %326 = vector.load %arg23[%c0_154, %c0_155] : memref<64x8xf32, #tpu.memory_space<vmem>>, vector<64x8xf32>
    %cst_156 = arith.constant dense<0.000000e+00> : vector<8x8xf32>
    %327 = tpu.matmul %325, %326, %cst_156 {dimension_numbers = #tpu.dot_dimension_numbers<[1], [0], [0], [1], [0, 0, 1, 1], [], []>} : vector<8x64xf32>, vector<64x8xf32>, vector<8x8xf32> -> vector<8x8xf32>
    %c0_157 = arith.constant 0 : index
    %c0_158 = arith.constant 0 : index
    %328 = vector.load %arg24[%c0_157, %c0_158] : memref<1x8xf32, #tpu.memory_space<vmem>>, vector<1x8xf32>
    %329 = vector.broadcast %328 : vector<1x8xf32> to vector<8x8xf32>
    %330 = arith.addf %327, %329 : vector<8x8xf32>
    %c0_159 = arith.constant 0 : index
    %c0_160 = arith.constant 0 : index
    %331 = vector.load %arg25[%c0_159, %c0_160] : memref<8x8xf32, #tpu.memory_space<vmem>>, vector<8x8xf32>
    tpu.vector_store %arg25[%c0_159, %c0_160], %330 {strides = array<i32>} : memref<8x8xf32, #tpu.memory_space<vmem>>, vector<8x8xf32>,
    return
  }
  func.func @transform_0(%arg0: i32) -> (i32, i32, i32) {
    %c0_i32 = arith.constant 0 : i32
    %c0_i32_0 = arith.constant 0 : i32
    %c0_i32_1 = arith.constant 0 : i32
    return %c0_i32, %arg0, %c0_i32_0 : i32, i32, i32
  }
  func.func @transform_1(%arg0: i32) -> (i32, i32) {
    %c0_i32 = arith.constant 0 : i32
    %c0_i32_0 = arith.constant 0 : i32
    %c0_i32_1 = arith.constant 0 : i32
    return %c0_i32, %c0_i32_0 : i32, i32
  }
  func.func @transform_2(%arg0: i32) -> (i32, i32) {
    %c0_i32 = arith.constant 0 : i32
    %c0_i32_0 = arith.constant 0 : i32
    %c0_i32_1 = arith.constant 0 : i32
    return %c0_i32, %c0_i32_0 : i32, i32
  }
  func.func @transform_3(%arg0: i32) -> (i32, i32) {
    %c0_i32 = arith.constant 0 : i32
    %c0_i32_0 = arith.constant 0 : i32
    %c0_i32_1 = arith.constant 0 : i32
    return %c0_i32, %c0_i32_0 : i32, i32
  }
  func.func @transform_4(%arg0: i32) -> (i32, i32) {
    %c0_i32 = arith.constant 0 : i32
    %c0_i32_0 = arith.constant 0 : i32
    %c0_i32_1 = arith.constant 0 : i32
    return %c0_i32, %c0_i32_0 : i32, i32
  }
  func.func @transform_5(%arg0: i32) -> (i32, i32, i32) {
    %c0_i32 = arith.constant 0 : i32
    %c0_i32_0 = arith.constant 0 : i32
    %c0_i32_1 = arith.constant 0 : i32
    %c0_i32_2 = arith.constant 0 : i32
    return %c0_i32, %c0_i32_0, %c0_i32_1 : i32, i32, i32
  }
  func.func @transform_6(%arg0: i32) -> (i32, i32, i32) {
    %c0_i32 = arith.constant 0 : i32
    %c0_i32_0 = arith.constant 0 : i32
    %c0_i32_1 = arith.constant 0 : i32
    %c0_i32_2 = arith.constant 0 : i32
    return %c0_i32, %c0_i32_0, %c0_i32_1 : i32, i32, i32
  }
  func.func @transform_7(%arg0: i32) -> (i32, i32, i32) {
    %c0_i32 = arith.constant 0 : i32
    %c0_i32_0 = arith.constant 0 : i32
    %c0_i32_1 = arith.constant 0 : i32
    %c0_i32_2 = arith.constant 0 : i32
    return %c0_i32, %c0_i32_0, %c0_i32_1 : i32, i32, i32
  }
  func.func @transform_8(%arg0: i32) -> (i32, i32, i32) {
    %c0_i32 = arith.constant 0 : i32
    %c0_i32_0 = arith.constant 0 : i32
    %c0_i32_1 = arith.constant 0 : i32
    %c0_i32_2 = arith.constant 0 : i32
    return %c0_i32, %c0_i32_0, %c0_i32_1 : i32, i32, i32
  }
  func.func @transform_9(%arg0: i32) -> (i32, i32, i32) {
    %c0_i32 = arith.constant 0 : i32
    %c0_i32_0 = arith.constant 0 : i32
    %c0_i32_1 = arith.constant 0 : i32
    %c0_i32_2 = arith.constant 0 : i32
    return %c0_i32, %c0_i32_0, %c0_i32_1 : i32, i32, i32
  }
  func.func @transform_10(%arg0: i32) -> (i32, i32, i32) {
    %c0_i32 = arith.constant 0 : i32
    %c0_i32_0 = arith.constant 0 : i32
    %c0_i32_1 = arith.constant 0 : i32
    %c0_i32_2 = arith.constant 0 : i32
    return %c0_i32, %c0_i32_0, %c0_i32_1 : i32, i32, i32
  }
  func.func @transform_11(%arg0: i32) -> (i32, i32, i32) {
    %c0_i32 = arith.constant 0 : i32
    %c0_i32_0 = arith.constant 0 : i32
    %c0_i32_1 = arith.constant 0 : i32
    %c0_i32_2 = arith.constant 0 : i32
    return %c0_i32, %c0_i32_0, %c0_i32_1 : i32, i32, i32
  }
  func.func @transform_12(%arg0: i32) -> (i32, i32, i32) {
    %c0_i32 = arith.constant 0 : i32
    %c0_i32_0 = arith.constant 0 : i32
    %c0_i32_1 = arith.constant 0 : i32
    %c0_i32_2 = arith.constant 0 : i32
    return %c0_i32, %c0_i32_0, %c0_i32_1 : i32, i32, i32
  }
  func.func @transform_13(%arg0: i32) -> (i32, i32, i32) {
    %c0_i32 = arith.constant 0 : i32
    %c0_i32_0 = arith.constant 0 : i32
    %c0_i32_1 = arith.constant 0 : i32
    %c0_i32_2 = arith.constant 0 : i32
    return %c0_i32, %c0_i32_0, %c0_i32_1 : i32, i32, i32
  }
  func.func @transform_14(%arg0: i32) -> (i32, i32, i32) {
    %c0_i32 = arith.constant 0 : i32
    %c0_i32_0 = arith.constant 0 : i32
    %c0_i32_1 = arith.constant 0 : i32
    %c0_i32_2 = arith.constant 0 : i32
    return %c0_i32, %c0_i32_0, %c0_i32_1 : i32, i32, i32
  }
  func.func @transform_15(%arg0: i32) -> (i32, i32, i32) {
    %c0_i32 = arith.constant 0 : i32
    %c0_i32_0 = arith.constant 0 : i32
    %c0_i32_1 = arith.constant 0 : i32
    %c0_i32_2 = arith.constant 0 : i32
    return %c0_i32, %c0_i32_0, %c0_i32_1 : i32, i32, i32
  }
  func.func @transform_16(%arg0: i32) -> (i32, i32) {
    %c0_i32 = arith.constant 0 : i32
    %c0_i32_0 = arith.constant 0 : i32
    %c0_i32_1 = arith.constant 0 : i32
    return %c0_i32, %c0_i32_0 : i32, i32
  }
  func.func @transform_17(%arg0: i32) -> (i32, i32) {
    %c0_i32 = arith.constant 0 : i32
    %c0_i32_0 = arith.constant 0 : i32
    %c0_i32_1 = arith.constant 0 : i32
    return %c0_i32, %c0_i32_0 : i32, i32
  }
  func.func @transform_18(%arg0: i32) -> (i32, i32) {
    %c0_i32 = arith.constant 0 : i32
    %c0_i32_0 = arith.constant 0 : i32
    %c0_i32_1 = arith.constant 0 : i32
    return %c0_i32, %c0_i32_0 : i32, i32
  }
  func.func @transform_19(%arg0: i32) -> (i32, i32) {
    %c0_i32 = arith.constant 0 : i32
    %c0_i32_0 = arith.constant 0 : i32
    %c0_i32_1 = arith.constant 0 : i32
    return %c0_i32, %c0_i32_0 : i32, i32
  }
  func.func @transform_20(%arg0: i32) -> (i32, i32) {
    %c0_i32 = arith.constant 0 : i32
    %c0_i32_0 = arith.constant 0 : i32
    %c0_i32_1 = arith.constant 0 : i32
    return %c0_i32, %c0_i32_0 : i32, i32
  }
  func.func @transform_21(%arg0: i32) -> (i32, i32) {
    %c0_i32 = arith.constant 0 : i32
    %c0_i32_0 = arith.constant 0 : i32
    %c0_i32_1 = arith.constant 0 : i32
    return %c0_i32, %c0_i32_0 : i32, i32
  }
  func.func @transform_22(%arg0: i32) -> (i32, i32) {
    %c0_i32 = arith.constant 0 : i32
    %c0_i32_0 = arith.constant 0 : i32
    %c0_i32_1 = arith.constant 0 : i32
    return %c0_i32, %c0_i32_0 : i32, i32
  }
  func.func @transform_23(%arg0: i32) -> (i32, i32) {
    %c0_i32 = arith.constant 0 : i32
    %c0_i32_0 = arith.constant 0 : i32
    %c0_i32_1 = arith.constant 0 : i32
    return %c0_i32, %c0_i32_0 : i32, i32
  }
  func.func @transform_24(%arg0: i32) -> (i32, i32) {
    %c0_i32 = arith.constant 0 : i32
    %c0_i32_0 = arith.constant 0 : i32
    return %arg0, %c0_i32 : i32, i32
  }
}

</mosaic_0001>

<llo_original>
// kernel: wdmcnet_forward.1
$region0: #{wdmcnet_forward.1}
  #allocation0 [shape = 'u32[]', space=smem, size = 0x4, offset = 0x4, fixed_abs, tag = 'smem constant byte address 0x4 - core index']
  #allocation1 [shape = 'u32[144,128]{1,0:T(1,128)}', space=vmem, size = 0x12000, scoped, tag = 'internal scratch']
  %s0 = inlined_call_operand.vmem [shape: f32[4,8,64], index: 0, kind: input, shape index: {}]
  %s1 = inlined_call_operand.vmem [shape: f32[40,40], index: 1, kind: input, shape index: {}]
  %s2 = inlined_call_operand.vmem [shape: f32[40,32], index: 2, kind: input, shape index: {}]
  %s3 = inlined_call_operand.vmem [shape: f32[64,32], index: 3, kind: input, shape index: {}]
  %s4 = inlined_call_operand.vmem [shape: f32[1,32], index: 4, kind: input, shape index: {}]
  %s5 = inlined_call_operand.vmem [shape: f32[2,1,32], index: 5, kind: input, shape index: {}]
  %s6 = inlined_call_operand.vmem [shape: f32[2,1,32], index: 6, kind: input, shape index: {}]
  %s7 = inlined_call_operand.vmem [shape: f32[2,32,96], index: 7, kind: input, shape index: {}]
  %s8 = inlined_call_operand.vmem [shape: f32[2,32,32], index: 8, kind: input, shape index: {}]
  %s9 = inlined_call_operand.vmem [shape: f32[2,1,32], index: 9, kind: input, shape index: {}]
  %s10 = inlined_call_operand.vmem [shape: f32[2,1,32], index: 10, kind: input, shape index: {}]
  %s11 = inlined_call_operand.vmem [shape: f32[2,1,32], index: 11, kind: input, shape index: {}]
  %s12 = inlined_call_operand.vmem [shape: f32[2,32,64], index: 12, kind: input, shape index: {}]
  %s13 = inlined_call_operand.vmem [shape: f32[2,1,64], index: 13, kind: input, shape index: {}]
  %s14 = inlined_call_operand.vmem [shape: f32[2,64,32], index: 14, kind: input, shape index: {}]
  %s15 = inlined_call_operand.vmem [shape: f32[2,1,32], index: 15, kind: input, shape index: {}]
  %s16 = inlined_call_operand.vmem [shape: f32[1,32], index: 16, kind: input, shape index: {}]
  %s17 = inlined_call_operand.vmem [shape: f32[1,32], index: 17, kind: input, shape index: {}]
  %s18 = inlined_call_operand.vmem [shape: f32[1,32], index: 18, kind: input, shape index: {}]
  %s19 = inlined_call_operand.vmem [shape: f32[1,32], index: 19, kind: input, shape index: {}]
  %s20 = inlined_call_operand.vmem [shape: f32[32,64], index: 20, kind: input, shape index: {}]
  %s21 = inlined_call_operand.vmem [shape: f32[1,64], index: 21, kind: input, shape index: {}]
  %s22 = inlined_call_operand.vmem [shape: f32[64,8], index: 22, kind: input, shape index: {}]
  %s23 = inlined_call_operand.vmem [shape: f32[1,8], index: 23, kind: input, shape index: {}]
  %s24 = inlined_call_operand.vmem [shape: f32[8,8], index: 24, kind: output, shape index: {}]
  %s25 = sld [smem:[#allocation0]]
  $region106: #{wdmcnet_forward.1} parent=0
    _
  %s27 = ssub.s32 1, %s25
  %s28 = scalar_select 0, %s27, %s25
  // Predicated region
  $region2: #{wdmcnet_forward.1} parent=0 // pred_check
    _
  $region3: #{wdmcnet_forward.1} parent=0 // pred_check_branch
    %30 = sbr.rel (0) target = $region5
  $region4: #{wdmcnet_forward.1} parent=0 // pred_region
    _
  $region5: #{wdmcnet_forward.1} parent=0 // pred_fallthru
    _
  // Predicated region
  $region6: #{wdmcnet_forward.1} parent=0 // pred_check
    _
  $region7: #{wdmcnet_forward.1} parent=0 // pred_check_branch
    %32 = sbr.rel (0) target = $region9
  $region8: #{wdmcnet_forward.1} parent=0 // pred_region
    _
  $region9: #{wdmcnet_forward.1} parent=0 // pred_fallthru
    _
  // Predicated region
  $region10: #{wdmcnet_forward.1} parent=0 // pred_check
    _
  $region11: #{wdmcnet_forward.1} parent=0 // pred_check_branch
    %34 = sbr.rel (0) target = $region13
  $region12: #{wdmcnet_forward.1} parent=0 // pred_region
    _
  $region13: #{wdmcnet_forward.1} parent=0 // pred_fallthru
    _
  // Predicated region
  $region14: #{wdmcnet_forward.1} parent=0 // pred_check
    _
  $region15: #{wdmcnet_forward.1} parent=0 // pred_check_branch
    %36 = sbr.rel (0) target = $region17
  $region16: #{wdmcnet_forward.1} parent=0 // pred_region
    _
  $region17: #{wdmcnet_forward.1} parent=0 // pred_fallthru
    _
  // Predicated region
  $region18: #{wdmcnet_forward.1} parent=0 // pred_check
    _
  $region19: #{wdmcnet_forward.1} parent=0 // pred_check_branch
    %38 = sbr.rel (0) target = $region21
  $region20: #{wdmcnet_forward.1} parent=0 // pred_region
    _
  $region21: #{wdmcnet_forward.1} parent=0 // pred_fallthru
    _
  // Predicated region
  $region22: #{wdmcnet_forward.1} parent=0 // pred_check
    _
  $region23: #{wdmcnet_forward.1} parent=0 // pred_check_branch
    %40 = sbr.rel (0) target = $region25
  $region24: #{wdmcnet_forward.1} parent=0 // pred_region
    _
  $region25: #{wdmcnet_forward.1} parent=0 // pred_fallthru
    _
  // Predicated region
  $region26: #{wdmcnet_forward.1} parent=0 // pred_check
    _
  $region27: #{wdmcnet_forward.1} parent=0 // pred_check_branch
    %42 = sbr.rel (0) target = $region29
  $region28: #{wdmcnet_forward.1} parent=0 // pred_region
    _
  $region29: #{wdmcnet_forward.1} parent=0 // pred_fallthru
    _
  // Predicated region
  $region30: #{wdmcnet_forward.1} parent=0 // pred_check
    _
  $region31: #{wdmcnet_forward.1} parent=0 // pred_check_branch
    %44 = sbr.rel (0) target = $region33
  $region32: #{wdmcnet_forward.1} parent=0 // pred_region
    _
  $region33: #{wdmcnet_forward.1} parent=0 // pred_fallthru
    _
  // Predicated region
  $region34: #{wdmcnet_forward.1} parent=0 // pred_check
    _
  $region35: #{wdmcnet_forward.1} parent=0 // pred_check_branch
    %46 = sbr.rel (0) target = $region37
  $region36: #{wdmcnet_forward.1} parent=0 // pred_region
    _
  $region37: #{wdmcnet_forward.1} parent=0 // pred_fallthru
    _
  // Predicated region
  $region38: #{wdmcnet_forward.1} parent=0 // pred_check
    _
  $region39: #{wdmcnet_forward.1} parent=0 // pred_check_branch
    %48 = sbr.rel (0) target = $region41
  $region40: #{wdmcnet_forward.1} parent=0 // pred_region
    _
  $region41: #{wdmcnet_forward.1} parent=0 // pred_fallthru
    _
  // Predicated region
  $region42: #{wdmcnet_forward.1} parent=0 // pred_check
    _
  $region43: #{wdmcnet_forward.1} parent=0 // pred_check_branch
    %50 = sbr.rel (0) target = $region45
  $region44: #{wdmcnet_forward.1} parent=0 // pred_region
    _
  $region45: #{wdmcnet_forward.1} parent=0 // pred_fallthru
    _
  // Predicated region
  $region46: #{wdmcnet_forward.1} parent=0 // pred_check
    _
  $region47: #{wdmcnet_forward.1} parent=0 // pred_check_branch
    %52 = sbr.rel (0) target = $region49
  $region48: #{wdmcnet_forward.1} parent=0 // pred_region
    _
  $region49: #{wdmcnet_forward.1} parent=0 // pred_fallthru
    _
  // Predicated region
  $region50: #{wdmcnet_forward.1} parent=0 // pred_check
    _
  $region51: #{wdmcnet_forward.1} parent=0 // pred_check_branch
    %54 = sbr.rel (0) target = $region53
  $region52: #{wdmcnet_forward.1} parent=0 // pred_region
    _
  $region53: #{wdmcnet_forward.1} parent=0 // pred_fallthru
    _
  // Predicated region
  $region54: #{wdmcnet_forward.1} parent=0 // pred_check
    _
  $region55: #{wdmcnet_forward.1} parent=0 // pred_check_branch
    %56 = sbr.rel (0) target = $region57
  $region56: #{wdmcnet_forward.1} parent=0 // pred_region
    _
  $region57: #{wdmcnet_forward.1} parent=0 // pred_fallthru
    _
  // Predicated region
  $region58: #{wdmcnet_forward.1} parent=0 // pred_check
    _
  $region59: #{wdmcnet_forward.1} parent=0 // pred_check_branch
    %58 = sbr.rel (0) target = $region61
  $region60: #{wdmcnet_forward.1} parent=0 // pred_region
    _
  $region61: #{wdmcnet_forward.1} parent=0 // pred_fallthru
    _
  // Predicated region
  $region62: #{wdmcnet_forward.1} parent=0 // pred_check
    _
  $region63: #{wdmcnet_forward.1} parent=0 // pred_check_branch
    %60 = sbr.rel (0) target = $region65
  $region64: #{wdmcnet_forward.1} parent=0 // pred_region
    _
  $region65: #{wdmcnet_forward.1} parent=0 // pred_fallthru
    _
  // Predicated region
  $region66: #{wdmcnet_forward.1} parent=0 // pred_check
    _
  $region67: #{wdmcnet_forward.1} parent=0 // pred_check_branch
    %62 = sbr.rel (0) target = $region69
  $region68: #{wdmcnet_forward.1} parent=0 // pred_region
    _
  $region69: #{wdmcnet_forward.1} parent=0 // pred_fallthru
    _
  // Predicated region
  $region70: #{wdmcnet_forward.1} parent=0 // pred_check
    _
  $region71: #{wdmcnet_forward.1} parent=0 // pred_check_branch
    %64 = sbr.rel (0) target = $region73
  $region72: #{wdmcnet_forward.1} parent=0 // pred_region
    _
  $region73: #{wdmcnet_forward.1} parent=0 // pred_fallthru
    _
  // Predicated region
  $region74: #{wdmcnet_forward.1} parent=0 // pred_check
    _
  $region75: #{wdmcnet_forward.1} parent=0 // pred_check_branch
    %66 = sbr.rel (0) target = $region77
  $region76: #{wdmcnet_forward.1} parent=0 // pred_region
    _
  $region77: #{wdmcnet_forward.1} parent=0 // pred_fallthru
    _
  // Predicated region
  $region78: #{wdmcnet_forward.1} parent=0 // pred_check
    _
  $region79: #{wdmcnet_forward.1} parent=0 // pred_check_branch
    %68 = sbr.rel (0) target = $region81
  $region80: #{wdmcnet_forward.1} parent=0 // pred_region
    _
  $region81: #{wdmcnet_forward.1} parent=0 // pred_fallthru
    _
  // Predicated region
  $region82: #{wdmcnet_forward.1} parent=0 // pred_check
    _
  $region83: #{wdmcnet_forward.1} parent=0 // pred_check_branch
    %70 = sbr.rel (0) target = $region85
  $region84: #{wdmcnet_forward.1} parent=0 // pred_region
    _
  $region85: #{wdmcnet_forward.1} parent=0 // pred_fallthru
    _
  // Predicated region
  $region86: #{wdmcnet_forward.1} parent=0 // pred_check
    _
  $region87: #{wdmcnet_forward.1} parent=0 // pred_check_branch
    %72 = sbr.rel (0) target = $region89
  $region88: #{wdmcnet_forward.1} parent=0 // pred_region
    _
  $region89: #{wdmcnet_forward.1} parent=0 // pred_fallthru
    _
  // Predicated region
  $region90: #{wdmcnet_forward.1} parent=0 // pred_check
    _
  $region91: #{wdmcnet_forward.1} parent=0 // pred_check_branch
    %74 = sbr.rel (0) target = $region93
  $region92: #{wdmcnet_forward.1} parent=0 // pred_region
    _
  $region93: #{wdmcnet_forward.1} parent=0 // pred_fallthru
    _
  // Predicated region
  $region94: #{wdmcnet_forward.1} parent=0 // pred_check
    _
  $region95: #{wdmcnet_forward.1} parent=0 // pred_check_branch
    %76 = sbr.rel (0) target = $region97
  $region96: #{wdmcnet_forward.1} parent=0 // pred_region
    _
  $region97: #{wdmcnet_forward.1} parent=0 // pred_fallthru
    _
  %v77 = vld [vmem:[%s0] sm:$0xff]
  %v78 = vld [vmem:[%s0 + $0x8] sm:$0xff]
  %v79 = vld [vmem:[%s0 + $0x10] sm:$0xff]
  %v80 = vld [vmem:[%s0 + $0x18] sm:$0xff]
  %v81 = vld [vmem:[%s3] sm:$0xff]
  %v82 = vld [vmem:[%s3 + $0x8] sm:$0xff]
  %v83 = vld [vmem:[%s3 + $0x10] sm:$0xff]
  %v84 = vld [vmem:[%s3 + $0x18] sm:$0xff]
  %v85 = vld [vmem:[%s3 + $0x20] sm:$0xff]
  %v86 = vld [vmem:[%s3 + $0x28] sm:$0xff]
  %v87 = vld [vmem:[%s3 + $0x30] sm:$0xff]
  %v88 = vld [vmem:[%s3 + $0x38] sm:$0xff]
  %v89 = vld [vmem:[%s4] sm:$0x1]
  %v91 = vlaneseq
  %v92 = vshrl.u32 %v91, 7
  %v93 = vsub.s32 0, %v92
  %v94 = vrot.slane %v89, %v93
  %vm96 = vcmask 523264
  %v98 = vsel %vm96, %v77, 0
  %v101 = vsel %vm96, %v78, 0
  %v104 = vsel %vm96, %v79, 0
  %v107 = vsel %vm96, %v80, 0
  %109 = vmatprep.subr.mxu0 0.0
  %110 = vmatpush1.msra.mxu0 %v81
  %111 = vmatprep.subr.mxu0 0.0
  %112 = vmatpush1.msra.mxu0 %v82
  %113 = vmatprep.subr.mxu0 0.0
  %114 = vmatpush1.msra.mxu0 %v83
  %115 = vmatprep.subr.mxu0 0.0
  %116 = vmatpush1.msra.mxu0 %v84
  %117 = vmatprep.subr.mxu0 0.0
  %118 = vmatpush1.msra.mxu0 %v85
  %119 = vmatprep.subr.mxu0 0.0
  %120 = vmatpush1.msra.mxu0 %v86
  %121 = vmatprep.subr.mxu0 0.0
  %122 = vmatpush1.msra.mxu0 %v87
  %123 = vmatprep.subr.mxu0 0.0
  %124 = vmatpush1.msra.mxu0 %v88
  %125 = vmatprep.subr.mxu0 0.0
  %126 = vmatpush1.msra.mxu0 0.0
  %127 = vmatprep.subr.mxu0 0.0
  %128 = vmatpush1.msra.mxu0 0.0
  %129 = vmatprep.subr.mxu0 0.0
  %130 = vmatpush1.msra.mxu0 0.0
  %131 = vmatprep.subr.mxu0 0.0
  %132 = vmatpush1.msra.mxu0 0.0
  %133 = vmatprep.subr.mxu0 0.0
  %134 = vmatpush1.msra.mxu0 0.0
  %135 = vmatprep.subr.mxu0 0.0
  %136 = vmatpush1.msra.mxu0 0.0
  %137 = vmatprep.subr.mxu0 0.0
  %138 = vmatpush1.msra.mxu0 0.0
  %139 = vmatprep.subr.mxu0 0.0
  %140 = vmatpush1.msra.mxu0 0.0
  %141 = vmatprep.subr.mxu0 0.0
  %142 = vmatpush1.msra.mxu0 0.0
  %143 = vmatprep.subr.mxu0 0.0
  %144 = vmatpush1.msra.mxu0 0.0
  %145 = vmatprep.subr.mxu0 0.0
  %146 = vmatpush1.msra.mxu0 0.0
  %147 = vmatprep.subr.mxu0 0.0
  %148 = vmatpush1.msra.mxu0 0.0
  %149 = vmatprep.subr.mxu0 0.0
  %150 = vmatpush1.msra.mxu0 0.0
  %151 = vmatprep.subr.mxu0 0.0
  %152 = vmatpush1.msra.mxu0 0.0
  %153 = vmatprep.subr.mxu0 0.0
  %154 = vmatpush1.msra.mxu0 0.0
  %155 = vmatprep.subr.mxu0 0.0
  %156 = vmatpush1.msra.mxu0 0.0
  %157 = vmatprep.subr.mxu0 0.0
  %158 = vmatpush1.msra.mxu0 0.0
  %159 = vmatprep.subr.mxu0 0.0
  %160 = vmatpush1.msra.mxu0 0.0
  %161 = vmatprep.subr.mxu0 0.0
  %162 = vmatpush1.msra.mxu0 0.0
  %163 = vmatprep.subr.mxu0 0.0
  %164 = vmatpush1.msra.mxu0 0.0
  %165 = vmatprep.subr.mxu0 0.0
  %166 = vmatpush1.msra.mxu0 0.0
  %167 = vmatprep.subr.mxu0 0.0
  %168 = vmatpush1.msra.mxu0 0.0
  %169 = vmatprep.subr.mxu0 0.0
  %170 = vmatpush1.msra.mxu0 0.0
  %171 = vmatprep.subr.mxu0 0.0
  %172 = vmatpush1.msra.mxu0 0.0
  %173 = vmatprep.mubr.f32.mxu0 0.0
  %174 = vmatmul.mubr.f32.gmra.mrb[0].mxu0 %v98
  %v175 = vpop.f32.mrb[0].mxu0
  %v176 = vadd.f32 %v94, %v175
  %v177 = vpop.f32.mrb[0].mxu0
  %178 = vmatprep.mubr.f32.mxu0 0.0
  %179 = vmatmul.mubr.f32.gmra.mrb[0].mxu0 %v101
  %v180 = vpop.f32.mrb[0].mxu0
  %v181 = vadd.f32 %v94, %v180
  %v182 = vpop.f32.mrb[0].mxu0
  %183 = vmatprep.mubr.f32.mxu0 0.0
  %184 = vmatmul.mubr.f32.gmra.mrb[0].mxu0 %v104
  %v185 = vpop.f32.mrb[0].mxu0
  %v186 = vadd.f32 %v94, %v185
  %v187 = vpop.f32.mrb[0].mxu0
  %188 = vmatprep.mubr.f32.mxu0 0.0
  %189 = vmatmul.mubr.f32.gmra.mrb[0].mxu0 %v107
  %v190 = vpop.f32.mrb[0].mxu0
  %v191 = vadd.f32 %v94, %v190
  %v192 = vpop.f32.mrb[0].mxu0
  %193 = vdwg.mxu0
  %v194 = vld [vmem:[%s2] sm:$0xff]
  %v195 = vld [vmem:[%s2 + $0x8] sm:$0xff]
  %v196 = vld [vmem:[%s2 + $0x10] sm:$0xff]
  %v197 = vld [vmem:[%s2 + $0x18] sm:$0xff]
  %v198 = vld [vmem:[%s2 + $0x20] sm:$0xff]
  %v199 = vadd.f32 %v176, %v195
  %v200 = vadd.f32 %v181, %v196
  %v201 = vadd.f32 %v186, %v197
  %v202 = vadd.f32 %v191, %v198
  %v203 = vld [vmem:[%s1] sm:$0xff]
  %v204 = vld [vmem:[%s1 + $0x8] sm:$0xff]
  %v205 = vld [vmem:[%s1 + $0x10] sm:$0xff]
  %v206 = vld [vmem:[%s1 + $0x18] sm:$0xff]
  %v207 = vld [vmem:[%s1 + $0x20] sm:$0xff]
  %v208 = vld [vmem:[%s5] sm:$0x1]
  %v209 = vld [vmem:[%s6] sm:$0x1]
  %vm210 = vcmask 261120
  %v211 = vsel %vm210, %v194, 0.0
  %212 = vadd.xlane.f32.xlu0 %v211
  %v213 = vpop.xlane.xlu0 %212
  %v214 = vsel %vm210, %v199, 0.0
  %215 = vadd.xlane.f32.xlu0 %v214
  %v216 = vpop.xlane.xlu0 %215
  %v217 = vsel %vm210, %v200, 0.0
  %218 = vadd.xlane.f32.xlu0 %v217
  %v219 = vpop.xlane.xlu0 %218
  %v220 = vsel %vm210, %v201, 0.0
  %221 = vadd.xlane.f32.xlu0 %v220
  %v222 = vpop.xlane.xlu0 %221
  %v223 = vsel %vm210, %v202, 0.0
  %224 = vadd.xlane.f32.xlu0 %v223
  %v225 = vpop.xlane.xlu0 %224
  %v226 = vrcp.pop 32.0
  %v227 = vmul.f32 %v213, %v226
  %v228 = vmul.f32 %v216, %v226
  %v229 = vmul.f32 %v219, %v226
  %v230 = vmul.f32 %v222, %v226
  %v231 = vmul.f32 %v225, %v226
  %v232 = vsub.f32 %v194, %v227
  %v233 = vsub.f32 %v199, %v228
  %v234 = vsub.f32 %v200, %v229
  %v235 = vsub.f32 %v201, %v230
  %v236 = vsub.f32 %v202, %v231
  %v237 = vmul.f32 %v232, %v232
  %v238 = vmul.f32 %v233, %v233
  %v239 = vmul.f32 %v234, %v234
  %v240 = vmul.f32 %v235, %v235
  %v241 = vmul.f32 %v236, %v236
  %v242 = vsel %vm210, %v237, 0.0
  %243 = vadd.xlane.f32.xlu0 %v242
  %v244 = vpop.xlane.xlu0 %243
  %v245 = vsel %vm210, %v238, 0.0
  %246 = vadd.xlane.f32.xlu0 %v245
  %v247 = vpop.xlane.xlu0 %246
  %v248 = vsel %vm210, %v239, 0.0
  %249 = vadd.xlane.f32.xlu0 %v248
  %v250 = vpop.xlane.xlu0 %249
  %v251 = vsel %vm210, %v240, 0.0
  %252 = vadd.xlane.f32.xlu0 %v251
  %v253 = vpop.xlane.xlu0 %252
  %v254 = vsel %vm210, %v241, 0.0
  %255 = vadd.xlane.f32.xlu0 %v254
  %v256 = vpop.xlane.xlu0 %255
  %v257 = vmul.f32 %v244, %v226
  %v258 = vmul.f32 %v247, %v226
  %v259 = vmul.f32 %v250, %v226
  %v260 = vmul.f32 %v253, %v226
  %v261 = vmul.f32 %v256, %v226
  %v262 = vadd.f32 %v257, 1e-05
  %v263 = vadd.f32 %v258, 1e-05
  %v264 = vadd.f32 %v259, 1e-05
  %v265 = vadd.f32 %v260, 1e-05
  %v266 = vadd.f32 %v261, 1e-05
  %v267 = vrsqrt.pop %v262
  %v268 = vrsqrt.pop %v263
  %v269 = vrsqrt.pop %v264
  %v270 = vrsqrt.pop %v265
  %v271 = vrsqrt.pop %v266
  %v272 = vmul.f32 %v232, %v267
  %v273 = vmul.f32 %v233, %v268
  %v274 = vmul.f32 %v234, %v269
  %v275 = vmul.f32 %v235, %v270
  %v276 = vmul.f32 %v236, %v271
  %v278 = vlaneseq
  %v279 = vshrl.u32 %v278, 7
  %v280 = vsub.s32 0, %v279
  %v281 = vrot.slane %v208, %v280
  %v283 = vmul.f32 %v272, %v281
  %v284 = vmul.f32 %v273, %v281
  %v285 = vmul.f32 %v274, %v281
  %v286 = vmul.f32 %v275, %v281
  %v287 = vmul.f32 %v276, %v281
  %v289 = vlaneseq
  %v290 = vshrl.u32 %v289, 7
  %v291 = vsub.s32 0, %v290
  %v292 = vrot.slane %v209, %v291
  %v294 = vadd.f32 %v283, %v292
  %v295 = vadd.f32 %v284, %v292
  %v296 = vadd.f32 %v285, %v292
  %v297 = vadd.f32 %v286, %v292
  %v298 = vadd.f32 %v287, %v292
  %v299 = vld [vmem:[%s7] sm:$0xff]
  %v300 = vld [vmem:[%s7 + $0x8] sm:$0xff]
  %v301 = vld [vmem:[%s7 + $0x10] sm:$0xff]
  %v302 = vld [vmem:[%s7 + $0x18] sm:$0xff]
  %v304 = vsel %vm210, %v294, 0
  %v307 = vsel %vm210, %v295, 0
  %v310 = vsel %vm210, %v296, 0
  %v313 = vsel %vm210, %v297, 0
  %v316 = vsel %vm210, %v298, 0
  %318 = vmatprep.subr.mxu0 0.0
  %319 = vmatpush1.msra.mxu0 %v299
  %320 = vmatprep.subr.mxu0 0.0
  %321 = vmatpush1.msra.mxu0 %v300
  %322 = vmatprep.subr.mxu0 0.0
  %323 = vmatpush1.msra.mxu0 %v301
  %324 = vmatprep.subr.mxu0 0.0
  %325 = vmatpush1.msra.mxu0 %v302
  %326 = vmatprep.subr.mxu0 0.0
  %327 = vmatpush1.msra.mxu0 0.0
  %328 = vmatprep.subr.mxu0 0.0
  %329 = vmatpush1.msra.mxu0 0.0
  %330 = vmatprep.subr.mxu0 0.0
  %331 = vmatpush1.msra.mxu0 0.0
  %332 = vmatprep.subr.mxu0 0.0
  %333 = vmatpush1.msra.mxu0 0.0
  %334 = vmatprep.subr.mxu0 0.0
  %335 = vmatpush1.msra.mxu0 0.0
  %336 = vmatprep.subr.mxu0 0.0
  %337 = vmatpush1.msra.mxu0 0.0
  %338 = vmatprep.subr.mxu0 0.0
  %339 = vmatpush1.msra.mxu0 0.0
  %340 = vmatprep.subr.mxu0 0.0
  %341 = vmatpush1.msra.mxu0 0.0
  %342 = vmatprep.subr.mxu0 0.0
  %343 = vmatpush1.msra.mxu0 0.0
  %344 = vmatprep.subr.mxu0 0.0
  %345 = vmatpush1.msra.mxu0 0.0
  %346 = vmatprep.subr.mxu0 0.0
  %347 = vmatpush1.msra.mxu0 0.0
  %348 = vmatprep.subr.mxu0 0.0
  %349 = vmatpush1.msra.mxu0 0.0
  %350 = vmatprep.subr.mxu0 0.0
  %351 = vmatpush1.msra.mxu0 0.0
  %352 = vmatprep.subr.mxu0 0.0
  %353 = vmatpush1.msra.mxu0 0.0
  %354 = vmatprep.subr.mxu0 0.0
  %355 = vmatpush1.msra.mxu0 0.0
  %356 = vmatprep.subr.mxu0 0.0
  %357 = vmatpush1.msra.mxu0 0.0
  %358 = vmatprep.subr.mxu0 0.0
  %359 = vmatpush1.msra.mxu0 0.0
  %360 = vmatprep.subr.mxu0 0.0
  %361 = vmatpush1.msra.mxu0 0.0
  %362 = vmatprep.subr.mxu0 0.0
  %363 = vmatpush1.msra.mxu0 0.0
  %364 = vmatprep.subr.mxu0 0.0
  %365 = vmatpush1.msra.mxu0 0.0
  %366 = vmatprep.subr.mxu0 0.0
  %367 = vmatpush1.msra.mxu0 0.0
  %368 = vmatprep.subr.mxu0 0.0
  %369 = vmatpush1.msra.mxu0 0.0
  %370 = vmatprep.subr.mxu0 0.0
  %371 = vmatpush1.msra.mxu0 0.0
  %372 = vmatprep.subr.mxu0 0.0
  %373 = vmatpush1.msra.mxu0 0.0
  %374 = vmatprep.subr.mxu0 0.0
  %375 = vmatpush1.msra.mxu0 0.0
  %376 = vmatprep.subr.mxu0 0.0
  %377 = vmatpush1.msra.mxu0 0.0
  %378 = vmatprep.subr.mxu0 0.0
  %379 = vmatpush1.msra.mxu0 0.0
  %380 = vmatprep.subr.mxu0 0.0
  %381 = vmatpush1.msra.mxu0 0.0
  %382 = vmatprep.mubr.f32.mxu0 0.0
  %383 = vmatmul.mubr.f32.gmra.mrb[0].mxu0 %v304
  %v384 = vpop.f32.mrb[0].mxu0
  %v385 = vadd.f32 0.0, %v384
  %v386 = vpop.f32.mrb[0].mxu0
  %387 = vmatprep.mubr.f32.mxu0 0.0
  %388 = vmatmul.mubr.f32.gmra.mrb[0].mxu0 %v307
  %v389 = vpop.f32.mrb[0].mxu0
  %v390 = vadd.f32 0.0, %v389
  %v391 = vpop.f32.mrb[0].mxu0
  %392 = vmatprep.mubr.f32.mxu0 0.0
  %393 = vmatmul.mubr.f32.gmra.mrb[0].mxu0 %v310
  %v394 = vpop.f32.mrb[0].mxu0
  %v395 = vadd.f32 0.0, %v394
  %v396 = vpop.f32.mrb[0].mxu0
  %397 = vmatprep.mubr.f32.mxu0 0.0
  %398 = vmatmul.mubr.f32.gmra.mrb[0].mxu0 %v313
  %v399 = vpop.f32.mrb[0].mxu0
  %v400 = vadd.f32 0.0, %v399
  %v401 = vpop.f32.mrb[0].mxu0
  %402 = vmatprep.mubr.f32.mxu0 0.0
  %403 = vmatmul.mubr.f32.gmra.mrb[0].mxu0 %v316
  %v404 = vpop.f32.mrb[0].mxu0
  %v405 = vadd.f32 0.0, %v404
  %v406 = vpop.f32.mrb[0].mxu0
  %407 = vdwg.mxu0
  %v408 = vmul.f32 %v385, 0.25
  %v409 = vmul.f32 %v390, 0.25
  %v410 = vmul.f32 %v395, 0.25
  %v411 = vmul.f32 %v400, 0.25
  %v412 = vmul.f32 %v405, 0.25
  %418 = vrot.lane.b32.xlu0 %v385, 96
  %v419 = vpop.permute.xlu0 %418
  %420 = vrot.lane.b32.xlu0 %v390, 96
  %v421 = vpop.permute.xlu0 %420
  %422 = vrot.lane.b32.xlu0 %v395, 96
  %v423 = vpop.permute.xlu0 %422
  %424 = vrot.lane.b32.xlu0 %v400, 96
  %v425 = vpop.permute.xlu0 %424
  %426 = vrot.lane.b32.xlu0 %v405, 96
  %v427 = vpop.permute.xlu0 %426
  %vm428 = vcmask 130048
  %v430 = vsel %vm428, %v408, 0
  %v433 = vsel %vm428, %v409, 0
  %v436 = vsel %vm428, %v410, 0
  %v439 = vsel %vm428, %v411, 0
  %v442 = vsel %vm428, %v412, 0
  %v444 = vsel %vm428, %v419, 0
  %v446 = vsel %vm428, %v421, 0
  %v448 = vsel %vm428, %v423, 0
  %v450 = vsel %vm428, %v425, 0
  %v452 = vsel %vm428, %v427, 0
  %454 = vmatprep.subr.mxu0 0.0
  %455 = vmatpush1.xpose.msra.mxu0 %v444
  %456 = vmatprep.subr.mxu0 0.0
  %457 = vmatpush1.xpose.msra.mxu0 %v446
  %458 = vmatprep.subr.mxu0 0.0
  %459 = vmatpush1.xpose.msra.mxu0 %v448
  %460 = vmatprep.subr.mxu0 0.0
  %461 = vmatpush1.xpose.msra.mxu0 %v450
  %462 = vmatprep.subr.mxu0 0.0
  %463 = vmatpush1.xpose.msra.mxu0 %v452
  %464 = vmatprep.subr.mxu0 0.0
  %465 = vmatpush1.xpose.msra.mxu0 0.0
  %466 = vmatprep.subr.mxu0 0.0
  %467 = vmatpush1.xpose.msra.mxu0 0.0
  %468 = vmatprep.subr.mxu0 0.0
  %469 = vmatpush1.xpose.msra.mxu0 0.0
  %470 = vmatprep.subr.mxu0 0.0
  %471 = vmatpush1.xpose.msra.mxu0 0.0
  %472 = vmatprep.subr.mxu0 0.0
  %473 = vmatpush1.xpose.msra.mxu0 0.0
  %474 = vmatprep.subr.mxu0 0.0
  %475 = vmatpush1.xpose.msra.mxu0 0.0
  %476 = vmatprep.subr.mxu0 0.0
  %477 = vmatpush1.xpose.msra.mxu0 0.0
  %478 = vmatprep.subr.mxu0 0.0
  %479 = vmatpush1.xpose.msra.mxu0 0.0
  %480 = vmatprep.subr.mxu0 0.0
  %481 = vmatpush1.xpose.msra.mxu0 0.0
  %482 = vmatprep.subr.mxu0 0.0
  %483 = vmatpush1.xpose.msra.mxu0 0.0
  %484 = vmatprep.subr.mxu0 0.0
  %485 = vmatpush1.xpose.msra.mxu0 0.0
  %486 = vmatprep.subr.mxu0 0.0
  %487 = vmatpush1.xpose.msra.mxu0 0.0
  %488 = vmatprep.subr.mxu0 0.0
  %489 = vmatpush1.xpose.msra.mxu0 0.0
  %490 = vmatprep.subr.mxu0 0.0
  %491 = vmatpush1.xpose.msra.mxu0 0.0
  %492 = vmatprep.subr.mxu0 0.0
  %493 = vmatpush1.xpose.msra.mxu0 0.0
  %494 = vmatprep.subr.mxu0 0.0
  %495 = vmatpush1.xpose.msra.mxu0 0.0
  %496 = vmatprep.subr.mxu0 0.0
  %497 = vmatpush1.xpose.msra.mxu0 0.0
  %498 = vmatprep.subr.mxu0 0.0
  %499 = vmatpush1.xpose.msra.mxu0 0.0
  %500 = vmatprep.subr.mxu0 0.0
  %501 = vmatpush1.xpose.msra.mxu0 0.0
  %502 = vmatprep.subr.mxu0 0.0
  %503 = vmatpush1.xpose.msra.mxu0 0.0
  %504 = vmatprep.subr.mxu0 0.0
  %505 = vmatpush1.xpose.msra.mxu0 0.0
  %506 = vmatprep.subr.mxu0 0.0
  %507 = vmatpush1.xpose.msra.mxu0 0.0
  %508 = vmatprep.subr.mxu0 0.0
  %509 = vmatpush1.xpose.msra.mxu0 0.0
  %510 = vmatprep.subr.mxu0 0.0
  %511 = vmatpush1.xpose.msra.mxu0 0.0
  %512 = vmatprep.subr.mxu0 0.0
  %513 = vmatpush1.xpose.msra.mxu0 0.0
  %514 = vmatprep.subr.mxu0 0.0
  %515 = vmatpush1.xpose.msra.mxu0 0.0
  %516 = vmatprep.subr.mxu0 0.0
  %517 = vmatpush1.xpose.msra.mxu0 0.0
  %518 = vmatprep.mubr.f32.mxu0 0.0
  %519 = vmatmul.mubr.f32.gmra.mrb[0].mxu0 %v430
  %v520 = vpop.f32.mrb[0].mxu0
  %v521 = vadd.f32 %v203, %v520
  %v522 = vpop.f32.mrb[0].mxu0
  %523 = vmatprep.mubr.f32.mxu0 0.0
  %524 = vmatmul.mubr.f32.gmra.mrb[0].mxu0 %v433
  %v525 = vpop.f32.mrb[0].mxu0
  %v526 = vadd.f32 %v204, %v525
  %v527 = vpop.f32.mrb[0].mxu0
  %528 = vmatprep.mubr.f32.mxu0 0.0
  %529 = vmatmul.mubr.f32.gmra.mrb[0].mxu0 %v436
  %v530 = vpop.f32.mrb[0].mxu0
  %v531 = vadd.f32 %v205, %v530
  %v532 = vpop.f32.mrb[0].mxu0
  %533 = vmatprep.mubr.f32.mxu0 0.0
  %534 = vmatmul.mubr.f32.gmra.mrb[0].mxu0 %v439
  %v535 = vpop.f32.mrb[0].mxu0
  %v536 = vadd.f32 %v206, %v535
  %v537 = vpop.f32.mrb[0].mxu0
  %538 = vmatprep.mubr.f32.mxu0 0.0
  %539 = vmatmul.mubr.f32.gmra.mrb[0].mxu0 %v442
  %v540 = vpop.f32.mrb[0].mxu0
  %v541 = vadd.f32 %v207, %v540
  %v542 = vpop.f32.mrb[0].mxu0
  %543 = vdwg.mxu0
  %vm544 = vcmask 326656
  %v545 = vsel %vm544, %v521, -inf
  %546 = vmax.xlane.f32.xlu0 %v545
  %v547 = vpop.xlane.xlu0 %546
  %v548 = vsel %vm544, %v526, -inf
  %549 = vmax.xlane.f32.xlu0 %v548
  %v550 = vpop.xlane.xlu0 %549
  %v551 = vsel %vm544, %v531, -inf
  %552 = vmax.xlane.f32.xlu0 %v551
  %v553 = vpop.xlane.xlu0 %552
  %v554 = vsel %vm544, %v536, -inf
  %555 = vmax.xlane.f32.xlu0 %v554
  %v556 = vpop.xlane.xlu0 %555
  %v557 = vsel %vm544, %v541, -inf
  %558 = vmax.xlane.f32.xlu0 %v557
  %v559 = vpop.xlane.xlu0 %558
  %v560 = vsub.f32 %v521, %v547
  %v561 = vsub.f32 %v526, %v550
  %v562 = vsub.f32 %v531, %v553
  %v563 = vsub.f32 %v536, %v556
  %v564 = vsub.f32 %v541, %v559
  %v565 = vmul.f32 %v560, 1.442695
  %v566 = vpow.pop %v565
  %v567 = vmul.f32 %v561, 1.442695
  %v568 = vpow.pop %v567
  %v569 = vmul.f32 %v562, 1.442695
  %v570 = vpow.pop %v569
  %v571 = vmul.f32 %v563, 1.442695
  %v572 = vpow.pop %v571
  %v573 = vmul.f32 %v564, 1.442695
  %v574 = vpow.pop %v573
  %v575 = vsel %vm544, %v566, 0.0
  %576 = vadd.xlane.f32.xlu0 %v575
  %v577 = vpop.xlane.xlu0 %576
  %v578 = vsel %vm544, %v568, 0.0
  %579 = vadd.xlane.f32.xlu0 %v578
  %v580 = vpop.xlane.xlu0 %579
  %v581 = vsel %vm544, %v570, 0.0
  %582 = vadd.xlane.f32.xlu0 %v581
  %v583 = vpop.xlane.xlu0 %582
  %v584 = vsel %vm544, %v572, 0.0
  %585 = vadd.xlane.f32.xlu0 %v584
  %v586 = vpop.xlane.xlu0 %585
  %v587 = vsel %vm544, %v574, 0.0
  %588 = vadd.xlane.f32.xlu0 %v587
  %v589 = vpop.xlane.xlu0 %588
  %v590 = vrcp.pop %v577
  %v591 = vrcp.pop %v580
  %v592 = vrcp.pop %v583
  %v593 = vrcp.pop %v586
  %v594 = vrcp.pop %v589
  %v595 = vmul.f32 %v566, %v590
  %v596 = vmul.f32 %v568, %v591
  %v597 = vmul.f32 %v570, %v592
  %v598 = vmul.f32 %v572, %v593
  %v599 = vmul.f32 %v574, %v594
  %600 = vrot.lane.b32.xlu0 %v385, 64
  %v601 = vpop.permute.xlu0 %600
  %602 = vrot.lane.b32.xlu0 %v390, 64
  %v603 = vpop.permute.xlu0 %602
  %604 = vrot.lane.b32.xlu0 %v395, 64
  %v605 = vpop.permute.xlu0 %604
  %606 = vrot.lane.b32.xlu0 %v400, 64
  %v607 = vpop.permute.xlu0 %606
  %608 = vrot.lane.b32.xlu0 %v405, 64
  %v609 = vpop.permute.xlu0 %608
  %v616 = vsel %vm544, %v595, 0
  %v619 = vsel %vm544, %v596, 0
  %v622 = vsel %vm544, %v597, 0
  %v625 = vsel %vm544, %v598, 0
  %v628 = vsel %vm544, %v599, 0
  %630 = vmatprep.subr.mxu0 0.0
  %631 = vmatpush1.msra.mxu0 %v601
  %632 = vmatprep.subr.mxu0 0.0
  %633 = vmatpush1.msra.mxu0 %v603
  %634 = vmatprep.subr.mxu0 0.0
  %635 = vmatpush1.msra.mxu0 %v605
  %636 = vmatprep.subr.mxu0 0.0
  %637 = vmatpush1.msra.mxu0 %v607
  %638 = vmatprep.subr.mxu0 0.0
  %639 = vmatpush1.msra.mxu0 %v609
  %640 = vmatprep.subr.mxu0 0.0
  %641 = vmatpush1.msra.mxu0 0.0
  %642 = vmatprep.subr.mxu0 0.0
  %643 = vmatpush1.msra.mxu0 0.0
  %644 = vmatprep.subr.mxu0 0.0
  %645 = vmatpush1.msra.mxu0 0.0
  %646 = vmatprep.subr.mxu0 0.0
  %647 = vmatpush1.msra.mxu0 0.0
  %648 = vmatprep.subr.mxu0 0.0
  %649 = vmatpush1.msra.mxu0 0.0
  %650 = vmatprep.subr.mxu0 0.0
  %651 = vmatpush1.msra.mxu0 0.0
  %652 = vmatprep.subr.mxu0 0.0
  %653 = vmatpush1.msra.mxu0 0.0
  %654 = vmatprep.subr.mxu0 0.0
  %655 = vmatpush1.msra.mxu0 0.0
  %656 = vmatprep.subr.mxu0 0.0
  %657 = vmatpush1.msra.mxu0 0.0
  %658 = vmatprep.subr.mxu0 0.0
  %659 = vmatpush1.msra.mxu0 0.0
  %660 = vmatprep.subr.mxu0 0.0
  %661 = vmatpush1.msra.mxu0 0.0
  %662 = vmatprep.subr.mxu0 0.0
  %663 = vmatpush1.msra.mxu0 0.0
  %664 = vmatprep.subr.mxu0 0.0
  %665 = vmatpush1.msra.mxu0 0.0
  %666 = vmatprep.subr.mxu0 0.0
  %667 = vmatpush1.msra.mxu0 0.0
  %668 = vmatprep.subr.mxu0 0.0
  %669 = vmatpush1.msra.mxu0 0.0
  %670 = vmatprep.subr.mxu0 0.0
  %671 = vmatpush1.msra.mxu0 0.0
  %672 = vmatprep.subr.mxu0 0.0
  %673 = vmatpush1.msra.mxu0 0.0
  %674 = vmatprep.subr.mxu0 0.0
  %675 = vmatpush1.msra.mxu0 0.0
  %676 = vmatprep.subr.mxu0 0.0
  %677 = vmatpush1.msra.mxu0 0.0
  %678 = vmatprep.subr.mxu0 0.0
  %679 = vmatpush1.msra.mxu0 0.0
  %680 = vmatprep.subr.mxu0 0.0
  %681 = vmatpush1.msra.mxu0 0.0
  %682 = vmatprep.subr.mxu0 0.0
  %683 = vmatpush1.msra.mxu0 0.0
  %684 = vmatprep.subr.mxu0 0.0
  %685 = vmatpush1.msra.mxu0 0.0
  %686 = vmatprep.subr.mxu0 0.0
  %687 = vmatpush1.msra.mxu0 0.0
  %688 = vmatprep.subr.mxu0 0.0
  %689 = vmatpush1.msra.mxu0 0.0
  %690 = vmatprep.subr.mxu0 0.0
  %691 = vmatpush1.msra.mxu0 0.0
  %692 = vmatprep.subr.mxu0 0.0
  %693 = vmatpush1.msra.mxu0 0.0
  %694 = vmatprep.mubr.f32.mxu0 0.0
  %695 = vmatmul.mubr.f32.gmra.mrb[0].mxu0 %v616
  %v696 = vpop.f32.mrb[0].mxu0
  %v697 = vadd.f32 0.0, %v696
  %v698 = vpop.f32.mrb[0].mxu0
  %699 = vmatprep.mubr.f32.mxu0 0.0
  %700 = vmatmul.mubr.f32.gmra.mrb[0].mxu0 %v619
  %v701 = vpop.f32.mrb[0].mxu0
  %v702 = vadd.f32 0.0, %v701
  %v703 = vpop.f32.mrb[0].mxu0
  %704 = vmatprep.mubr.f32.mxu0 0.0
  %705 = vmatmul.mubr.f32.gmra.mrb[0].mxu0 %v622
  %v706 = vpop.f32.mrb[0].mxu0
  %v707 = vadd.f32 0.0, %v706
  %v708 = vpop.f32.mrb[0].mxu0
  %709 = vmatprep.mubr.f32.mxu0 0.0
  %710 = vmatmul.mubr.f32.gmra.mrb[0].mxu0 %v625
  %v711 = vpop.f32.mrb[0].mxu0
  %v712 = vadd.f32 0.0, %v711
  %v713 = vpop.f32.mrb[0].mxu0
  %714 = vmatprep.mubr.f32.mxu0 0.0
  %715 = vmatmul.mubr.f32.gmra.mrb[0].mxu0 %v628
  %v716 = vpop.f32.mrb[0].mxu0
  %v717 = vadd.f32 0.0, %v716
  %v718 = vpop.f32.mrb[0].mxu0
  %719 = vdwg.mxu0
  %720 = vrot.lane.b32.xlu0 %v408, 112
  %v721 = vpop.permute.xlu0 %720
  %722 = vrot.lane.b32.xlu0 %v409, 112
  %v723 = vpop.permute.xlu0 %722
  %724 = vrot.lane.b32.xlu0 %v410, 112
  %v725 = vpop.permute.xlu0 %724
  %726 = vrot.lane.b32.xlu0 %v411, 112
  %v727 = vpop.permute.xlu0 %726
  %728 = vrot.lane.b32.xlu0 %v412, 112
  %v729 = vpop.permute.xlu0 %728
  %730 = vrot.lane.b32.xlu0 %v385, 80
  %v731 = vpop.permute.xlu0 %730
  %732 = vrot.lane.b32.xlu0 %v390, 80
  %v733 = vpop.permute.xlu0 %732
  %734 = vrot.lane.b32.xlu0 %v395, 80
  %v735 = vpop.permute.xlu0 %734
  %736 = vrot.lane.b32.xlu0 %v400, 80
  %v737 = vpop.permute.xlu0 %736
  %738 = vrot.lane.b32.xlu0 %v405, 80
  %v739 = vpop.permute.xlu0 %738
  %v740 = vsel %vm428, %v721, 0
  %v742 = vsel %vm428, %v723, 0
  %v744 = vsel %vm428, %v725, 0
  %v746 = vsel %vm428, %v727, 0
  %v748 = vsel %vm428, %v729, 0
  %v750 = vsel %vm428, %v731, 0
  %v752 = vsel %vm428, %v733, 0
  %v754 = vsel %vm428, %v735, 0
  %v756 = vsel %vm428, %v737, 0
  %v758 = vsel %vm428, %v739, 0
  %760 = vmatprep.subr.mxu0 0.0
  %761 = vmatpush1.xpose.msra.mxu0 %v750
  %762 = vmatprep.subr.mxu0 0.0
  %763 = vmatpush1.xpose.msra.mxu0 %v752
  %764 = vmatprep.subr.mxu0 0.0
  %765 = vmatpush1.xpose.msra.mxu0 %v754
  %766 = vmatprep.subr.mxu0 0.0
  %767 = vmatpush1.xpose.msra.mxu0 %v756
  %768 = vmatprep.subr.mxu0 0.0
  %769 = vmatpush1.xpose.msra.mxu0 %v758
  %770 = vmatprep.subr.mxu0 0.0
  %771 = vmatpush1.xpose.msra.mxu0 0.0
  %772 = vmatprep.subr.mxu0 0.0
  %773 = vmatpush1.xpose.msra.mxu0 0.0
  %774 = vmatprep.subr.mxu0 0.0
  %775 = vmatpush1.xpose.msra.mxu0 0.0
  %776 = vmatprep.subr.mxu0 0.0
  %777 = vmatpush1.xpose.msra.mxu0 0.0
  %778 = vmatprep.subr.mxu0 0.0
  %779 = vmatpush1.xpose.msra.mxu0 0.0
  %780 = vmatprep.subr.mxu0 0.0
  %781 = vmatpush1.xpose.msra.mxu0 0.0
  %782 = vmatprep.subr.mxu0 0.0
  %783 = vmatpush1.xpose.msra.mxu0 0.0
  %784 = vmatprep.subr.mxu0 0.0
  %785 = vmatpush1.xpose.msra.mxu0 0.0
  %786 = vmatprep.subr.mxu0 0.0
  %787 = vmatpush1.xpose.msra.mxu0 0.0
  %788 = vmatprep.subr.mxu0 0.0
  %789 = vmatpush1.xpose.msra.mxu0 0.0
  %790 = vmatprep.subr.mxu0 0.0
  %791 = vmatpush1.xpose.msra.mxu0 0.0
  %792 = vmatprep.subr.mxu0 0.0
  %793 = vmatpush1.xpose.msra.mxu0 0.0
  %794 = vmatprep.subr.mxu0 0.0
  %795 = vmatpush1.xpose.msra.mxu0 0.0
  %796 = vmatprep.subr.mxu0 0.0
  %797 = vmatpush1.xpose.msra.mxu0 0.0
  %798 = vmatprep.subr.mxu0 0.0
  %799 = vmatpush1.xpose.msra.mxu0 0.0
  %800 = vmatprep.subr.mxu0 0.0
  %801 = vmatpush1.xpose.msra.mxu0 0.0
  %802 = vmatprep.subr.mxu0 0.0
  %803 = vmatpush1.xpose.msra.mxu0 0.0
  %804 = vmatprep.subr.mxu0 0.0
  %805 = vmatpush1.xpose.msra.mxu0 0.0
  %806 = vmatprep.subr.mxu0 0.0
  %807 = vmatpush1.xpose.msra.mxu0 0.0
  %808 = vmatprep.subr.mxu0 0.0
  %809 = vmatpush1.xpose.msra.mxu0 0.0
  %810 = vmatprep.subr.mxu0 0.0
  %811 = vmatpush1.xpose.msra.mxu0 0.0
  %812 = vmatprep.subr.mxu0 0.0
  %813 = vmatpush1.xpose.msra.mxu0 0.0
  %814 = vmatprep.subr.mxu0 0.0
  %815 = vmatpush1.xpose.msra.mxu0 0.0
  %816 = vmatprep.subr.mxu0 0.0
  %817 = vmatpush1.xpose.msra.mxu0 0.0
  %818 = vmatprep.subr.mxu0 0.0
  %819 = vmatpush1.xpose.msra.mxu0 0.0
  %820 = vmatprep.subr.mxu0 0.0
  %821 = vmatpush1.xpose.msra.mxu0 0.0
  %822 = vmatprep.subr.mxu0 0.0
  %823 = vmatpush1.xpose.msra.mxu0 0.0
  %824 = vmatprep.mubr.f32.mxu0 0.0
  %825 = vmatmul.mubr.f32.gmra.mrb[0].mxu0 %v740
  %v826 = vpop.f32.mrb[0].mxu0
  %v827 = vadd.f32 %v203, %v826
  %v828 = vpop.f32.mrb[0].mxu0
  %829 = vmatprep.mubr.f32.mxu0 0.0
  %830 = vmatmul.mubr.f32.gmra.mrb[0].mxu0 %v742
  %v831 = vpop.f32.mrb[0].mxu0
  %v832 = vadd.f32 %v204, %v831
  %v833 = vpop.f32.mrb[0].mxu0
  %834 = vmatprep.mubr.f32.mxu0 0.0
  %835 = vmatmul.mubr.f32.gmra.mrb[0].mxu0 %v744
  %v836 = vpop.f32.mrb[0].mxu0
  %v837 = vadd.f32 %v205, %v836
  %v838 = vpop.f32.mrb[0].mxu0
  %839 = vmatprep.mubr.f32.mxu0 0.0
  %840 = vmatmul.mubr.f32.gmra.mrb[0].mxu0 %v746
  %v841 = vpop.f32.mrb[0].mxu0
  %v842 = vadd.f32 %v206, %v841
  %v843 = vpop.f32.mrb[0].mxu0
  %844 = vmatprep.mubr.f32.mxu0 0.0
  %845 = vmatmul.mubr.f32.gmra.mrb[0].mxu0 %v748
  %v846 = vpop.f32.mrb[0].mxu0
  %v847 = vadd.f32 %v207, %v846
  %v848 = vpop.f32.mrb[0].mxu0
  %849 = vdwg.mxu0
  %v850 = vsel %vm544, %v827, -inf
  %851 = vmax.xlane.f32.xlu0 %v850
  %v852 = vpop.xlane.xlu0 %851
  %v853 = vsel %vm544, %v832, -inf
  %854 = vmax.xlane.f32.xlu0 %v853
  %v855 = vpop.xlane.xlu0 %854
  %v856 = vsel %vm544, %v837, -inf
  %857 = vmax.xlane.f32.xlu0 %v856
  %v858 = vpop.xlane.xlu0 %857
  %v859 = vsel %vm544, %v842, -inf
  %860 = vmax.xlane.f32.xlu0 %v859
  %v861 = vpop.xlane.xlu0 %860
  %v862 = vsel %vm544, %v847, -inf
  %863 = vmax.xlane.f32.xlu0 %v862
  %v864 = vpop.xlane.xlu0 %863
  %v865 = vsub.f32 %v827, %v852
  %v866 = vsub.f32 %v832, %v855
  %v867 = vsub.f32 %v837, %v858
  %v868 = vsub.f32 %v842, %v861
  %v869 = vsub.f32 %v847, %v864
  %v870 = vmul.f32 %v865, 1.442695
  %v871 = vpow.pop %v870
  %v872 = vmul.f32 %v866, 1.442695
  %v873 = vpow.pop %v872
  %v874 = vmul.f32 %v867, 1.442695
  %v875 = vpow.pop %v874
  %v876 = vmul.f32 %v868, 1.442695
  %v877 = vpow.pop %v876
  %v878 = vmul.f32 %v869, 1.442695
  %v879 = vpow.pop %v878
  %v880 = vsel %vm544, %v871, 0.0
  %881 = vadd.xlane.f32.xlu0 %v880
  %v882 = vpop.xlane.xlu0 %881
  %v883 = vsel %vm544, %v873, 0.0
  %884 = vadd.xlane.f32.xlu0 %v883
  %v885 = vpop.xlane.xlu0 %884
  %v886 = vsel %vm544, %v875, 0.0
  %887 = vadd.xlane.f32.xlu0 %v886
  %v888 = vpop.xlane.xlu0 %887
  %v889 = vsel %vm544, %v877, 0.0
  %890 = vadd.xlane.f32.xlu0 %v889
  %v891 = vpop.xlane.xlu0 %890
  %v892 = vsel %vm544, %v879, 0.0
  %893 = vadd.xlane.f32.xlu0 %v892
  %v894 = vpop.xlane.xlu0 %893
  %v895 = vrcp.pop %v882
  %v896 = vrcp.pop %v885
  %v897 = vrcp.pop %v888
  %v898 = vrcp.pop %v891
  %v899 = vrcp.pop %v894
  %v900 = vmul.f32 %v871, %v895
  %v901 = vmul.f32 %v873, %v896
  %v902 = vmul.f32 %v875, %v897
  %v903 = vmul.f32 %v877, %v898
  %v904 = vmul.f32 %v879, %v899
  %905 = vrot.lane.b32.xlu0 %v385, 48
  %v906 = vpop.permute.xlu0 %905
  %907 = vrot.lane.b32.xlu0 %v390, 48
  %v908 = vpop.permute.xlu0 %907
  %909 = vrot.lane.b32.xlu0 %v395, 48
  %v910 = vpop.permute.xlu0 %909
  %911 = vrot.lane.b32.xlu0 %v400, 48
  %v912 = vpop.permute.xlu0 %911
  %913 = vrot.lane.b32.xlu0 %v405, 48
  %v914 = vpop.permute.xlu0 %913
  %v921 = vsel %vm544, %v900, 0
  %v924 = vsel %vm544, %v901, 0
  %v927 = vsel %vm544, %v902, 0
  %v930 = vsel %vm544, %v903, 0
  %v933 = vsel %vm544, %v904, 0
  %935 = vmatprep.subr.mxu0 0.0
  %936 = vmatpush1.msra.mxu0 %v906
  %937 = vmatprep.subr.mxu0 0.0
  %938 = vmatpush1.msra.mxu0 %v908
  %939 = vmatprep.subr.mxu0 0.0
  %940 = vmatpush1.msra.mxu0 %v910
  %941 = vmatprep.subr.mxu0 0.0
  %942 = vmatpush1.msra.mxu0 %v912
  %943 = vmatprep.subr.mxu0 0.0
  %944 = vmatpush1.msra.mxu0 %v914
  %945 = vmatprep.subr.mxu0 0.0
  %946 = vmatpush1.msra.mxu0 0.0
  %947 = vmatprep.subr.mxu0 0.0
  %948 = vmatpush1.msra.mxu0 0.0
  %949 = vmatprep.subr.mxu0 0.0
  %950 = vmatpush1.msra.mxu0 0.0
  %951 = vmatprep.subr.mxu0 0.0
  %952 = vmatpush1.msra.mxu0 0.0
  %953 = vmatprep.subr.mxu0 0.0
  %954 = vmatpush1.msra.mxu0 0.0
  %955 = vmatprep.subr.mxu0 0.0
  %956 = vmatpush1.msra.mxu0 0.0
  %957 = vmatprep.subr.mxu0 0.0
  %958 = vmatpush1.msra.mxu0 0.0
  %959 = vmatprep.subr.mxu0 0.0
  %960 = vmatpush1.msra.mxu0 0.0
  %961 = vmatprep.subr.mxu0 0.0
  %962 = vmatpush1.msra.mxu0 0.0
  %963 = vmatprep.subr.mxu0 0.0
  %964 = vmatpush1.msra.mxu0 0.0
  %965 = vmatprep.subr.mxu0 0.0
  %966 = vmatpush1.msra.mxu0 0.0
  %967 = vmatprep.subr.mxu0 0.0
  %968 = vmatpush1.msra.mxu0 0.0
  %969 = vmatprep.subr.mxu0 0.0
  %970 = vmatpush1.msra.mxu0 0.0
  %971 = vmatprep.subr.mxu0 0.0
  %972 = vmatpush1.msra.mxu0 0.0
  %973 = vmatprep.subr.mxu0 0.0
  %974 = vmatpush1.msra.mxu0 0.0
  %975 = vmatprep.subr.mxu0 0.0
  %976 = vmatpush1.msra.mxu0 0.0
  %977 = vmatprep.subr.mxu0 0.0
  %978 = vmatpush1.msra.mxu0 0.0
  %979 = vmatprep.subr.mxu0 0.0
  %980 = vmatpush1.msra.mxu0 0.0
  %981 = vmatprep.subr.mxu0 0.0
  %982 = vmatpush1.msra.mxu0 0.0
  %983 = vmatprep.subr.mxu0 0.0
  %984 = vmatpush1.msra.mxu0 0.0
  %985 = vmatprep.subr.mxu0 0.0
  %986 = vmatpush1.msra.mxu0 0.0
  %987 = vmatprep.subr.mxu0 0.0
  %988 = vmatpush1.msra.mxu0 0.0
  %989 = vmatprep.subr.mxu0 0.0
  %990 = vmatpush1.msra.mxu0 0.0
  %991 = vmatprep.subr.mxu0 0.0
  %992 = vmatpush1.msra.mxu0 0.0
  %993 = vmatprep.subr.mxu0 0.0
  %994 = vmatpush1.msra.mxu0 0.0
  %995 = vmatprep.subr.mxu0 0.0
  %996 = vmatpush1.msra.mxu0 0.0
  %997 = vmatprep.subr.mxu0 0.0
  %998 = vmatpush1.msra.mxu0 0.0
  %999 = vmatprep.mubr.f32.mxu0 0.0
  %1000 = vmatmul.mubr.f32.gmra.mrb[0].mxu0 %v921
  %v1001 = vpop.f32.mrb[0].mxu0
  %v1002 = vadd.f32 0.0, %v1001
  %v1003 = vpop.f32.mrb[0].mxu0
  %1004 = vmatprep.mubr.f32.mxu0 0.0
  %1005 = vmatmul.mubr.f32.gmra.mrb[0].mxu0 %v924
  %v1006 = vpop.f32.mrb[0].mxu0
  %v1007 = vadd.f32 0.0, %v1006
  %v1008 = vpop.f32.mrb[0].mxu0
  %1009 = vmatprep.mubr.f32.mxu0 0.0
  %1010 = vmatmul.mubr.f32.gmra.mrb[0].mxu0 %v927
  %v1011 = vpop.f32.mrb[0].mxu0
  %v1012 = vadd.f32 0.0, %v1011
  %v1013 = vpop.f32.mrb[0].mxu0
  %1014 = vmatprep.mubr.f32.mxu0 0.0
  %1015 = vmatmul.mubr.f32.gmra.mrb[0].mxu0 %v930
  %v1016 = vpop.f32.mrb[0].mxu0
  %v1017 = vadd.f32 0.0, %v1016
  %v1018 = vpop.f32.mrb[0].mxu0
  %1019 = vmatprep.mubr.f32.mxu0 0.0
  %1020 = vmatmul.mubr.f32.gmra.mrb[0].mxu0 %v933
  %v1021 = vpop.f32.mrb[0].mxu0
  %v1022 = vadd.f32 0.0, %v1021
  %v1023 = vpop.f32.mrb[0].mxu0
  %1024 = vdwg.mxu0
  %1030 = vrot.lane.b32.xlu0 %v1002, 16
  %v1031 = vpop.permute.xlu0 %1030
  %1032 = vrot.lane.b32.xlu0 %v1007, 16
  %v1033 = vpop.permute.xlu0 %1032
  %1034 = vrot.lane.b32.xlu0 %v1012, 16
  %v1035 = vpop.permute.xlu0 %1034
  %1036 = vrot.lane.b32.xlu0 %v1017, 16
  %v1037 = vpop.permute.xlu0 %1036
  %1038 = vrot.lane.b32.xlu0 %v1022, 16
  %v1039 = vpop.permute.xlu0 %1038
  %v1045 = vsel %vm428, %v697, %v1031
  %v1046 = vsel %vm428, %v702, %v1033
  %v1047 = vsel %vm428, %v707, %v1035
  %v1048 = vsel %vm428, %v712, %v1037
  %v1049 = vsel %vm428, %v717, %v1039
  %v1050 = vld [vmem:[%s8] sm:$0xff]
  %v1051 = vld [vmem:[%s8 + $0x8] sm:$0xff]
  %v1052 = vld [vmem:[%s8 + $0x10] sm:$0xff]
  %v1053 = vld [vmem:[%s8 + $0x18] sm:$0xff]
  %v1055 = vsel %vm210, %v1045, 0
  %v1058 = vsel %vm210, %v1046, 0
  %v1061 = vsel %vm210, %v1047, 0
  %v1064 = vsel %vm210, %v1048, 0
  %v1067 = vsel %vm210, %v1049, 0
  %1069 = vmatprep.subr.mxu0 0.0
  %1070 = vmatpush1.msra.mxu0 %v1050
  %1071 = vmatprep.subr.mxu0 0.0
  %1072 = vmatpush1.msra.mxu0 %v1051
  %1073 = vmatprep.subr.mxu0 0.0
  %1074 = vmatpush1.msra.mxu0 %v1052
  %1075 = vmatprep.subr.mxu0 0.0
  %1076 = vmatpush1.msra.mxu0 %v1053
  %1077 = vmatprep.subr.mxu0 0.0
  %1078 = vmatpush1.msra.mxu0 0.0
  %1079 = vmatprep.subr.mxu0 0.0
  %1080 = vmatpush1.msra.mxu0 0.0
  %1081 = vmatprep.subr.mxu0 0.0
  %1082 = vmatpush1.msra.mxu0 0.0
  %1083 = vmatprep.subr.mxu0 0.0
  %1084 = vmatpush1.msra.mxu0 0.0
  %1085 = vmatprep.subr.mxu0 0.0
  %1086 = vmatpush1.msra.mxu0 0.0
  %1087 = vmatprep.subr.mxu0 0.0
  %1088 = vmatpush1.msra.mxu0 0.0
  %1089 = vmatprep.subr.mxu0 0.0
  %1090 = vmatpush1.msra.mxu0 0.0
  %1091 = vmatprep.subr.mxu0 0.0
  %1092 = vmatpush1.msra.mxu0 0.0
  %1093 = vmatprep.subr.mxu0 0.0
  %1094 = vmatpush1.msra.mxu0 0.0
  %1095 = vmatprep.subr.mxu0 0.0
  %1096 = vmatpush1.msra.mxu0 0.0
  %1097 = vmatprep.subr.mxu0 0.0
  %1098 = vmatpush1.msra.mxu0 0.0
  %1099 = vmatprep.subr.mxu0 0.0
  %1100 = vmatpush1.msra.mxu0 0.0
  %1101 = vmatprep.subr.mxu0 0.0
  %1102 = vmatpush1.msra.mxu0 0.0
  %1103 = vmatprep.subr.mxu0 0.0
  %1104 = vmatpush1.msra.mxu0 0.0
  %1105 = vmatprep.subr.mxu0 0.0
  %1106 = vmatpush1.msra.mxu0 0.0
  %1107 = vmatprep.subr.mxu0 0.0
  %1108 = vmatpush1.msra.mxu0 0.0
  %1109 = vmatprep.subr.mxu0 0.0
  %1110 = vmatpush1.msra.mxu0 0.0
  %1111 = vmatprep.subr.mxu0 0.0
  %1112 = vmatpush1.msra.mxu0 0.0
  %1113 = vmatprep.subr.mxu0 0.0
  %1114 = vmatpush1.msra.mxu0 0.0
  %1115 = vmatprep.subr.mxu0 0.0
  %1116 = vmatpush1.msra.mxu0 0.0
  %1117 = vmatprep.subr.mxu0 0.0
  %1118 = vmatpush1.msra.mxu0 0.0
  %1119 = vmatprep.subr.mxu0 0.0
  %1120 = vmatpush1.msra.mxu0 0.0
  %1121 = vmatprep.subr.mxu0 0.0
  %1122 = vmatpush1.msra.mxu0 0.0
  %1123 = vmatprep.subr.mxu0 0.0
  %1124 = vmatpush1.msra.mxu0 0.0
  %1125 = vmatprep.subr.mxu0 0.0
  %1126 = vmatpush1.msra.mxu0 0.0
  %1127 = vmatprep.subr.mxu0 0.0
  %1128 = vmatpush1.msra.mxu0 0.0
  %1129 = vmatprep.subr.mxu0 0.0
  %1130 = vmatpush1.msra.mxu0 0.0
  %1131 = vmatprep.subr.mxu0 0.0
  %1132 = vmatpush1.msra.mxu0 0.0
  %1133 = vmatprep.mubr.f32.mxu0 0.0
  %1134 = vmatmul.mubr.f32.gmra.mrb[0].mxu0 %v1055
  %v1135 = vpop.f32.mrb[0].mxu0
  %v1136 = vadd.f32 0.0, %v1135
  %v1137 = vpop.f32.mrb[0].mxu0
  %1138 = vmatprep.mubr.f32.mxu0 0.0
  %1139 = vmatmul.mubr.f32.gmra.mrb[0].mxu0 %v1058
  %v1140 = vpop.f32.mrb[0].mxu0
  %v1141 = vadd.f32 0.0, %v1140
  %v1142 = vpop.f32.mrb[0].mxu0
  %1143 = vmatprep.mubr.f32.mxu0 0.0
  %1144 = vmatmul.mubr.f32.gmra.mrb[0].mxu0 %v1061
  %v1145 = vpop.f32.mrb[0].mxu0
  %v1146 = vadd.f32 0.0, %v1145
  %v1147 = vpop.f32.mrb[0].mxu0
  %1148 = vmatprep.mubr.f32.mxu0 0.0
  %1149 = vmatmul.mubr.f32.gmra.mrb[0].mxu0 %v1064
  %v1150 = vpop.f32.mrb[0].mxu0
  %v1151 = vadd.f32 0.0, %v1150
  %v1152 = vpop.f32.mrb[0].mxu0
  %1153 = vmatprep.mubr.f32.mxu0 0.0
  %1154 = vmatmul.mubr.f32.gmra.mrb[0].mxu0 %v1067
  %v1155 = vpop.f32.mrb[0].mxu0
  %v1156 = vadd.f32 0.0, %v1155
  %v1157 = vpop.f32.mrb[0].mxu0
  %1158 = vdwg.mxu0
  %v1159 = vadd.f32 %v194, %v1136
  %v1160 = vadd.f32 %v199, %v1141
  %v1161 = vadd.f32 %v200, %v1146
  %v1162 = vadd.f32 %v201, %v1151
  %v1163 = vadd.f32 %v202, %v1156
  %v1164 = vld [vmem:[%s9] sm:$0x1]
  %v1166 = vlaneseq
  %v1167 = vshrl.u32 %v1166, 7
  %v1168 = vsub.s32 0, %v1167
  %v1169 = vrot.slane %v1164, %v1168
  %v1171 = vadd.f32 %v1159, %v1169
  %v1172 = vadd.f32 %v1160, %v1169
  %v1173 = vadd.f32 %v1161, %v1169
  %v1174 = vadd.f32 %v1162, %v1169
  %v1175 = vadd.f32 %v1163, %v1169
  %v1176 = vld [vmem:[%s10] sm:$0x1]
  %v1177 = vld [vmem:[%s11] sm:$0x1]
  %v1178 = vsel %vm210, %v1171, 0.0
  %1179 = vadd.xlane.f32.xlu0 %v1178
  %v1180 = vpop.xlane.xlu0 %1179
  %v1181 = vsel %vm210, %v1172, 0.0
  %1182 = vadd.xlane.f32.xlu0 %v1181
  %v1183 = vpop.xlane.xlu0 %1182
  %v1184 = vsel %vm210, %v1173, 0.0
  %1185 = vadd.xlane.f32.xlu0 %v1184
  %v1186 = vpop.xlane.xlu0 %1185
  %v1187 = vsel %vm210, %v1174, 0.0
  %1188 = vadd.xlane.f32.xlu0 %v1187
  %v1189 = vpop.xlane.xlu0 %1188
  %v1190 = vsel %vm210, %v1175, 0.0
  %1191 = vadd.xlane.f32.xlu0 %v1190
  %v1192 = vpop.xlane.xlu0 %1191
  %v1193 = vmul.f32 %v1180, %v226
  %v1194 = vmul.f32 %v1183, %v226
  %v1195 = vmul.f32 %v1186, %v226
  %v1196 = vmul.f32 %v1189, %v226
  %v1197 = vmul.f32 %v1192, %v226
  %v1198 = vsub.f32 %v1171, %v1193
  %v1199 = vsub.f32 %v1172, %v1194
  %v1200 = vsub.f32 %v1173, %v1195
  %v1201 = vsub.f32 %v1174, %v1196
  %v1202 = vsub.f32 %v1175, %v1197
  %v1203 = vmul.f32 %v1198, %v1198
  %v1204 = vmul.f32 %v1199, %v1199
  %v1205 = vmul.f32 %v1200, %v1200
  %v1206 = vmul.f32 %v1201, %v1201
  %v1207 = vmul.f32 %v1202, %v1202
  %v1208 = vsel %vm210, %v1203, 0.0
  %1209 = vadd.xlane.f32.xlu0 %v1208
  %v1210 = vpop.xlane.xlu0 %1209
  %v1211 = vsel %vm210, %v1204, 0.0
  %1212 = vadd.xlane.f32.xlu0 %v1211
  %v1213 = vpop.xlane.xlu0 %1212
  %v1214 = vsel %vm210, %v1205, 0.0
  %1215 = vadd.xlane.f32.xlu0 %v1214
  %v1216 = vpop.xlane.xlu0 %1215
  %v1217 = vsel %vm210, %v1206, 0.0
  %1218 = vadd.xlane.f32.xlu0 %v1217
  %v1219 = vpop.xlane.xlu0 %1218
  %v1220 = vsel %vm210, %v1207, 0.0
  %1221 = vadd.xlane.f32.xlu0 %v1220
  %v1222 = vpop.xlane.xlu0 %1221
  %v1223 = vmul.f32 %v1210, %v226
  %v1224 = vmul.f32 %v1213, %v226
  %v1225 = vmul.f32 %v1216, %v226
  %v1226 = vmul.f32 %v1219, %v226
  %v1227 = vmul.f32 %v1222, %v226
  %v1228 = vadd.f32 %v1223, 1e-05
  %v1229 = vadd.f32 %v1224, 1e-05
  %v1230 = vadd.f32 %v1225, 1e-05
  %v1231 = vadd.f32 %v1226, 1e-05
  %v1232 = vadd.f32 %v1227, 1e-05
  %v1233 = vrsqrt.pop %v1228
  %v1234 = vrsqrt.pop %v1229
  %v1235 = vrsqrt.pop %v1230
  %v1236 = vrsqrt.pop %v1231
  %v1237 = vrsqrt.pop %v1232
  %v1238 = vmul.f32 %v1198, %v1233
  %v1239 = vmul.f32 %v1199, %v1234
  %v1240 = vmul.f32 %v1200, %v1235
  %v1241 = vmul.f32 %v1201, %v1236
  %v1242 = vmul.f32 %v1202, %v1237
  %v1244 = vlaneseq
  %v1245 = vshrl.u32 %v1244, 7
  %v1246 = vsub.s32 0, %v1245
  %v1247 = vrot.slane %v1176, %v1246
  %v1249 = vmul.f32 %v1238, %v1247
  %v1250 = vmul.f32 %v1239, %v1247
  %v1251 = vmul.f32 %v1240, %v1247
  %v1252 = vmul.f32 %v1241, %v1247
  %v1253 = vmul.f32 %v1242, %v1247
  %v1255 = vlaneseq
  %v1256 = vshrl.u32 %v1255, 7
  %v1257 = vsub.s32 0, %v1256
  %v1258 = vrot.slane %v1177, %v1257
  %v1260 = vadd.f32 %v1249, %v1258
  %v1261 = vadd.f32 %v1250, %v1258
  %v1262 = vadd.f32 %v1251, %v1258
  %v1263 = vadd.f32 %v1252, %v1258
  %v1264 = vadd.f32 %v1253, %v1258
  %v1265 = vld [vmem:[%s12] sm:$0xff]
  %v1266 = vld [vmem:[%s12 + $0x8] sm:$0xff]
  %v1267 = vld [vmem:[%s12 + $0x10] sm:$0xff]
  %v1268 = vld [vmem:[%s12 + $0x18] sm:$0xff]
  %v1269 = vld [vmem:[%s13] sm:$0x1]
  %v1271 = vlaneseq
  %v1272 = vshrl.u32 %v1271, 7
  %v1273 = vsub.s32 0, %v1272
  %v1274 = vrot.slane %v1269, %v1273
  %v1277 = vsel %vm210, %v1260, 0
  %v1280 = vsel %vm210, %v1261, 0
  %v1283 = vsel %vm210, %v1262, 0
  %v1286 = vsel %vm210, %v1263, 0
  %v1289 = vsel %vm210, %v1264, 0
  %1291 = vmatprep.subr.mxu0 0.0
  %1292 = vmatpush1.msra.mxu0 %v1265
  %1293 = vmatprep.subr.mxu0 0.0
  %1294 = vmatpush1.msra.mxu0 %v1266
  %1295 = vmatprep.subr.mxu0 0.0
  %1296 = vmatpush1.msra.mxu0 %v1267
  %1297 = vmatprep.subr.mxu0 0.0
  %1298 = vmatpush1.msra.mxu0 %v1268
  %1299 = vmatprep.subr.mxu0 0.0
  %1300 = vmatpush1.msra.mxu0 0.0
  %1301 = vmatprep.subr.mxu0 0.0
  %1302 = vmatpush1.msra.mxu0 0.0
  %1303 = vmatprep.subr.mxu0 0.0
  %1304 = vmatpush1.msra.mxu0 0.0
  %1305 = vmatprep.subr.mxu0 0.0
  %1306 = vmatpush1.msra.mxu0 0.0
  %1307 = vmatprep.subr.mxu0 0.0
  %1308 = vmatpush1.msra.mxu0 0.0
  %1309 = vmatprep.subr.mxu0 0.0
  %1310 = vmatpush1.msra.mxu0 0.0
  %1311 = vmatprep.subr.mxu0 0.0
  %1312 = vmatpush1.msra.mxu0 0.0
  %1313 = vmatprep.subr.mxu0 0.0
  %1314 = vmatpush1.msra.mxu0 0.0
  %1315 = vmatprep.subr.mxu0 0.0
  %1316 = vmatpush1.msra.mxu0 0.0
  %1317 = vmatprep.subr.mxu0 0.0
  %1318 = vmatpush1.msra.mxu0 0.0
  %1319 = vmatprep.subr.mxu0 0.0
  %1320 = vmatpush1.msra.mxu0 0.0
  %1321 = vmatprep.subr.mxu0 0.0
  %1322 = vmatpush1.msra.mxu0 0.0
  %1323 = vmatprep.subr.mxu0 0.0
  %1324 = vmatpush1.msra.mxu0 0.0
  %1325 = vmatprep.subr.mxu0 0.0
  %1326 = vmatpush1.msra.mxu0 0.0
  %1327 = vmatprep.subr.mxu0 0.0
  %1328 = vmatpush1.msra.mxu0 0.0
  %1329 = vmatprep.subr.mxu0 0.0
  %1330 = vmatpush1.msra.mxu0 0.0
  %1331 = vmatprep.subr.mxu0 0.0
  %1332 = vmatpush1.msra.mxu0 0.0
  %1333 = vmatprep.subr.mxu0 0.0
  %1334 = vmatpush1.msra.mxu0 0.0
  %1335 = vmatprep.subr.mxu0 0.0
  %1336 = vmatpush1.msra.mxu0 0.0
  %1337 = vmatprep.subr.mxu0 0.0
  %1338 = vmatpush1.msra.mxu0 0.0
  %1339 = vmatprep.subr.mxu0 0.0
  %1340 = vmatpush1.msra.mxu0 0.0
  %1341 = vmatprep.subr.mxu0 0.0
  %1342 = vmatpush1.msra.mxu0 0.0
  %1343 = vmatprep.subr.mxu0 0.0
  %1344 = vmatpush1.msra.mxu0 0.0
  %1345 = vmatprep.subr.mxu0 0.0
  %1346 = vmatpush1.msra.mxu0 0.0
  %1347 = vmatprep.subr.mxu0 0.0
  %1348 = vmatpush1.msra.mxu0 0.0
  %1349 = vmatprep.subr.mxu0 0.0
  %1350 = vmatpush1.msra.mxu0 0.0
  %1351 = vmatprep.subr.mxu0 0.0
  %1352 = vmatpush1.msra.mxu0 0.0
  %1353 = vmatprep.subr.mxu0 0.0
  %1354 = vmatpush1.msra.mxu0 0.0
  %1355 = vmatprep.mubr.f32.mxu0 0.0
  %1356 = vmatmul.mubr.f32.gmra.mrb[0].mxu0 %v1277
  %v1357 = vpop.f32.mrb[0].mxu0
  %v1358 = vadd.f32 %v1274, %v1357
  %v1359 = vpop.f32.mrb[0].mxu0
  %1360 = vmatprep.mubr.f32.mxu0 0.0
  %1361 = vmatmul.mubr.f32.gmra.mrb[0].mxu0 %v1280
  %v1362 = vpop.f32.mrb[0].mxu0
  %v1363 = vadd.f32 %v1274, %v1362
  %v1364 = vpop.f32.mrb[0].mxu0
  %1365 = vmatprep.mubr.f32.mxu0 0.0
  %1366 = vmatmul.mubr.f32.gmra.mrb[0].mxu0 %v1283
  %v1367 = vpop.f32.mrb[0].mxu0
  %v1368 = vadd.f32 %v1274, %v1367
  %v1369 = vpop.f32.mrb[0].mxu0
  %1370 = vmatprep.mubr.f32.mxu0 0.0
  %1371 = vmatmul.mubr.f32.gmra.mrb[0].mxu0 %v1286
  %v1372 = vpop.f32.mrb[0].mxu0
  %v1373 = vadd.f32 %v1274, %v1372
  %v1374 = vpop.f32.mrb[0].mxu0
  %1375 = vmatprep.mubr.f32.mxu0 0.0
  %1376 = vmatmul.mubr.f32.gmra.mrb[0].mxu0 %v1289
  %v1377 = vpop.f32.mrb[0].mxu0
  %v1378 = vadd.f32 %v1274, %v1377
  %v1379 = vpop.f32.mrb[0].mxu0
  %1380 = vdwg.mxu0
  %v1381 = vmul.f32 %v1358, %v1358
  %v1382 = vmul.f32 %v1363, %v1363
  %v1383 = vmul.f32 %v1368, %v1368
  %v1384 = vmul.f32 %v1373, %v1373
  %v1385 = vmul.f32 %v1378, %v1378
  %v1386 = vmul.f32 %v1358, %v1381
  %v1387 = vmul.f32 %v1363, %v1382
  %v1388 = vmul.f32 %v1368, %v1383
  %v1389 = vmul.f32 %v1373, %v1384
  %v1390 = vmul.f32 %v1378, %v1385
  %v1391 = vmul.f32 %v1386, 0.044715
  %v1392 = vmul.f32 %v1387, 0.044715
  %v1393 = vmul.f32 %v1388, 0.044715
  %v1394 = vmul.f32 %v1389, 0.044715
  %v1395 = vmul.f32 %v1390, 0.044715
  %v1396 = vadd.f32 %v1358, %v1391
  %v1397 = vadd.f32 %v1363, %v1392
  %v1398 = vadd.f32 %v1368, %v1393
  %v1399 = vadd.f32 %v1373, %v1394
  %v1400 = vadd.f32 %v1378, %v1395
  %v1401 = vmul.f32 %v1396, 0.7978846
  %v1402 = vmul.f32 %v1397, 0.7978846
  %v1403 = vmul.f32 %v1398, 0.7978846
  %v1404 = vmul.f32 %v1399, 0.7978846
  %v1405 = vmul.f32 %v1400, 0.7978846
  %v1406 = vtanh.pop %v1401
  %v1407 = vtanh.pop %v1402
  %v1408 = vtanh.pop %v1403
  %v1409 = vtanh.pop %v1404
  %v1410 = vtanh.pop %v1405
  %v1411 = vadd.f32 %v1406, 1.0
  %v1412 = vadd.f32 %v1407, 1.0
  %v1413 = vadd.f32 %v1408, 1.0
  %v1414 = vadd.f32 %v1409, 1.0
  %v1415 = vadd.f32 %v1410, 1.0
  %v1416 = vmul.f32 %v1411, 0.5
  %v1417 = vmul.f32 %v1412, 0.5
  %v1418 = vmul.f32 %v1413, 0.5
  %v1419 = vmul.f32 %v1414, 0.5
  %v1420 = vmul.f32 %v1415, 0.5
  %v1421 = vmul.f32 %v1358, %v1416
  %v1422 = vmul.f32 %v1363, %v1417
  %v1423 = vmul.f32 %v1368, %v1418
  %v1424 = vmul.f32 %v1373, %v1419
  %v1425 = vmul.f32 %v1378, %v1420
  %v1426 = vld [vmem:[%s14] sm:$0xff]
  %v1427 = vld [vmem:[%s14 + $0x8] sm:$0xff]
  %v1428 = vld [vmem:[%s14 + $0x10] sm:$0xff]
  %v1429 = vld [vmem:[%s14 + $0x18] sm:$0xff]
  %v1430 = vld [vmem:[%s14 + $0x20] sm:$0xff]
  %v1431 = vld [vmem:[%s14 + $0x28] sm:$0xff]
  %v1432 = vld [vmem:[%s14 + $0x30] sm:$0xff]
  %v1433 = vld [vmem:[%s14 + $0x38] sm:$0xff]
  %v1435 = vsel %vm96, %v1421, 0
  %v1438 = vsel %vm96, %v1422, 0
  %v1441 = vsel %vm96, %v1423, 0
  %v1444 = vsel %vm96, %v1424, 0
  %v1447 = vsel %vm96, %v1425, 0
  %1449 = vmatprep.subr.mxu0 0.0
  %1450 = vmatpush1.msra.mxu0 %v1426
  %1451 = vmatprep.subr.mxu0 0.0
  %1452 = vmatpush1.msra.mxu0 %v1427
  %1453 = vmatprep.subr.mxu0 0.0
  %1454 = vmatpush1.msra.mxu0 %v1428
  %1455 = vmatprep.subr.mxu0 0.0
  %1456 = vmatpush1.msra.mxu0 %v1429
  %1457 = vmatprep.subr.mxu0 0.0
  %1458 = vmatpush1.msra.mxu0 %v1430
  %1459 = vmatprep.subr.mxu0 0.0
  %1460 = vmatpush1.msra.mxu0 %v1431
  %1461 = vmatprep.subr.mxu0 0.0
  %1462 = vmatpush1.msra.mxu0 %v1432
  %1463 = vmatprep.subr.mxu0 0.0
  %1464 = vmatpush1.msra.mxu0 %v1433
  %1465 = vmatprep.subr.mxu0 0.0
  %1466 = vmatpush1.msra.mxu0 0.0
  %1467 = vmatprep.subr.mxu0 0.0
  %1468 = vmatpush1.msra.mxu0 0.0
  %1469 = vmatprep.subr.mxu0 0.0
  %1470 = vmatpush1.msra.mxu0 0.0
  %1471 = vmatprep.subr.mxu0 0.0
  %1472 = vmatpush1.msra.mxu0 0.0
  %1473 = vmatprep.subr.mxu0 0.0
  %1474 = vmatpush1.msra.mxu0 0.0
  %1475 = vmatprep.subr.mxu0 0.0
  %1476 = vmatpush1.msra.mxu0 0.0
  %1477 = vmatprep.subr.mxu0 0.0
  %1478 = vmatpush1.msra.mxu0 0.0
  %1479 = vmatprep.subr.mxu0 0.0
  %1480 = vmatpush1.msra.mxu0 0.0
  %1481 = vmatprep.subr.mxu0 0.0
  %1482 = vmatpush1.msra.mxu0 0.0
  %1483 = vmatprep.subr.mxu0 0.0
  %1484 = vmatpush1.msra.mxu0 0.0
  %1485 = vmatprep.subr.mxu0 0.0
  %1486 = vmatpush1.msra.mxu0 0.0
  %1487 = vmatprep.subr.mxu0 0.0
  %1488 = vmatpush1.msra.mxu0 0.0
  %1489 = vmatprep.subr.mxu0 0.0
  %1490 = vmatpush1.msra.mxu0 0.0
  %1491 = vmatprep.subr.mxu0 0.0
  %1492 = vmatpush1.msra.mxu0 0.0
  %1493 = vmatprep.subr.mxu0 0.0
  %1494 = vmatpush1.msra.mxu0 0.0
  %1495 = vmatprep.subr.mxu0 0.0
  %1496 = vmatpush1.msra.mxu0 0.0
  %1497 = vmatprep.subr.mxu0 0.0
  %1498 = vmatpush1.msra.mxu0 0.0
  %1499 = vmatprep.subr.mxu0 0.0
  %1500 = vmatpush1.msra.mxu0 0.0
  %1501 = vmatprep.subr.mxu0 0.0
  %1502 = vmatpush1.msra.mxu0 0.0
  %1503 = vmatprep.subr.mxu0 0.0
  %1504 = vmatpush1.msra.mxu0 0.0
  %1505 = vmatprep.subr.mxu0 0.0
  %1506 = vmatpush1.msra.mxu0 0.0
  %1507 = vmatprep.subr.mxu0 0.0
  %1508 = vmatpush1.msra.mxu0 0.0
  %1509 = vmatprep.subr.mxu0 0.0
  %1510 = vmatpush1.msra.mxu0 0.0
  %1511 = vmatprep.subr.mxu0 0.0
  %1512 = vmatpush1.msra.mxu0 0.0
  %1513 = vmatprep.mubr.f32.mxu0 0.0
  %1514 = vmatmul.mubr.f32.gmra.mrb[0].mxu0 %v1435
  %v1515 = vpop.f32.mrb[0].mxu0
  %v1516 = vadd.f32 0.0, %v1515
  %v1517 = vpop.f32.mrb[0].mxu0
  %1518 = vmatprep.mubr.f32.mxu0 0.0
  %1519 = vmatmul.mubr.f32.gmra.mrb[0].mxu0 %v1438
  %v1520 = vpop.f32.mrb[0].mxu0
  %v1521 = vadd.f32 0.0, %v1520
  %v1522 = vpop.f32.mrb[0].mxu0
  %1523 = vmatprep.mubr.f32.mxu0 0.0
  %1524 = vmatmul.mubr.f32.gmra.mrb[0].mxu0 %v1441
  %v1525 = vpop.f32.mrb[0].mxu0
  %v1526 = vadd.f32 0.0, %v1525
  %v1527 = vpop.f32.mrb[0].mxu0
  %1528 = vmatprep.mubr.f32.mxu0 0.0
  %1529 = vmatmul.mubr.f32.gmra.mrb[0].mxu0 %v1444
  %v1530 = vpop.f32.mrb[0].mxu0
  %v1531 = vadd.f32 0.0, %v1530
  %v1532 = vpop.f32.mrb[0].mxu0
  %1533 = vmatprep.mubr.f32.mxu0 0.0
  %1534 = vmatmul.mubr.f32.gmra.mrb[0].mxu0 %v1447
  %v1535 = vpop.f32.mrb[0].mxu0
  %v1536 = vadd.f32 0.0, %v1535
  %v1537 = vpop.f32.mrb[0].mxu0
  %1538 = vdwg.mxu0
  %v1539 = vadd.f32 %v1171, %v1516
  %v1540 = vadd.f32 %v1172, %v1521
  %v1541 = vadd.f32 %v1173, %v1526
  %v1542 = vadd.f32 %v1174, %v1531
  %v1543 = vadd.f32 %v1175, %v1536
  %v1544 = vld [vmem:[%s15] sm:$0x1]
  %v1546 = vlaneseq
  %v1547 = vshrl.u32 %v1546, 7
  %v1548 = vsub.s32 0, %v1547
  %v1549 = vrot.slane %v1544, %v1548
  %v1551 = vadd.f32 %v1539, %v1549
  %v1552 = vadd.f32 %v1540, %v1549
  %v1553 = vadd.f32 %v1541, %v1549
  %v1554 = vadd.f32 %v1542, %v1549
  %v1555 = vadd.f32 %v1543, %v1549
  %s1556 = scalar_lea.vmem %s5, 1
  %v1557 = vld [vmem:[%s1556] sm:$0x1]
  %s1558 = scalar_lea.vmem %s6, 1
  %v1559 = vld [vmem:[%s1558] sm:$0x1]
  %v1560 = vsel %vm210, %v1551, 0.0
  %1561 = vadd.xlane.f32.xlu0 %v1560
  %v1562 = vpop.xlane.xlu0 %1561
  %v1563 = vsel %vm210, %v1552, 0.0
  %1564 = vadd.xlane.f32.xlu0 %v1563
  %v1565 = vpop.xlane.xlu0 %1564
  %v1566 = vsel %vm210, %v1553, 0.0
  %1567 = vadd.xlane.f32.xlu0 %v1566
  %v1568 = vpop.xlane.xlu0 %1567
  %v1569 = vsel %vm210, %v1554, 0.0
  %1570 = vadd.xlane.f32.xlu0 %v1569
  %v1571 = vpop.xlane.xlu0 %1570
  %v1572 = vsel %vm210, %v1555, 0.0
  %1573 = vadd.xlane.f32.xlu0 %v1572
  %v1574 = vpop.xlane.xlu0 %1573
  %v1575 = vmul.f32 %v1562, %v226
  %v1576 = vmul.f32 %v1565, %v226
  %v1577 = vmul.f32 %v1568, %v226
  %v1578 = vmul.f32 %v1571, %v226
  %v1579 = vmul.f32 %v1574, %v226
  %v1580 = vsub.f32 %v1551, %v1575
  %v1581 = vsub.f32 %v1552, %v1576
  %v1582 = vsub.f32 %v1553, %v1577
  %v1583 = vsub.f32 %v1554, %v1578
  %v1584 = vsub.f32 %v1555, %v1579
  %v1585 = vmul.f32 %v1580, %v1580
  %v1586 = vmul.f32 %v1581, %v1581
  %v1587 = vmul.f32 %v1582, %v1582
  %v1588 = vmul.f32 %v1583, %v1583
  %v1589 = vmul.f32 %v1584, %v1584
  %v1590 = vsel %vm210, %v1585, 0.0
  %1591 = vadd.xlane.f32.xlu0 %v1590
  %v1592 = vpop.xlane.xlu0 %1591
  %v1593 = vsel %vm210, %v1586, 0.0
  %1594 = vadd.xlane.f32.xlu0 %v1593
  %v1595 = vpop.xlane.xlu0 %1594
  %v1596 = vsel %vm210, %v1587, 0.0
  %1597 = vadd.xlane.f32.xlu0 %v1596
  %v1598 = vpop.xlane.xlu0 %1597
  %v1599 = vsel %vm210, %v1588, 0.0
  %1600 = vadd.xlane.f32.xlu0 %v1599
  %v1601 = vpop.xlane.xlu0 %1600
  %v1602 = vsel %vm210, %v1589, 0.0
  %1603 = vadd.xlane.f32.xlu0 %v1602
  %v1604 = vpop.xlane.xlu0 %1603
  %v1605 = vmul.f32 %v1592, %v226
  %v1606 = vmul.f32 %v1595, %v226
  %v1607 = vmul.f32 %v1598, %v226
  %v1608 = vmul.f32 %v1601, %v226
  %v1609 = vmul.f32 %v1604, %v226
  %v1610 = vadd.f32 %v1605, 1e-05
  %v1611 = vadd.f32 %v1606, 1e-05
  %v1612 = vadd.f32 %v1607, 1e-05
  %v1613 = vadd.f32 %v1608, 1e-05
  %v1614 = vadd.f32 %v1609, 1e-05
  %v1615 = vrsqrt.pop %v1610
  %v1616 = vrsqrt.pop %v1611
  %v1617 = vrsqrt.pop %v1612
  %v1618 = vrsqrt.pop %v1613
  %v1619 = vrsqrt.pop %v1614
  %v1620 = vmul.f32 %v1580, %v1615
  %v1621 = vmul.f32 %v1581, %v1616
  %v1622 = vmul.f32 %v1582, %v1617
  %v1623 = vmul.f32 %v1583, %v1618
  %v1624 = vmul.f32 %v1584, %v1619
  %v1626 = vlaneseq
  %v1627 = vshrl.u32 %v1626, 7
  %v1628 = vsub.s32 0, %v1627
  %v1629 = vrot.slane %v1557, %v1628
  %v1631 = vmul.f32 %v1620, %v1629
  %v1632 = vmul.f32 %v1621, %v1629
  %v1633 = vmul.f32 %v1622, %v1629
  %v1634 = vmul.f32 %v1623, %v1629
  %v1635 = vmul.f32 %v1624, %v1629
  %v1637 = vlaneseq
  %v1638 = vshrl.u32 %v1637, 7
  %v1639 = vsub.s32 0, %v1638
  %v1640 = vrot.slane %v1559, %v1639
  %v1642 = vadd.f32 %v1631, %v1640
  %v1643 = vadd.f32 %v1632, %v1640
  %v1644 = vadd.f32 %v1633, %v1640
  %v1645 = vadd.f32 %v1634, %v1640
  %v1646 = vadd.f32 %v1635, %v1640
  %s1647 = scalar_lea.vmem %s7, 32
  %v1648 = vld [vmem:[%s1647] sm:$0xff]
  %v1649 = vld [vmem:[%s1647 + $0x8] sm:$0xff]
  %v1650 = vld [vmem:[%s1647 + $0x10] sm:$0xff]
  %v1651 = vld [vmem:[%s1647 + $0x18] sm:$0xff]
  %v1653 = vsel %vm210, %v1642, 0
  %v1656 = vsel %vm210, %v1643, 0
  %v1659 = vsel %vm210, %v1644, 0
  %v1662 = vsel %vm210, %v1645, 0
  %v1665 = vsel %vm210, %v1646, 0
  %1667 = vmatprep.subr.mxu0 0.0
  %1668 = vmatpush1.msra.mxu0 %v1648
  %1669 = vmatprep.subr.mxu0 0.0
  %1670 = vmatpush1.msra.mxu0 %v1649
  %1671 = vmatprep.subr.mxu0 0.0
  %1672 = vmatpush1.msra.mxu0 %v1650
  %1673 = vmatprep.subr.mxu0 0.0
  %1674 = vmatpush1.msra.mxu0 %v1651
  %1675 = vmatprep.subr.mxu0 0.0
  %1676 = vmatpush1.msra.mxu0 0.0
  %1677 = vmatprep.subr.mxu0 0.0
  %1678 = vmatpush1.msra.mxu0 0.0
  %1679 = vmatprep.subr.mxu0 0.0
  %1680 = vmatpush1.msra.mxu0 0.0
  %1681 = vmatprep.subr.mxu0 0.0
  %1682 = vmatpush1.msra.mxu0 0.0
  %1683 = vmatprep.subr.mxu0 0.0
  %1684 = vmatpush1.msra.mxu0 0.0
  %1685 = vmatprep.subr.mxu0 0.0
  %1686 = vmatpush1.msra.mxu0 0.0
  %1687 = vmatprep.subr.mxu0 0.0
  %1688 = vmatpush1.msra.mxu0 0.0
  %1689 = vmatprep.subr.mxu0 0.0
  %1690 = vmatpush1.msra.mxu0 0.0
  %1691 = vmatprep.subr.mxu0 0.0
  %1692 = vmatpush1.msra.mxu0 0.0
  %1693 = vmatprep.subr.mxu0 0.0
  %1694 = vmatpush1.msra.mxu0 0.0
  %1695 = vmatprep.subr.mxu0 0.0
  %1696 = vmatpush1.msra.mxu0 0.0
  %1697 = vmatprep.subr.mxu0 0.0
  %1698 = vmatpush1.msra.mxu0 0.0
  %1699 = vmatprep.subr.mxu0 0.0
  %1700 = vmatpush1.msra.mxu0 0.0
  %1701 = vmatprep.subr.mxu0 0.0
  %1702 = vmatpush1.msra.mxu0 0.0
  %1703 = vmatprep.subr.mxu0 0.0
  %1704 = vmatpush1.msra.mxu0 0.0
  %1705 = vmatprep.subr.mxu0 0.0
  %1706 = vmatpush1.msra.mxu0 0.0
  %1707 = vmatprep.subr.mxu0 0.0
  %1708 = vmatpush1.msra.mxu0 0.0
  %1709 = vmatprep.subr.mxu0 0.0
  %1710 = vmatpush1.msra.mxu0 0.0
  %1711 = vmatprep.subr.mxu0 0.0
  %1712 = vmatpush1.msra.mxu0 0.0
  %1713 = vmatprep.subr.mxu0 0.0
  %1714 = vmatpush1.msra.mxu0 0.0
  %1715 = vmatprep.subr.mxu0 0.0
  %1716 = vmatpush1.msra.mxu0 0.0
  %1717 = vmatprep.subr.mxu0 0.0
  %1718 = vmatpush1.msra.mxu0 0.0
  %1719 = vmatprep.subr.mxu0 0.0
  %1720 = vmatpush1.msra.mxu0 0.0
  %1721 = vmatprep.subr.mxu0 0.0
  %1722 = vmatpush1.msra.mxu0 0.0
  %1723 = vmatprep.subr.mxu0 0.0
  %1724 = vmatpush1.msra.mxu0 0.0
  %1725 = vmatprep.subr.mxu0 0.0
  %1726 = vmatpush1.msra.mxu0 0.0
  %1727 = vmatprep.subr.mxu0 0.0
  %1728 = vmatpush1.msra.mxu0 0.0
  %1729 = vmatprep.subr.mxu0 0.0
  %1730 = vmatpush1.msra.mxu0 0.0
  %1731 = vmatprep.mubr.f32.mxu0 0.0
  %1732 = vmatmul.mubr.f32.gmra.mrb[0].mxu0 %v1653
  %v1733 = vpop.f32.mrb[0].mxu0
  %v1734 = vadd.f32 0.0, %v1733
  %v1735 = vpop.f32.mrb[0].mxu0
  %1736 = vmatprep.mubr.f32.mxu0 0.0
  %1737 = vmatmul.mubr.f32.gmra.mrb[0].mxu0 %v1656
  %v1738 = vpop.f32.mrb[0].mxu0
  %v1739 = vadd.f32 0.0, %v1738
  %v1740 = vpop.f32.mrb[0].mxu0
  %1741 = vmatprep.mubr.f32.mxu0 0.0
  %1742 = vmatmul.mubr.f32.gmra.mrb[0].mxu0 %v1659
  %v1743 = vpop.f32.mrb[0].mxu0
  %v1744 = vadd.f32 0.0, %v1743
  %v1745 = vpop.f32.mrb[0].mxu0
  %1746 = vmatprep.mubr.f32.mxu0 0.0
  %1747 = vmatmul.mubr.f32.gmra.mrb[0].mxu0 %v1662
  %v1748 = vpop.f32.mrb[0].mxu0
  %v1749 = vadd.f32 0.0, %v1748
  %v1750 = vpop.f32.mrb[0].mxu0
  %1751 = vmatprep.mubr.f32.mxu0 0.0
  %1752 = vmatmul.mubr.f32.gmra.mrb[0].mxu0 %v1665
  %v1753 = vpop.f32.mrb[0].mxu0
  %v1754 = vadd.f32 0.0, %v1753
  %v1755 = vpop.f32.mrb[0].mxu0
  %1756 = vdwg.mxu0
  %v1757 = vmul.f32 %v1734, 0.25
  %v1758 = vmul.f32 %v1739, 0.25
  %v1759 = vmul.f32 %v1744, 0.25
  %v1760 = vmul.f32 %v1749, 0.25
  %v1761 = vmul.f32 %v1754, 0.25
  %1767 = vrot.lane.b32.xlu0 %v1734, 96
  %v1768 = vpop.permute.xlu0 %1767
  %1769 = vrot.lane.b32.xlu0 %v1739, 96
  %v1770 = vpop.permute.xlu0 %1769
  %1771 = vrot.lane.b32.xlu0 %v1744, 96
  %v1772 = vpop.permute.xlu0 %1771
  %1773 = vrot.lane.b32.xlu0 %v1749, 96
  %v1774 = vpop.permute.xlu0 %1773
  %1775 = vrot.lane.b32.xlu0 %v1754, 96
  %v1776 = vpop.permute.xlu0 %1775
  %v1778 = vsel %vm428, %v1757, 0
  %v1781 = vsel %vm428, %v1758, 0
  %v1784 = vsel %vm428, %v1759, 0
  %v1787 = vsel %vm428, %v1760, 0
  %v1790 = vsel %vm428, %v1761, 0
  %v1792 = vsel %vm428, %v1768, 0
  %v1794 = vsel %vm428, %v1770, 0
  %v1796 = vsel %vm428, %v1772, 0
  %v1798 = vsel %vm428, %v1774, 0
  %v1800 = vsel %vm428, %v1776, 0
  %1802 = vmatprep.subr.mxu0 0.0
  %1803 = vmatpush1.xpose.msra.mxu0 %v1792
  %1804 = vmatprep.subr.mxu0 0.0
  %1805 = vmatpush1.xpose.msra.mxu0 %v1794
  %1806 = vmatprep.subr.mxu0 0.0
  %1807 = vmatpush1.xpose.msra.mxu0 %v1796
  %1808 = vmatprep.subr.mxu0 0.0
  %1809 = vmatpush1.xpose.msra.mxu0 %v1798
  %1810 = vmatprep.subr.mxu0 0.0
  %1811 = vmatpush1.xpose.msra.mxu0 %v1800
  %1812 = vmatprep.subr.mxu0 0.0
  %1813 = vmatpush1.xpose.msra.mxu0 0.0
  %1814 = vmatprep.subr.mxu0 0.0
  %1815 = vmatpush1.xpose.msra.mxu0 0.0
  %1816 = vmatprep.subr.mxu0 0.0
  %1817 = vmatpush1.xpose.msra.mxu0 0.0
  %1818 = vmatprep.subr.mxu0 0.0
  %1819 = vmatpush1.xpose.msra.mxu0 0.0
  %1820 = vmatprep.subr.mxu0 0.0
  %1821 = vmatpush1.xpose.msra.mxu0 0.0
  %1822 = vmatprep.subr.mxu0 0.0
  %1823 = vmatpush1.xpose.msra.mxu0 0.0
  %1824 = vmatprep.subr.mxu0 0.0
  %1825 = vmatpush1.xpose.msra.mxu0 0.0
  %1826 = vmatprep.subr.mxu0 0.0
  %1827 = vmatpush1.xpose.msra.mxu0 0.0
  %1828 = vmatprep.subr.mxu0 0.0
  %1829 = vmatpush1.xpose.msra.mxu0 0.0
  %1830 = vmatprep.subr.mxu0 0.0
  %1831 = vmatpush1.xpose.msra.mxu0 0.0
  %1832 = vmatprep.subr.mxu0 0.0
  %1833 = vmatpush1.xpose.msra.mxu0 0.0
  %1834 = vmatprep.subr.mxu0 0.0
  %1835 = vmatpush1.xpose.msra.mxu0 0.0
  %1836 = vmatprep.subr.mxu0 0.0
  %1837 = vmatpush1.xpose.msra.mxu0 0.0
  %1838 = vmatprep.subr.mxu0 0.0
  %1839 = vmatpush1.xpose.msra.mxu0 0.0
  %1840 = vmatprep.subr.mxu0 0.0
  %1841 = vmatpush1.xpose.msra.mxu0 0.0
  %1842 = vmatprep.subr.mxu0 0.0
  %1843 = vmatpush1.xpose.msra.mxu0 0.0
  %1844 = vmatprep.subr.mxu0 0.0
  %1845 = vmatpush1.xpose.msra.mxu0 0.0
  %1846 = vmatprep.subr.mxu0 0.0
  %1847 = vmatpush1.xpose.msra.mxu0 0.0
  %1848 = vmatprep.subr.mxu0 0.0
  %1849 = vmatpush1.xpose.msra.mxu0 0.0
  %1850 = vmatprep.subr.mxu0 0.0
  %1851 = vmatpush1.xpose.msra.mxu0 0.0
  %1852 = vmatprep.subr.mxu0 0.0
  %1853 = vmatpush1.xpose.msra.mxu0 0.0
  %1854 = vmatprep.subr.mxu0 0.0
  %1855 = vmatpush1.xpose.msra.mxu0 0.0
  %1856 = vmatprep.subr.mxu0 0.0
  %1857 = vmatpush1.xpose.msra.mxu0 0.0
  %1858 = vmatprep.subr.mxu0 0.0
  %1859 = vmatpush1.xpose.msra.mxu0 0.0
  %1860 = vmatprep.subr.mxu0 0.0
  %1861 = vmatpush1.xpose.msra.mxu0 0.0
  %1862 = vmatprep.subr.mxu0 0.0
  %1863 = vmatpush1.xpose.msra.mxu0 0.0
  %1864 = vmatprep.subr.mxu0 0.0
  %1865 = vmatpush1.xpose.msra.mxu0 0.0
  %1866 = vmatprep.mubr.f32.mxu0 0.0
  %1867 = vmatmul.mubr.f32.gmra.mrb[0].mxu0 %v1778
  %v1868 = vpop.f32.mrb[0].mxu0
  %v1869 = vadd.f32 %v203, %v1868
  %v1870 = vpop.f32.mrb[0].mxu0
  %1871 = vmatprep.mubr.f32.mxu0 0.0
  %1872 = vmatmul.mubr.f32.gmra.mrb[0].mxu0 %v1781
  %v1873 = vpop.f32.mrb[0].mxu0
  %v1874 = vadd.f32 %v204, %v1873
  %v1875 = vpop.f32.mrb[0].mxu0
  %1876 = vmatprep.mubr.f32.mxu0 0.0
  %1877 = vmatmul.mubr.f32.gmra.mrb[0].mxu0 %v1784
  %v1878 = vpop.f32.mrb[0].mxu0
  %v1879 = vadd.f32 %v205, %v1878
  %v1880 = vpop.f32.mrb[0].mxu0
  %1881 = vmatprep.mubr.f32.mxu0 0.0
  %1882 = vmatmul.mubr.f32.gmra.mrb[0].mxu0 %v1787
  %v1883 = vpop.f32.mrb[0].mxu0
  %v1884 = vadd.f32 %v206, %v1883
  %v1885 = vpop.f32.mrb[0].mxu0
  %1886 = vmatprep.mubr.f32.mxu0 0.0
  %1887 = vmatmul.mubr.f32.gmra.mrb[0].mxu0 %v1790
  %v1888 = vpop.f32.mrb[0].mxu0
  %v1889 = vadd.f32 %v207, %v1888
  %v1890 = vpop.f32.mrb[0].mxu0
  %1891 = vdwg.mxu0
  %v1892 = vsel %vm544, %v1869, -inf
  %1893 = vmax.xlane.f32.xlu0 %v1892
  %v1894 = vpop.xlane.xlu0 %1893
  %v1895 = vsel %vm544, %v1874, -inf
  %1896 = vmax.xlane.f32.xlu0 %v1895
  %v1897 = vpop.xlane.xlu0 %1896
  %v1898 = vsel %vm544, %v1879, -inf
  %1899 = vmax.xlane.f32.xlu0 %v1898
  %v1900 = vpop.xlane.xlu0 %1899
  %v1901 = vsel %vm544, %v1884, -inf
  %1902 = vmax.xlane.f32.xlu0 %v1901
  %v1903 = vpop.xlane.xlu0 %1902
  %v1904 = vsel %vm544, %v1889, -inf
  %1905 = vmax.xlane.f32.xlu0 %v1904
  %v1906 = vpop.xlane.xlu0 %1905
  %v1907 = vsub.f32 %v1869, %v1894
  %v1908 = vsub.f32 %v1874, %v1897
  %v1909 = vsub.f32 %v1879, %v1900
  %v1910 = vsub.f32 %v1884, %v1903
  %v1911 = vsub.f32 %v1889, %v1906
  %v1912 = vmul.f32 %v1907, 1.442695
  %v1913 = vpow.pop %v1912
  %v1914 = vmul.f32 %v1908, 1.442695
  %v1915 = vpow.pop %v1914
  %v1916 = vmul.f32 %v1909, 1.442695
  %v1917 = vpow.pop %v1916
  %v1918 = vmul.f32 %v1910, 1.442695
  %v1919 = vpow.pop %v1918
  %v1920 = vmul.f32 %v1911, 1.442695
  %v1921 = vpow.pop %v1920
  %v1922 = vsel %vm544, %v1913, 0.0
  %1923 = vadd.xlane.f32.xlu0 %v1922
  %v1924 = vpop.xlane.xlu0 %1923
  %v1925 = vsel %vm544, %v1915, 0.0
  %1926 = vadd.xlane.f32.xlu0 %v1925
  %v1927 = vpop.xlane.xlu0 %1926
  %v1928 = vsel %vm544, %v1917, 0.0
  %1929 = vadd.xlane.f32.xlu0 %v1928
  %v1930 = vpop.xlane.xlu0 %1929
  %v1931 = vsel %vm544, %v1919, 0.0
  %1932 = vadd.xlane.f32.xlu0 %v1931
  %v1933 = vpop.xlane.xlu0 %1932
  %v1934 = vsel %vm544, %v1921, 0.0
  %1935 = vadd.xlane.f32.xlu0 %v1934
  %v1936 = vpop.xlane.xlu0 %1935
  %v1937 = vrcp.pop %v1924
  %v1938 = vrcp.pop %v1927
  %v1939 = vrcp.pop %v1930
  %v1940 = vrcp.pop %v1933
  %v1941 = vrcp.pop %v1936
  %v1942 = vmul.f32 %v1913, %v1937
  %v1943 = vmul.f32 %v1915, %v1938
  %v1944 = vmul.f32 %v1917, %v1939
  %v1945 = vmul.f32 %v1919, %v1940
  %v1946 = vmul.f32 %v1921, %v1941
  %1947 = vrot.lane.b32.xlu0 %v1734, 64
  %v1948 = vpop.permute.xlu0 %1947
  %1949 = vrot.lane.b32.xlu0 %v1739, 64
  %v1950 = vpop.permute.xlu0 %1949
  %1951 = vrot.lane.b32.xlu0 %v1744, 64
  %v1952 = vpop.permute.xlu0 %1951
  %1953 = vrot.lane.b32.xlu0 %v1749, 64
  %v1954 = vpop.permute.xlu0 %1953
  %1955 = vrot.lane.b32.xlu0 %v1754, 64
  %v1956 = vpop.permute.xlu0 %1955
  %v1963 = vsel %vm544, %v1942, 0
  %v1966 = vsel %vm544, %v1943, 0
  %v1969 = vsel %vm544, %v1944, 0
  %v1972 = vsel %vm544, %v1945, 0
  %v1975 = vsel %vm544, %v1946, 0
  %1977 = vmatprep.subr.mxu0 0.0
  %1978 = vmatpush1.msra.mxu0 %v1948
  %1979 = vmatprep.subr.mxu0 0.0
  %1980 = vmatpush1.msra.mxu0 %v1950
  %1981 = vmatprep.subr.mxu0 0.0
  %1982 = vmatpush1.msra.mxu0 %v1952
  %1983 = vmatprep.subr.mxu0 0.0
  %1984 = vmatpush1.msra.mxu0 %v1954
  %1985 = vmatprep.subr.mxu0 0.0
  %1986 = vmatpush1.msra.mxu0 %v1956
  %1987 = vmatprep.subr.mxu0 0.0
  %1988 = vmatpush1.msra.mxu0 0.0
  %1989 = vmatprep.subr.mxu0 0.0
  %1990 = vmatpush1.msra.mxu0 0.0
  %1991 = vmatprep.subr.mxu0 0.0
  %1992 = vmatpush1.msra.mxu0 0.0
  %1993 = vmatprep.subr.mxu0 0.0
  %1994 = vmatpush1.msra.mxu0 0.0
  %1995 = vmatprep.subr.mxu0 0.0
  %1996 = vmatpush1.msra.mxu0 0.0
  %1997 = vmatprep.subr.mxu0 0.0
  %1998 = vmatpush1.msra.mxu0 0.0
  %1999 = vmatprep.subr.mxu0 0.0
  %2000 = vmatpush1.msra.mxu0 0.0
  %2001 = vmatprep.subr.mxu0 0.0
  %2002 = vmatpush1.msra.mxu0 0.0
  %2003 = vmatprep.subr.mxu0 0.0
  %2004 = vmatpush1.msra.mxu0 0.0
  %2005 = vmatprep.subr.mxu0 0.0
  %2006 = vmatpush1.msra.mxu0 0.0
  %2007 = vmatprep.subr.mxu0 0.0
  %2008 = vmatpush1.msra.mxu0 0.0
  %2009 = vmatprep.subr.mxu0 0.0
  %2010 = vmatpush1.msra.mxu0 0.0
  %2011 = vmatprep.subr.mxu0 0.0
  %2012 = vmatpush1.msra.mxu0 0.0
  %2013 = vmatprep.subr.mxu0 0.0
  %2014 = vmatpush1.msra.mxu0 0.0
  %2015 = vmatprep.subr.mxu0 0.0
  %2016 = vmatpush1.msra.mxu0 0.0
  %2017 = vmatprep.subr.mxu0 0.0
  %2018 = vmatpush1.msra.mxu0 0.0
  %2019 = vmatprep.subr.mxu0 0.0
  %2020 = vmatpush1.msra.mxu0 0.0
  %2021 = vmatprep.subr.mxu0 0.0
  %2022 = vmatpush1.msra.mxu0 0.0
  %2023 = vmatprep.subr.mxu0 0.0
  %2024 = vmatpush1.msra.mxu0 0.0
  %2025 = vmatprep.subr.mxu0 0.0
  %2026 = vmatpush1.msra.mxu0 0.0
  %2027 = vmatprep.subr.mxu0 0.0
  %2028 = vmatpush1.msra.mxu0 0.0
  %2029 = vmatprep.subr.mxu0 0.0
  %2030 = vmatpush1.msra.mxu0 0.0
  %2031 = vmatprep.subr.mxu0 0.0
  %2032 = vmatpush1.msra.mxu0 0.0
  %2033 = vmatprep.subr.mxu0 0.0
  %2034 = vmatpush1.msra.mxu0 0.0
  %2035 = vmatprep.subr.mxu0 0.0
  %2036 = vmatpush1.msra.mxu0 0.0
  %2037 = vmatprep.subr.mxu0 0.0
  %2038 = vmatpush1.msra.mxu0 0.0
  %2039 = vmatprep.subr.mxu0 0.0
  %2040 = vmatpush1.msra.mxu0 0.0
  %2041 = vmatprep.mubr.f32.mxu0 0.0
  %2042 = vmatmul.mubr.f32.gmra.mrb[0].mxu0 %v1963
  %v2043 = vpop.f32.mrb[0].mxu0
  %v2044 = vadd.f32 0.0, %v2043
  %v2045 = vpop.f32.mrb[0].mxu0
  %2046 = vmatprep.mubr.f32.mxu0 0.0
  %2047 = vmatmul.mubr.f32.gmra.mrb[0].mxu0 %v1966
  %v2048 = vpop.f32.mrb[0].mxu0
  %v2049 = vadd.f32 0.0, %v2048
  %v2050 = vpop.f32.mrb[0].mxu0
  %2051 = vmatprep.mubr.f32.mxu0 0.0
  %2052 = vmatmul.mubr.f32.gmra.mrb[0].mxu0 %v1969
  %v2053 = vpop.f32.mrb[0].mxu0
  %v2054 = vadd.f32 0.0, %v2053
  %v2055 = vpop.f32.mrb[0].mxu0
  %2056 = vmatprep.mubr.f32.mxu0 0.0
  %2057 = vmatmul.mubr.f32.gmra.mrb[0].mxu0 %v1972
  %v2058 = vpop.f32.mrb[0].mxu0
  %v2059 = vadd.f32 0.0, %v2058
  %v2060 = vpop.f32.mrb[0].mxu0
  %2061 = vmatprep.mubr.f32.mxu0 0.0
  %2062 = vmatmul.mubr.f32.gmra.mrb[0].mxu0 %v1975
  %v2063 = vpop.f32.mrb[0].mxu0
  %v2064 = vadd.f32 0.0, %v2063
  %v2065 = vpop.f32.mrb[0].mxu0
  %2066 = vdwg.mxu0
  %2067 = vrot.lane.b32.xlu0 %v1757, 112
  %v2068 = vpop.permute.xlu0 %2067
  %2069 = vrot.lane.b32.xlu0 %v1758, 112
  %v2070 = vpop.permute.xlu0 %2069
  %2071 = vrot.lane.b32.xlu0 %v1759, 112
  %v2072 = vpop.permute.xlu0 %2071
  %2073 = vrot.lane.b32.xlu0 %v1760, 112
  %v2074 = vpop.permute.xlu0 %2073
  %2075 = vrot.lane.b32.xlu0 %v1761, 112
  %v2076 = vpop.permute.xlu0 %2075
  %2077 = vrot.lane.b32.xlu0 %v1734, 80
  %v2078 = vpop.permute.xlu0 %2077
  %2079 = vrot.lane.b32.xlu0 %v1739, 80
  %v2080 = vpop.permute.xlu0 %2079
  %2081 = vrot.lane.b32.xlu0 %v1744, 80
  %v2082 = vpop.permute.xlu0 %2081
  %2083 = vrot.lane.b32.xlu0 %v1749, 80
  %v2084 = vpop.permute.xlu0 %2083
  %2085 = vrot.lane.b32.xlu0 %v1754, 80
  %v2086 = vpop.permute.xlu0 %2085
  %v2087 = vsel %vm428, %v2068, 0
  %v2089 = vsel %vm428, %v2070, 0
  %v2091 = vsel %vm428, %v2072, 0
  %v2093 = vsel %vm428, %v2074, 0
  %v2095 = vsel %vm428, %v2076, 0
  %v2097 = vsel %vm428, %v2078, 0
  %v2099 = vsel %vm428, %v2080, 0
  %v2101 = vsel %vm428, %v2082, 0
  %v2103 = vsel %vm428, %v2084, 0
  %v2105 = vsel %vm428, %v2086, 0
  %2107 = vmatprep.subr.mxu0 0.0
  %2108 = vmatpush1.xpose.msra.mxu0 %v2097
  %2109 = vmatprep.subr.mxu0 0.0
  %2110 = vmatpush1.xpose.msra.mxu0 %v2099
  %2111 = vmatprep.subr.mxu0 0.0
  %2112 = vmatpush1.xpose.msra.mxu0 %v2101
  %2113 = vmatprep.subr.mxu0 0.0
  %2114 = vmatpush1.xpose.msra.mxu0 %v2103
  %2115 = vmatprep.subr.mxu0 0.0
  %2116 = vmatpush1.xpose.msra.mxu0 %v2105
  %2117 = vmatprep.subr.mxu0 0.0
  %2118 = vmatpush1.xpose.msra.mxu0 0.0
  %2119 = vmatprep.subr.mxu0 0.0
  %2120 = vmatpush1.xpose.msra.mxu0 0.0
  %2121 = vmatprep.subr.mxu0 0.0
  %2122 = vmatpush1.xpose.msra.mxu0 0.0
  %2123 = vmatprep.subr.mxu0 0.0
  %2124 = vmatpush1.xpose.msra.mxu0 0.0
  %2125 = vmatprep.subr.mxu0 0.0
  %2126 = vmatpush1.xpose.msra.mxu0 0.0
  %2127 = vmatprep.subr.mxu0 0.0
  %2128 = vmatpush1.xpose.msra.mxu0 0.0
  %2129 = vmatprep.subr.mxu0 0.0
  %2130 = vmatpush1.xpose.msra.mxu0 0.0
  %2131 = vmatprep.subr.mxu0 0.0
  %2132 = vmatpush1.xpose.msra.mxu0 0.0
  %2133 = vmatprep.subr.mxu0 0.0
  %2134 = vmatpush1.xpose.msra.mxu0 0.0
  %2135 = vmatprep.subr.mxu0 0.0
  %2136 = vmatpush1.xpose.msra.mxu0 0.0
  %2137 = vmatprep.subr.mxu0 0.0
  %2138 = vmatpush1.xpose.msra.mxu0 0.0
  %2139 = vmatprep.subr.mxu0 0.0
  %2140 = vmatpush1.xpose.msra.mxu0 0.0
  %2141 = vmatprep.subr.mxu0 0.0
  %2142 = vmatpush1.xpose.msra.mxu0 0.0
  %2143 = vmatprep.subr.mxu0 0.0
  %2144 = vmatpush1.xpose.msra.mxu0 0.0
  %2145 = vmatprep.subr.mxu0 0.0
  %2146 = vmatpush1.xpose.msra.mxu0 0.0
  %2147 = vmatprep.subr.mxu0 0.0
  %2148 = vmatpush1.xpose.msra.mxu0 0.0
  %2149 = vmatprep.subr.mxu0 0.0
  %2150 = vmatpush1.xpose.msra.mxu0 0.0
  %2151 = vmatprep.subr.mxu0 0.0
  %2152 = vmatpush1.xpose.msra.mxu0 0.0
  %2153 = vmatprep.subr.mxu0 0.0
  %2154 = vmatpush1.xpose.msra.mxu0 0.0
  %2155 = vmatprep.subr.mxu0 0.0
  %2156 = vmatpush1.xpose.msra.mxu0 0.0
  %2157 = vmatprep.subr.mxu0 0.0
  %2158 = vmatpush1.xpose.msra.mxu0 0.0
  %2159 = vmatprep.subr.mxu0 0.0
  %2160 = vmatpush1.xpose.msra.mxu0 0.0
  %2161 = vmatprep.subr.mxu0 0.0
  %2162 = vmatpush1.xpose.msra.mxu0 0.0
  %2163 = vmatprep.subr.mxu0 0.0
  %2164 = vmatpush1.xpose.msra.mxu0 0.0
  %2165 = vmatprep.subr.mxu0 0.0
  %2166 = vmatpush1.xpose.msra.mxu0 0.0
  %2167 = vmatprep.subr.mxu0 0.0
  %2168 = vmatpush1.xpose.msra.mxu0 0.0
  %2169 = vmatprep.subr.mxu0 0.0
  %2170 = vmatpush1.xpose.msra.mxu0 0.0
  %2171 = vmatprep.mubr.f32.mxu0 0.0
  %2172 = vmatmul.mubr.f32.gmra.mrb[0].mxu0 %v2087
  %v2173 = vpop.f32.mrb[0].mxu0
  %v2174 = vadd.f32 %v203, %v2173
  %v2175 = vpop.f32.mrb[0].mxu0
  %2176 = vmatprep.mubr.f32.mxu0 0.0
  %2177 = vmatmul.mubr.f32.gmra.mrb[0].mxu0 %v2089
  %v2178 = vpop.f32.mrb[0].mxu0
  %v2179 = vadd.f32 %v204, %v2178
  %v2180 = vpop.f32.mrb[0].mxu0
  %2181 = vmatprep.mubr.f32.mxu0 0.0
  %2182 = vmatmul.mubr.f32.gmra.mrb[0].mxu0 %v2091
  %v2183 = vpop.f32.mrb[0].mxu0
  %v2184 = vadd.f32 %v205, %v2183
  %v2185 = vpop.f32.mrb[0].mxu0
  %2186 = vmatprep.mubr.f32.mxu0 0.0
  %2187 = vmatmul.mubr.f32.gmra.mrb[0].mxu0 %v2093
  %v2188 = vpop.f32.mrb[0].mxu0
  %v2189 = vadd.f32 %v206, %v2188
  %v2190 = vpop.f32.mrb[0].mxu0
  %2191 = vmatprep.mubr.f32.mxu0 0.0
  %2192 = vmatmul.mubr.f32.gmra.mrb[0].mxu0 %v2095
  %v2193 = vpop.f32.mrb[0].mxu0
  %v2194 = vadd.f32 %v207, %v2193
  %v2195 = vpop.f32.mrb[0].mxu0
  %2196 = vdwg.mxu0
  %v2197 = vsel %vm544, %v2174, -inf
  %2198 = vmax.xlane.f32.xlu0 %v2197
  %v2199 = vpop.xlane.xlu0 %2198
  %v2200 = vsel %vm544, %v2179, -inf
  %2201 = vmax.xlane.f32.xlu0 %v2200
  %v2202 = vpop.xlane.xlu0 %2201
  %v2203 = vsel %vm544, %v2184, -inf
  %2204 = vmax.xlane.f32.xlu0 %v2203
  %v2205 = vpop.xlane.xlu0 %2204
  %v2206 = vsel %vm544, %v2189, -inf
  %2207 = vmax.xlane.f32.xlu0 %v2206
  %v2208 = vpop.xlane.xlu0 %2207
  %v2209 = vsel %vm544, %v2194, -inf
  %2210 = vmax.xlane.f32.xlu0 %v2209
  %v2211 = vpop.xlane.xlu0 %2210
  %v2212 = vsub.f32 %v2174, %v2199
  %v2213 = vsub.f32 %v2179, %v2202
  %v2214 = vsub.f32 %v2184, %v2205
  %v2215 = vsub.f32 %v2189, %v2208
  %v2216 = vsub.f32 %v2194, %v2211
  %v2217 = vmul.f32 %v2212, 1.442695
  %v2218 = vpow.pop %v2217
  %v2219 = vmul.f32 %v2213, 1.442695
  %v2220 = vpow.pop %v2219
  %v2221 = vmul.f32 %v2214, 1.442695
  %v2222 = vpow.pop %v2221
  %v2223 = vmul.f32 %v2215, 1.442695
  %v2224 = vpow.pop %v2223
  %v2225 = vmul.f32 %v2216, 1.442695
  %v2226 = vpow.pop %v2225
  %v2227 = vsel %vm544, %v2218, 0.0
  %2228 = vadd.xlane.f32.xlu0 %v2227
  %v2229 = vpop.xlane.xlu0 %2228
  %v2230 = vsel %vm544, %v2220, 0.0
  %2231 = vadd.xlane.f32.xlu0 %v2230
  %v2232 = vpop.xlane.xlu0 %2231
  %v2233 = vsel %vm544, %v2222, 0.0
  %2234 = vadd.xlane.f32.xlu0 %v2233
  %v2235 = vpop.xlane.xlu0 %2234
  %v2236 = vsel %vm544, %v2224, 0.0
  %2237 = vadd.xlane.f32.xlu0 %v2236
  %v2238 = vpop.xlane.xlu0 %2237
  %v2239 = vsel %vm544, %v2226, 0.0
  %2240 = vadd.xlane.f32.xlu0 %v2239
  %v2241 = vpop.xlane.xlu0 %2240
  %v2242 = vrcp.pop %v2229
  %v2243 = vrcp.pop %v2232
  %v2244 = vrcp.pop %v2235
  %v2245 = vrcp.pop %v2238
  %v2246 = vrcp.pop %v2241
  %v2247 = vmul.f32 %v2218, %v2242
  %v2248 = vmul.f32 %v2220, %v2243
  %v2249 = vmul.f32 %v2222, %v2244
  %v2250 = vmul.f32 %v2224, %v2245
  %v2251 = vmul.f32 %v2226, %v2246
  %2252 = vrot.lane.b32.xlu0 %v1734, 48
  %v2253 = vpop.permute.xlu0 %2252
  %2254 = vrot.lane.b32.xlu0 %v1739, 48
  %v2255 = vpop.permute.xlu0 %2254
  %2256 = vrot.lane.b32.xlu0 %v1744, 48
  %v2257 = vpop.permute.xlu0 %2256
  %2258 = vrot.lane.b32.xlu0 %v1749, 48
  %v2259 = vpop.permute.xlu0 %2258
  %2260 = vrot.lane.b32.xlu0 %v1754, 48
  %v2261 = vpop.permute.xlu0 %2260
  %v2268 = vsel %vm544, %v2247, 0
  %v2271 = vsel %vm544, %v2248, 0
  %v2274 = vsel %vm544, %v2249, 0
  %v2277 = vsel %vm544, %v2250, 0
  %v2280 = vsel %vm544, %v2251, 0
  %2282 = vmatprep.subr.mxu0 0.0
  %2283 = vmatpush1.msra.mxu0 %v2253
  %2284 = vmatprep.subr.mxu0 0.0
  %2285 = vmatpush1.msra.mxu0 %v2255
  %2286 = vmatprep.subr.mxu0 0.0
  %2287 = vmatpush1.msra.mxu0 %v2257
  %2288 = vmatprep.subr.mxu0 0.0
  %2289 = vmatpush1.msra.mxu0 %v2259
  %2290 = vmatprep.subr.mxu0 0.0
  %2291 = vmatpush1.msra.mxu0 %v2261
  %2292 = vmatprep.subr.mxu0 0.0
  %2293 = vmatpush1.msra.mxu0 0.0
  %2294 = vmatprep.subr.mxu0 0.0
  %2295 = vmatpush1.msra.mxu0 0.0
  %2296 = vmatprep.subr.mxu0 0.0
  %2297 = vmatpush1.msra.mxu0 0.0
  %2298 = vmatprep.subr.mxu0 0.0
  %2299 = vmatpush1.msra.mxu0 0.0
  %2300 = vmatprep.subr.mxu0 0.0
  %2301 = vmatpush1.msra.mxu0 0.0
  %2302 = vmatprep.subr.mxu0 0.0
  %2303 = vmatpush1.msra.mxu0 0.0
  %2304 = vmatprep.subr.mxu0 0.0
  %2305 = vmatpush1.msra.mxu0 0.0
  %2306 = vmatprep.subr.mxu0 0.0
  %2307 = vmatpush1.msra.mxu0 0.0
  %2308 = vmatprep.subr.mxu0 0.0
  %2309 = vmatpush1.msra.mxu0 0.0
  %2310 = vmatprep.subr.mxu0 0.0
  %2311 = vmatpush1.msra.mxu0 0.0
  %2312 = vmatprep.subr.mxu0 0.0
  %2313 = vmatpush1.msra.mxu0 0.0
  %2314 = vmatprep.subr.mxu0 0.0
  %2315 = vmatpush1.msra.mxu0 0.0
  %2316 = vmatprep.subr.mxu0 0.0
  %2317 = vmatpush1.msra.mxu0 0.0
  %2318 = vmatprep.subr.mxu0 0.0
  %2319 = vmatpush1.msra.mxu0 0.0
  %2320 = vmatprep.subr.mxu0 0.0
  %2321 = vmatpush1.msra.mxu0 0.0
  %2322 = vmatprep.subr.mxu0 0.0
  %2323 = vmatpush1.msra.mxu0 0.0
  %2324 = vmatprep.subr.mxu0 0.0
  %2325 = vmatpush1.msra.mxu0 0.0
  %2326 = vmatprep.subr.mxu0 0.0
  %2327 = vmatpush1.msra.mxu0 0.0
  %2328 = vmatprep.subr.mxu0 0.0
  %2329 = vmatpush1.msra.mxu0 0.0
  %2330 = vmatprep.subr.mxu0 0.0
  %2331 = vmatpush1.msra.mxu0 0.0
  %2332 = vmatprep.subr.mxu0 0.0
  %2333 = vmatpush1.msra.mxu0 0.0
  %2334 = vmatprep.subr.mxu0 0.0
  %2335 = vmatpush1.msra.mxu0 0.0
  %2336 = vmatprep.subr.mxu0 0.0
  %2337 = vmatpush1.msra.mxu0 0.0
  %2338 = vmatprep.subr.mxu0 0.0
  %2339 = vmatpush1.msra.mxu0 0.0
  %2340 = vmatprep.subr.mxu0 0.0
  %2341 = vmatpush1.msra.mxu0 0.0
  %2342 = vmatprep.subr.mxu0 0.0
  %2343 = vmatpush1.msra.mxu0 0.0
  %2344 = vmatprep.subr.mxu0 0.0
  %2345 = vmatpush1.msra.mxu0 0.0
  %2346 = vmatprep.mubr.f32.mxu0 0.0
  %2347 = vmatmul.mubr.f32.gmra.mrb[0].mxu0 %v2268
  %v2348 = vpop.f32.mrb[0].mxu0
  %v2349 = vadd.f32 0.0, %v2348
  %v2350 = vpop.f32.mrb[0].mxu0
  %2351 = vmatprep.mubr.f32.mxu0 0.0
  %2352 = vmatmul.mubr.f32.gmra.mrb[0].mxu0 %v2271
  %v2353 = vpop.f32.mrb[0].mxu0
  %v2354 = vadd.f32 0.0, %v2353
  %v2355 = vpop.f32.mrb[0].mxu0
  %2356 = vmatprep.mubr.f32.mxu0 0.0
  %2357 = vmatmul.mubr.f32.gmra.mrb[0].mxu0 %v2274
  %v2358 = vpop.f32.mrb[0].mxu0
  %v2359 = vadd.f32 0.0, %v2358
  %v2360 = vpop.f32.mrb[0].mxu0
  %2361 = vmatprep.mubr.f32.mxu0 0.0
  %2362 = vmatmul.mubr.f32.gmra.mrb[0].mxu0 %v2277
  %v2363 = vpop.f32.mrb[0].mxu0
  %v2364 = vadd.f32 0.0, %v2363
  %v2365 = vpop.f32.mrb[0].mxu0
  %2366 = vmatprep.mubr.f32.mxu0 0.0
  %2367 = vmatmul.mubr.f32.gmra.mrb[0].mxu0 %v2280
  %v2368 = vpop.f32.mrb[0].mxu0
  %v2369 = vadd.f32 0.0, %v2368
  %v2370 = vpop.f32.mrb[0].mxu0
  %2371 = vdwg.mxu0
  %2377 = vrot.lane.b32.xlu0 %v2349, 16
  %v2378 = vpop.permute.xlu0 %2377
  %2379 = vrot.lane.b32.xlu0 %v2354, 16
  %v2380 = vpop.permute.xlu0 %2379
  %2381 = vrot.lane.b32.xlu0 %v2359, 16
  %v2382 = vpop.permute.xlu0 %2381
  %2383 = vrot.lane.b32.xlu0 %v2364, 16
  %v2384 = vpop.permute.xlu0 %2383
  %2385 = vrot.lane.b32.xlu0 %v2369, 16
  %v2386 = vpop.permute.xlu0 %2385
  %v2392 = vsel %vm428, %v2044, %v2378
  %v2393 = vsel %vm428, %v2049, %v2380
  %v2394 = vsel %vm428, %v2054, %v2382
  %v2395 = vsel %vm428, %v2059, %v2384
  %v2396 = vsel %vm428, %v2064, %v2386
  %s2397 = scalar_lea.vmem %s8, 32
  %v2398 = vld [vmem:[%s2397] sm:$0xff]
  %v2399 = vld [vmem:[%s2397 + $0x8] sm:$0xff]
  %v2400 = vld [vmem:[%s2397 + $0x10] sm:$0xff]
  %v2401 = vld [vmem:[%s2397 + $0x18] sm:$0xff]
  %v2403 = vsel %vm210, %v2392, 0
  %v2406 = vsel %vm210, %v2393, 0
  %v2409 = vsel %vm210, %v2394, 0
  %v2412 = vsel %vm210, %v2395, 0
  %v2415 = vsel %vm210, %v2396, 0
  %2417 = vmatprep.subr.mxu0 0.0
  %2418 = vmatpush1.msra.mxu0 %v2398
  %2419 = vmatprep.subr.mxu0 0.0
  %2420 = vmatpush1.msra.mxu0 %v2399
  %2421 = vmatprep.subr.mxu0 0.0
  %2422 = vmatpush1.msra.mxu0 %v2400
  %2423 = vmatprep.subr.mxu0 0.0
  %2424 = vmatpush1.msra.mxu0 %v2401
  %2425 = vmatprep.subr.mxu0 0.0
  %2426 = vmatpush1.msra.mxu0 0.0
  %2427 = vmatprep.subr.mxu0 0.0
  %2428 = vmatpush1.msra.mxu0 0.0
  %2429 = vmatprep.subr.mxu0 0.0
  %2430 = vmatpush1.msra.mxu0 0.0
  %2431 = vmatprep.subr.mxu0 0.0
  %2432 = vmatpush1.msra.mxu0 0.0
  %2433 = vmatprep.subr.mxu0 0.0
  %2434 = vmatpush1.msra.mxu0 0.0
  %2435 = vmatprep.subr.mxu0 0.0
  %2436 = vmatpush1.msra.mxu0 0.0
  %2437 = vmatprep.subr.mxu0 0.0
  %2438 = vmatpush1.msra.mxu0 0.0
  %2439 = vmatprep.subr.mxu0 0.0
  %2440 = vmatpush1.msra.mxu0 0.0
  %2441 = vmatprep.subr.mxu0 0.0
  %2442 = vmatpush1.msra.mxu0 0.0
  %2443 = vmatprep.subr.mxu0 0.0
  %2444 = vmatpush1.msra.mxu0 0.0
  %2445 = vmatprep.subr.mxu0 0.0
  %2446 = vmatpush1.msra.mxu0 0.0
  %2447 = vmatprep.subr.mxu0 0.0
  %2448 = vmatpush1.msra.mxu0 0.0
  %2449 = vmatprep.subr.mxu0 0.0
  %2450 = vmatpush1.msra.mxu0 0.0
  %2451 = vmatprep.subr.mxu0 0.0
  %2452 = vmatpush1.msra.mxu0 0.0
  %2453 = vmatprep.subr.mxu0 0.0
  %2454 = vmatpush1.msra.mxu0 0.0
  %2455 = vmatprep.subr.mxu0 0.0
  %2456 = vmatpush1.msra.mxu0 0.0
  %2457 = vmatprep.subr.mxu0 0.0
  %2458 = vmatpush1.msra.mxu0 0.0
  %2459 = vmatprep.subr.mxu0 0.0
  %2460 = vmatpush1.msra.mxu0 0.0
  %2461 = vmatprep.subr.mxu0 0.0
  %2462 = vmatpush1.msra.mxu0 0.0
  %2463 = vmatprep.subr.mxu0 0.0
  %2464 = vmatpush1.msra.mxu0 0.0
  %2465 = vmatprep.subr.mxu0 0.0
  %2466 = vmatpush1.msra.mxu0 0.0
  %2467 = vmatprep.subr.mxu0 0.0
  %2468 = vmatpush1.msra.mxu0 0.0
  %2469 = vmatprep.subr.mxu0 0.0
  %2470 = vmatpush1.msra.mxu0 0.0
  %2471 = vmatprep.subr.mxu0 0.0
  %2472 = vmatpush1.msra.mxu0 0.0
  %2473 = vmatprep.subr.mxu0 0.0
  %2474 = vmatpush1.msra.mxu0 0.0
  %2475 = vmatprep.subr.mxu0 0.0
  %2476 = vmatpush1.msra.mxu0 0.0
  %2477 = vmatprep.subr.mxu0 0.0
  %2478 = vmatpush1.msra.mxu0 0.0
  %2479 = vmatprep.subr.mxu0 0.0
  %2480 = vmatpush1.msra.mxu0 0.0
  %2481 = vmatprep.mubr.f32.mxu0 0.0
  %2482 = vmatmul.mubr.f32.gmra.mrb[0].mxu0 %v2403
  %v2483 = vpop.f32.mrb[0].mxu0
  %v2484 = vadd.f32 0.0, %v2483
  %v2485 = vpop.f32.mrb[0].mxu0
  %2486 = vmatprep.mubr.f32.mxu0 0.0
  %2487 = vmatmul.mubr.f32.gmra.mrb[0].mxu0 %v2406
  %v2488 = vpop.f32.mrb[0].mxu0
  %v2489 = vadd.f32 0.0, %v2488
  %v2490 = vpop.f32.mrb[0].mxu0
  %2491 = vmatprep.mubr.f32.mxu0 0.0
  %2492 = vmatmul.mubr.f32.gmra.mrb[0].mxu0 %v2409
  %v2493 = vpop.f32.mrb[0].mxu0
  %v2494 = vadd.f32 0.0, %v2493
  %v2495 = vpop.f32.mrb[0].mxu0
  %2496 = vmatprep.mubr.f32.mxu0 0.0
  %2497 = vmatmul.mubr.f32.gmra.mrb[0].mxu0 %v2412
  %v2498 = vpop.f32.mrb[0].mxu0
  %v2499 = vadd.f32 0.0, %v2498
  %v2500 = vpop.f32.mrb[0].mxu0
  %2501 = vmatprep.mubr.f32.mxu0 0.0
  %2502 = vmatmul.mubr.f32.gmra.mrb[0].mxu0 %v2415
  %v2503 = vpop.f32.mrb[0].mxu0
  %v2504 = vadd.f32 0.0, %v2503
  %v2505 = vpop.f32.mrb[0].mxu0
  %2506 = vdwg.mxu0
  %v2507 = vadd.f32 %v1551, %v2484
  %v2508 = vadd.f32 %v1552, %v2489
  %v2509 = vadd.f32 %v1553, %v2494
  %v2510 = vadd.f32 %v1554, %v2499
  %v2511 = vadd.f32 %v1555, %v2504
  %s2512 = scalar_lea.vmem %s9, 1
  %v2513 = vld [vmem:[%s2512] sm:$0x1]
  %v2515 = vlaneseq
  %v2516 = vshrl.u32 %v2515, 7
  %v2517 = vsub.s32 0, %v2516
  %v2518 = vrot.slane %v2513, %v2517
  %v2520 = vadd.f32 %v2507, %v2518
  %v2521 = vadd.f32 %v2508, %v2518
  %v2522 = vadd.f32 %v2509, %v2518
  %v2523 = vadd.f32 %v2510, %v2518
  %v2524 = vadd.f32 %v2511, %v2518
  %s2525 = scalar_lea.vmem %s10, 1
  %v2526 = vld [vmem:[%s2525] sm:$0x1]
  %s2527 = scalar_lea.vmem %s11, 1
  %v2528 = vld [vmem:[%s2527] sm:$0x1]
  %v2529 = vsel %vm210, %v2520, 0.0
  %2530 = vadd.xlane.f32.xlu0 %v2529
  %v2531 = vpop.xlane.xlu0 %2530
  %v2532 = vsel %vm210, %v2521, 0.0
  %2533 = vadd.xlane.f32.xlu0 %v2532
  %v2534 = vpop.xlane.xlu0 %2533
  %v2535 = vsel %vm210, %v2522, 0.0
  %2536 = vadd.xlane.f32.xlu0 %v2535
  %v2537 = vpop.xlane.xlu0 %2536
  %v2538 = vsel %vm210, %v2523, 0.0
  %2539 = vadd.xlane.f32.xlu0 %v2538
  %v2540 = vpop.xlane.xlu0 %2539
  %v2541 = vsel %vm210, %v2524, 0.0
  %2542 = vadd.xlane.f32.xlu0 %v2541
  %v2543 = vpop.xlane.xlu0 %2542
  %v2544 = vmul.f32 %v2531, %v226
  %v2545 = vmul.f32 %v2534, %v226
  %v2546 = vmul.f32 %v2537, %v226
  %v2547 = vmul.f32 %v2540, %v226
  %v2548 = vmul.f32 %v2543, %v226
  %v2549 = vsub.f32 %v2520, %v2544
  %v2550 = vsub.f32 %v2521, %v2545
  %v2551 = vsub.f32 %v2522, %v2546
  %v2552 = vsub.f32 %v2523, %v2547
  %v2553 = vsub.f32 %v2524, %v2548
  %v2554 = vmul.f32 %v2549, %v2549
  %v2555 = vmul.f32 %v2550, %v2550
  %v2556 = vmul.f32 %v2551, %v2551
  %v2557 = vmul.f32 %v2552, %v2552
  %v2558 = vmul.f32 %v2553, %v2553
  %v2559 = vsel %vm210, %v2554, 0.0
  %2560 = vadd.xlane.f32.xlu0 %v2559
  %v2561 = vpop.xlane.xlu0 %2560
  %v2562 = vsel %vm210, %v2555, 0.0
  %2563 = vadd.xlane.f32.xlu0 %v2562
  %v2564 = vpop.xlane.xlu0 %2563
  %v2565 = vsel %vm210, %v2556, 0.0
  %2566 = vadd.xlane.f32.xlu0 %v2565
  %v2567 = vpop.xlane.xlu0 %2566
  %v2568 = vsel %vm210, %v2557, 0.0
  %2569 = vadd.xlane.f32.xlu0 %v2568
  %v2570 = vpop.xlane.xlu0 %2569
  %v2571 = vsel %vm210, %v2558, 0.0
  %2572 = vadd.xlane.f32.xlu0 %v2571
  %v2573 = vpop.xlane.xlu0 %2572
  %v2574 = vmul.f32 %v2561, %v226
  %v2575 = vmul.f32 %v2564, %v226
  %v2576 = vmul.f32 %v2567, %v226
  %v2577 = vmul.f32 %v2570, %v226
  %v2578 = vmul.f32 %v2573, %v226
  %v2579 = vadd.f32 %v2574, 1e-05
  %v2580 = vadd.f32 %v2575, 1e-05
  %v2581 = vadd.f32 %v2576, 1e-05
  %v2582 = vadd.f32 %v2577, 1e-05
  %v2583 = vadd.f32 %v2578, 1e-05
  %v2584 = vrsqrt.pop %v2579
  %v2585 = vrsqrt.pop %v2580
  %v2586 = vrsqrt.pop %v2581
  %v2587 = vrsqrt.pop %v2582
  %v2588 = vrsqrt.pop %v2583
  %v2589 = vmul.f32 %v2549, %v2584
  %v2590 = vmul.f32 %v2550, %v2585
  %v2591 = vmul.f32 %v2551, %v2586
  %v2592 = vmul.f32 %v2552, %v2587
  %v2593 = vmul.f32 %v2553, %v2588
  %v2595 = vlaneseq
  %v2596 = vshrl.u32 %v2595, 7
  %v2597 = vsub.s32 0, %v2596
  %v2598 = vrot.slane %v2526, %v2597
  %v2600 = vmul.f32 %v2589, %v2598
  %v2601 = vmul.f32 %v2590, %v2598
  %v2602 = vmul.f32 %v2591, %v2598
  %v2603 = vmul.f32 %v2592, %v2598
  %v2604 = vmul.f32 %v2593, %v2598
  %v2606 = vlaneseq
  %v2607 = vshrl.u32 %v2606, 7
  %v2608 = vsub.s32 0, %v2607
  %v2609 = vrot.slane %v2528, %v2608
  %v2611 = vadd.f32 %v2600, %v2609
  %v2612 = vadd.f32 %v2601, %v2609
  %v2613 = vadd.f32 %v2602, %v2609
  %v2614 = vadd.f32 %v2603, %v2609
  %v2615 = vadd.f32 %v2604, %v2609
  %s2616 = scalar_lea.vmem %s12, 32
  %v2617 = vld [vmem:[%s2616] sm:$0xff]
  %v2618 = vld [vmem:[%s2616 + $0x8] sm:$0xff]
  %v2619 = vld [vmem:[%s2616 + $0x10] sm:$0xff]
  %v2620 = vld [vmem:[%s2616 + $0x18] sm:$0xff]
  %s2621 = scalar_lea.vmem %s13, 1
  %v2622 = vld [vmem:[%s2621] sm:$0x1]
  %v2624 = vlaneseq
  %v2625 = vshrl.u32 %v2624, 7
  %v2626 = vsub.s32 0, %v2625
  %v2627 = vrot.slane %v2622, %v2626
  %v2630 = vsel %vm210, %v2611, 0
  %v2633 = vsel %vm210, %v2612, 0
  %v2636 = vsel %vm210, %v2613, 0
  %v2639 = vsel %vm210, %v2614, 0
  %v2642 = vsel %vm210, %v2615, 0
  %2644 = vmatprep.subr.mxu0 0.0
  %2645 = vmatpush1.msra.mxu0 %v2617
  %2646 = vmatprep.subr.mxu0 0.0
  %2647 = vmatpush1.msra.mxu0 %v2618
  %2648 = vmatprep.subr.mxu0 0.0
  %2649 = vmatpush1.msra.mxu0 %v2619
  %2650 = vmatprep.subr.mxu0 0.0
  %2651 = vmatpush1.msra.mxu0 %v2620
  %2652 = vmatprep.subr.mxu0 0.0
  %2653 = vmatpush1.msra.mxu0 0.0
  %2654 = vmatprep.subr.mxu0 0.0
  %2655 = vmatpush1.msra.mxu0 0.0
  %2656 = vmatprep.subr.mxu0 0.0
  %2657 = vmatpush1.msra.mxu0 0.0
  %2658 = vmatprep.subr.mxu0 0.0
  %2659 = vmatpush1.msra.mxu0 0.0
  %2660 = vmatprep.subr.mxu0 0.0
  %2661 = vmatpush1.msra.mxu0 0.0
  %2662 = vmatprep.subr.mxu0 0.0
  %2663 = vmatpush1.msra.mxu0 0.0
  %2664 = vmatprep.subr.mxu0 0.0
  %2665 = vmatpush1.msra.mxu0 0.0
  %2666 = vmatprep.subr.mxu0 0.0
  %2667 = vmatpush1.msra.mxu0 0.0
  %2668 = vmatprep.subr.mxu0 0.0
  %2669 = vmatpush1.msra.mxu0 0.0
  %2670 = vmatprep.subr.mxu0 0.0
  %2671 = vmatpush1.msra.mxu0 0.0
  %2672 = vmatprep.subr.mxu0 0.0
  %2673 = vmatpush1.msra.mxu0 0.0
  %2674 = vmatprep.subr.mxu0 0.0
  %2675 = vmatpush1.msra.mxu0 0.0
  %2676 = vmatprep.subr.mxu0 0.0
  %2677 = vmatpush1.msra.mxu0 0.0
  %2678 = vmatprep.subr.mxu0 0.0
  %2679 = vmatpush1.msra.mxu0 0.0
  %2680 = vmatprep.subr.mxu0 0.0
  %2681 = vmatpush1.msra.mxu0 0.0
  %2682 = vmatprep.subr.mxu0 0.0
  %2683 = vmatpush1.msra.mxu0 0.0
  %2684 = vmatprep.subr.mxu0 0.0
  %2685 = vmatpush1.msra.mxu0 0.0
  %2686 = vmatprep.subr.mxu0 0.0
  %2687 = vmatpush1.msra.mxu0 0.0
  %2688 = vmatprep.subr.mxu0 0.0
  %2689 = vmatpush1.msra.mxu0 0.0
  %2690 = vmatprep.subr.mxu0 0.0
  %2691 = vmatpush1.msra.mxu0 0.0
  %2692 = vmatprep.subr.mxu0 0.0
  %2693 = vmatpush1.msra.mxu0 0.0
  %2694 = vmatprep.subr.mxu0 0.0
  %2695 = vmatpush1.msra.mxu0 0.0
  %2696 = vmatprep.subr.mxu0 0.0
  %2697 = vmatpush1.msra.mxu0 0.0
  %2698 = vmatprep.subr.mxu0 0.0
  %2699 = vmatpush1.msra.mxu0 0.0
  %2700 = vmatprep.subr.mxu0 0.0
  %2701 = vmatpush1.msra.mxu0 0.0
  %2702 = vmatprep.subr.mxu0 0.0
  %2703 = vmatpush1.msra.mxu0 0.0
  %2704 = vmatprep.subr.mxu0 0.0
  %2705 = vmatpush1.msra.mxu0 0.0
  %2706 = vmatprep.subr.mxu0 0.0
  %2707 = vmatpush1.msra.mxu0 0.0
  %2708 = vmatprep.mubr.f32.mxu0 0.0
  %2709 = vmatmul.mubr.f32.gmra.mrb[0].mxu0 %v2630
  %v2710 = vpop.f32.mrb[0].mxu0
  %v2711 = vadd.f32 %v2627, %v2710
  %v2712 = vpop.f32.mrb[0].mxu0
  %2713 = vmatprep.mubr.f32.mxu0 0.0
  %2714 = vmatmul.mubr.f32.gmra.mrb[0].mxu0 %v2633
  %v2715 = vpop.f32.mrb[0].mxu0
  %v2716 = vadd.f32 %v2627, %v2715
  %v2717 = vpop.f32.mrb[0].mxu0
  %2718 = vmatprep.mubr.f32.mxu0 0.0
  %2719 = vmatmul.mubr.f32.gmra.mrb[0].mxu0 %v2636
  %v2720 = vpop.f32.mrb[0].mxu0
  %v2721 = vadd.f32 %v2627, %v2720
  %v2722 = vpop.f32.mrb[0].mxu0
  %2723 = vmatprep.mubr.f32.mxu0 0.0
  %2724 = vmatmul.mubr.f32.gmra.mrb[0].mxu0 %v2639
  %v2725 = vpop.f32.mrb[0].mxu0
  %v2726 = vadd.f32 %v2627, %v2725
  %v2727 = vpop.f32.mrb[0].mxu0
  %2728 = vmatprep.mubr.f32.mxu0 0.0
  %2729 = vmatmul.mubr.f32.gmra.mrb[0].mxu0 %v2642
  %v2730 = vpop.f32.mrb[0].mxu0
  %v2731 = vadd.f32 %v2627, %v2730
  %v2732 = vpop.f32.mrb[0].mxu0
  %2733 = vdwg.mxu0
  %v2734 = vmul.f32 %v2711, %v2711
  %v2735 = vmul.f32 %v2716, %v2716
  %v2736 = vmul.f32 %v2721, %v2721
  %v2737 = vmul.f32 %v2726, %v2726
  %v2738 = vmul.f32 %v2731, %v2731
  %v2739 = vmul.f32 %v2711, %v2734
  %v2740 = vmul.f32 %v2716, %v2735
  %v2741 = vmul.f32 %v2721, %v2736
  %v2742 = vmul.f32 %v2726, %v2737
  %v2743 = vmul.f32 %v2731, %v2738
  %v2744 = vmul.f32 %v2739, 0.044715
  %v2745 = vmul.f32 %v2740, 0.044715
  %v2746 = vmul.f32 %v2741, 0.044715
  %v2747 = vmul.f32 %v2742, 0.044715
  %v2748 = vmul.f32 %v2743, 0.044715
  %v2749 = vadd.f32 %v2711, %v2744
  %v2750 = vadd.f32 %v2716, %v2745
  %v2751 = vadd.f32 %v2721, %v2746
  %v2752 = vadd.f32 %v2726, %v2747
  %v2753 = vadd.f32 %v2731, %v2748
  %v2754 = vmul.f32 %v2749, 0.7978846
  %v2755 = vmul.f32 %v2750, 0.7978846
  %v2756 = vmul.f32 %v2751, 0.7978846
  %v2757 = vmul.f32 %v2752, 0.7978846
  %v2758 = vmul.f32 %v2753, 0.7978846
  %v2759 = vtanh.pop %v2754
  %v2760 = vtanh.pop %v2755
  %v2761 = vtanh.pop %v2756
  %v2762 = vtanh.pop %v2757
  %v2763 = vtanh.pop %v2758
  %v2764 = vadd.f32 %v2759, 1.0
  %v2765 = vadd.f32 %v2760, 1.0
  %v2766 = vadd.f32 %v2761, 1.0
  %v2767 = vadd.f32 %v2762, 1.0
  %v2768 = vadd.f32 %v2763, 1.0
  %v2769 = vmul.f32 %v2764, 0.5
  %v2770 = vmul.f32 %v2765, 0.5
  %v2771 = vmul.f32 %v2766, 0.5
  %v2772 = vmul.f32 %v2767, 0.5
  %v2773 = vmul.f32 %v2768, 0.5
  %v2774 = vmul.f32 %v2711, %v2769
  %v2775 = vmul.f32 %v2716, %v2770
  %v2776 = vmul.f32 %v2721, %v2771
  %v2777 = vmul.f32 %v2726, %v2772
  %v2778 = vmul.f32 %v2731, %v2773
  %s2779 = scalar_lea.vmem %s14, 64
  %v2780 = vld [vmem:[%s2779] sm:$0xff]
  %v2781 = vld [vmem:[%s2779 + $0x8] sm:$0xff]
  %v2782 = vld [vmem:[%s2779 + $0x10] sm:$0xff]
  %v2783 = vld [vmem:[%s2779 + $0x18] sm:$0xff]
  %v2784 = vld [vmem:[%s2779 + $0x20] sm:$0xff]
  %v2785 = vld [vmem:[%s2779 + $0x28] sm:$0xff]
  %v2786 = vld [vmem:[%s2779 + $0x30] sm:$0xff]
  %v2787 = vld [vmem:[%s2779 + $0x38] sm:$0xff]
  %v2789 = vsel %vm96, %v2774, 0
  %v2792 = vsel %vm96, %v2775, 0
  %v2795 = vsel %vm96, %v2776, 0
  %v2798 = vsel %vm96, %v2777, 0
  %v2801 = vsel %vm96, %v2778, 0
  %2803 = vmatprep.subr.mxu0 0.0
  %2804 = vmatpush1.msra.mxu0 %v2780
  %2805 = vmatprep.subr.mxu0 0.0
  %2806 = vmatpush1.msra.mxu0 %v2781
  %2807 = vmatprep.subr.mxu0 0.0
  %2808 = vmatpush1.msra.mxu0 %v2782
  %2809 = vmatprep.subr.mxu0 0.0
  %2810 = vmatpush1.msra.mxu0 %v2783
  %2811 = vmatprep.subr.mxu0 0.0
  %2812 = vmatpush1.msra.mxu0 %v2784
  %2813 = vmatprep.subr.mxu0 0.0
  %2814 = vmatpush1.msra.mxu0 %v2785
  %2815 = vmatprep.subr.mxu0 0.0
  %2816 = vmatpush1.msra.mxu0 %v2786
  %2817 = vmatprep.subr.mxu0 0.0
  %2818 = vmatpush1.msra.mxu0 %v2787
  %2819 = vmatprep.subr.mxu0 0.0
  %2820 = vmatpush1.msra.mxu0 0.0
  %2821 = vmatprep.subr.mxu0 0.0
  %2822 = vmatpush1.msra.mxu0 0.0
  %2823 = vmatprep.subr.mxu0 0.0
  %2824 = vmatpush1.msra.mxu0 0.0
  %2825 = vmatprep.subr.mxu0 0.0
  %2826 = vmatpush1.msra.mxu0 0.0
  %2827 = vmatprep.subr.mxu0 0.0
  %2828 = vmatpush1.msra.mxu0 0.0
  %2829 = vmatprep.subr.mxu0 0.0
  %2830 = vmatpush1.msra.mxu0 0.0
  %2831 = vmatprep.subr.mxu0 0.0
  %2832 = vmatpush1.msra.mxu0 0.0
  %2833 = vmatprep.subr.mxu0 0.0
  %2834 = vmatpush1.msra.mxu0 0.0
  %2835 = vmatprep.subr.mxu0 0.0
  %2836 = vmatpush1.msra.mxu0 0.0
  %2837 = vmatprep.subr.mxu0 0.0
  %2838 = vmatpush1.msra.mxu0 0.0
  %2839 = vmatprep.subr.mxu0 0.0
  %2840 = vmatpush1.msra.mxu0 0.0
  %2841 = vmatprep.subr.mxu0 0.0
  %2842 = vmatpush1.msra.mxu0 0.0
  %2843 = vmatprep.subr.mxu0 0.0
  %2844 = vmatpush1.msra.mxu0 0.0
  %2845 = vmatprep.subr.mxu0 0.0
  %2846 = vmatpush1.msra.mxu0 0.0
  %2847 = vmatprep.subr.mxu0 0.0
  %2848 = vmatpush1.msra.mxu0 0.0
  %2849 = vmatprep.subr.mxu0 0.0
  %2850 = vmatpush1.msra.mxu0 0.0
  %2851 = vmatprep.subr.mxu0 0.0
  %2852 = vmatpush1.msra.mxu0 0.0
  %2853 = vmatprep.subr.mxu0 0.0
  %2854 = vmatpush1.msra.mxu0 0.0
  %2855 = vmatprep.subr.mxu0 0.0
  %2856 = vmatpush1.msra.mxu0 0.0
  %2857 = vmatprep.subr.mxu0 0.0
  %2858 = vmatpush1.msra.mxu0 0.0
  %2859 = vmatprep.subr.mxu0 0.0
  %2860 = vmatpush1.msra.mxu0 0.0
  %2861 = vmatprep.subr.mxu0 0.0
  %2862 = vmatpush1.msra.mxu0 0.0
  %2863 = vmatprep.subr.mxu0 0.0
  %2864 = vmatpush1.msra.mxu0 0.0
  %2865 = vmatprep.subr.mxu0 0.0
  %2866 = vmatpush1.msra.mxu0 0.0
  %2867 = vmatprep.mubr.f32.mxu0 0.0
  %2868 = vmatmul.mubr.f32.gmra.mrb[0].mxu0 %v2789
  %v2869 = vpop.f32.mrb[0].mxu0
  %v2870 = vadd.f32 0.0, %v2869
  %v2871 = vpop.f32.mrb[0].mxu0
  %2872 = vmatprep.mubr.f32.mxu0 0.0
  %2873 = vmatmul.mubr.f32.gmra.mrb[0].mxu0 %v2792
  %v2874 = vpop.f32.mrb[0].mxu0
  %v2875 = vpop.f32.mrb[0].mxu0
  %2876 = vmatprep.mubr.f32.mxu0 0.0
  %2877 = vmatmul.mubr.f32.gmra.mrb[0].mxu0 %v2795
  %v2878 = vpop.f32.mrb[0].mxu0
  %v2879 = vpop.f32.mrb[0].mxu0
  %2880 = vmatprep.mubr.f32.mxu0 0.0
  %2881 = vmatmul.mubr.f32.gmra.mrb[0].mxu0 %v2798
  %v2882 = vpop.f32.mrb[0].mxu0
  %v2883 = vpop.f32.mrb[0].mxu0
  %2884 = vmatprep.mubr.f32.mxu0 0.0
  %2885 = vmatmul.mubr.f32.gmra.mrb[0].mxu0 %v2801
  %v2886 = vpop.f32.mrb[0].mxu0
  %v2887 = vpop.f32.mrb[0].mxu0
  %2888 = vdwg.mxu0
  %v2889 = vadd.f32 %v2520, %v2870
  %s2890 = scalar_lea.vmem %s15, 1
  %v2891 = vld [vmem:[%s2890] sm:$0x1]
  %v2893 = vlaneseq
  %v2894 = vshrl.u32 %v2893, 7
  %v2895 = vsub.s32 0, %v2894
  %v2896 = vrot.slane %v2891, %v2895
  %v2898 = vadd.f32 %v2889, %v2896
  %v2899 = vld [vmem:[%s16] sm:$0x1]
  %v2900 = vld [vmem:[%s17] sm:$0x1]
  %v2901 = vsel %vm210, %v2898, 0.0
  %2902 = vadd.xlane.f32.xlu0 %v2901
  %v2903 = vpop.xlane.xlu0 %2902
  %v2904 = vmul.f32 %v2903, %v226
  %v2905 = vsub.f32 %v2898, %v2904
  %v2906 = vmul.f32 %v2905, %v2905
  %v2907 = vsel %vm210, %v2906, 0.0
  %2908 = vadd.xlane.f32.xlu0 %v2907
  %v2909 = vpop.xlane.xlu0 %2908
  %v2910 = vmul.f32 %v2909, %v226
  %v2911 = vadd.f32 %v2910, 1e-05
  %v2912 = vrsqrt.pop %v2911
  %v2913 = vmul.f32 %v2905, %v2912
  %v2915 = vlaneseq
  %v2916 = vshrl.u32 %v2915, 7
  %v2917 = vsub.s32 0, %v2916
  %v2918 = vrot.slane %v2899, %v2917
  %v2920 = vmul.f32 %v2913, %v2918
  %v2922 = vlaneseq
  %v2923 = vshrl.u32 %v2922, 7
  %v2924 = vsub.s32 0, %v2923
  %v2925 = vrot.slane %v2900, %v2924
  %v2927 = vadd.f32 %v2920, %v2925
  %v2928 = vld [vmem:[%s18] sm:$0x1]
  %v2929 = vld [vmem:[%s19] sm:$0x1]
  %v2930 = vsel %vm210, %v2927, 0.0
  %2931 = vadd.xlane.f32.xlu0 %v2930
  %v2932 = vpop.xlane.xlu0 %2931
  %v2933 = vmul.f32 %v2932, %v226
  %v2934 = vsub.f32 %v2927, %v2933
  %v2935 = vmul.f32 %v2934, %v2934
  %v2936 = vsel %vm210, %v2935, 0.0
  %2937 = vadd.xlane.f32.xlu0 %v2936
  %v2938 = vpop.xlane.xlu0 %2937
  %v2939 = vmul.f32 %v2938, %v226
  %v2940 = vadd.f32 %v2939, 1e-05
  %v2941 = vrsqrt.pop %v2940
  %v2942 = vmul.f32 %v2934, %v2941
  %v2944 = vlaneseq
  %v2945 = vshrl.u32 %v2944, 7
  %v2946 = vsub.s32 0, %v2945
  %v2947 = vrot.slane %v2928, %v2946
  %v2949 = vmul.f32 %v2942, %v2947
  %v2951 = vlaneseq
  %v2952 = vshrl.u32 %v2951, 7
  %v2953 = vsub.s32 0, %v2952
  %v2954 = vrot.slane %v2929, %v2953
  %v2956 = vadd.f32 %v2949, %v2954
  %v2957 = vld [vmem:[%s20] sm:$0xff]
  %v2958 = vld [vmem:[%s20 + $0x8] sm:$0xff]
  %v2959 = vld [vmem:[%s20 + $0x10] sm:$0xff]
  %v2960 = vld [vmem:[%s20 + $0x18] sm:$0xff]
  %v2961 = vld [vmem:[%s21] sm:$0x1]
  %v2963 = vlaneseq
  %v2964 = vshrl.u32 %v2963, 7
  %v2965 = vsub.s32 0, %v2964
  %v2966 = vrot.slane %v2961, %v2965
  %v2969 = vsel %vm210, %v2956, 0
  %2971 = vmatprep.subr.mxu0 0.0
  %2972 = vmatpush1.msra.mxu0 %v2957
  %2973 = vmatprep.subr.mxu0 0.0
  %2974 = vmatpush1.msra.mxu0 %v2958
  %2975 = vmatprep.subr.mxu0 0.0
  %2976 = vmatpush1.msra.mxu0 %v2959
  %2977 = vmatprep.subr.mxu0 0.0
  %2978 = vmatpush1.msra.mxu0 %v2960
  %2979 = vmatprep.subr.mxu0 0.0
  %2980 = vmatpush1.msra.mxu0 0.0
  %2981 = vmatprep.subr.mxu0 0.0
  %2982 = vmatpush1.msra.mxu0 0.0
  %2983 = vmatprep.subr.mxu0 0.0
  %2984 = vmatpush1.msra.mxu0 0.0
  %2985 = vmatprep.subr.mxu0 0.0
  %2986 = vmatpush1.msra.mxu0 0.0
  %2987 = vmatprep.subr.mxu0 0.0
  %2988 = vmatpush1.msra.mxu0 0.0
  %2989 = vmatprep.subr.mxu0 0.0
  %2990 = vmatpush1.msra.mxu0 0.0
  %2991 = vmatprep.subr.mxu0 0.0
  %2992 = vmatpush1.msra.mxu0 0.0
  %2993 = vmatprep.subr.mxu0 0.0
  %2994 = vmatpush1.msra.mxu0 0.0
  %2995 = vmatprep.subr.mxu0 0.0
  %2996 = vmatpush1.msra.mxu0 0.0
  %2997 = vmatprep.subr.mxu0 0.0
  %2998 = vmatpush1.msra.mxu0 0.0
  %2999 = vmatprep.subr.mxu0 0.0
  %3000 = vmatpush1.msra.mxu0 0.0
  %3001 = vmatprep.subr.mxu0 0.0
  %3002 = vmatpush1.msra.mxu0 0.0
  %3003 = vmatprep.subr.mxu0 0.0
  %3004 = vmatpush1.msra.mxu0 0.0
  %3005 = vmatprep.subr.mxu0 0.0
  %3006 = vmatpush1.msra.mxu0 0.0
  %3007 = vmatprep.subr.mxu0 0.0
  %3008 = vmatpush1.msra.mxu0 0.0
  %3009 = vmatprep.subr.mxu0 0.0
  %3010 = vmatpush1.msra.mxu0 0.0
  %3011 = vmatprep.subr.mxu0 0.0
  %3012 = vmatpush1.msra.mxu0 0.0
  %3013 = vmatprep.subr.mxu0 0.0
  %3014 = vmatpush1.msra.mxu0 0.0
  %3015 = vmatprep.subr.mxu0 0.0
  %3016 = vmatpush1.msra.mxu0 0.0
  %3017 = vmatprep.subr.mxu0 0.0
  %3018 = vmatpush1.msra.mxu0 0.0
  %3019 = vmatprep.subr.mxu0 0.0
  %3020 = vmatpush1.msra.mxu0 0.0
  %3021 = vmatprep.subr.mxu0 0.0
  %3022 = vmatpush1.msra.mxu0 0.0
  %3023 = vmatprep.subr.mxu0 0.0
  %3024 = vmatpush1.msra.mxu0 0.0
  %3025 = vmatprep.subr.mxu0 0.0
  %3026 = vmatpush1.msra.mxu0 0.0
  %3027 = vmatprep.subr.mxu0 0.0
  %3028 = vmatpush1.msra.mxu0 0.0
  %3029 = vmatprep.subr.mxu0 0.0
  %3030 = vmatpush1.msra.mxu0 0.0
  %3031 = vmatprep.subr.mxu0 0.0
  %3032 = vmatpush1.msra.mxu0 0.0
  %3033 = vmatprep.subr.mxu0 0.0
  %3034 = vmatpush1.msra.mxu0 0.0
  %3035 = vmatprep.mubr.f32.mxu0 0.0
  %3036 = vmatmul.mubr.f32.gmra.mrb[0].mxu0 %v2969
  %v3037 = vpop.f32.mrb[0].mxu0
  %v3038 = vadd.f32 %v2966, %v3037
  %v3039 = vpop.f32.mrb[0].mxu0
  %3040 = vdwg.mxu0
  %v3041 = vmax.f32 %v3038, 0.0
  %v3042 = vld [vmem:[%s22] sm:$0xff]
  %v3043 = vld [vmem:[%s22 + $0x8] sm:$0xff]
  %v3044 = vld [vmem:[%s22 + $0x10] sm:$0xff]
  %v3045 = vld [vmem:[%s22 + $0x18] sm:$0xff]
  %v3046 = vld [vmem:[%s22 + $0x20] sm:$0xff]
  %v3047 = vld [vmem:[%s22 + $0x28] sm:$0xff]
  %v3048 = vld [vmem:[%s22 + $0x30] sm:$0xff]
  %v3049 = vld [vmem:[%s22 + $0x38] sm:$0xff]
  %v3050 = vld [vmem:[%s23] sm:$0x1]
  %v3052 = vlaneseq
  %v3053 = vshrl.u32 %v3052, 7
  %v3054 = vsub.s32 0, %v3053
  %v3055 = vrot.slane %v3050, %v3054
  %v3058 = vsel %vm96, %v3041, 0
  %3060 = vmatprep.subr.mxu0 0.0
  %3061 = vmatpush1.msra.mxu0 %v3042
  %3062 = vmatprep.subr.mxu0 0.0
  %3063 = vmatpush1.msra.mxu0 %v3043
  %3064 = vmatprep.subr.mxu0 0.0
  %3065 = vmatpush1.msra.mxu0 %v3044
  %3066 = vmatprep.subr.mxu0 0.0
  %3067 = vmatpush1.msra.mxu0 %v3045
  %3068 = vmatprep.subr.mxu0 0.0
  %3069 = vmatpush1.msra.mxu0 %v3046
  %3070 = vmatprep.subr.mxu0 0.0
  %3071 = vmatpush1.msra.mxu0 %v3047
  %3072 = vmatprep.subr.mxu0 0.0
  %3073 = vmatpush1.msra.mxu0 %v3048
  %3074 = vmatprep.subr.mxu0 0.0
  %3075 = vmatpush1.msra.mxu0 %v3049
  %3076 = vmatprep.subr.mxu0 0.0
  %3077 = vmatpush1.msra.mxu0 0.0
  %3078 = vmatprep.subr.mxu0 0.0
  %3079 = vmatpush1.msra.mxu0 0.0
  %3080 = vmatprep.subr.mxu0 0.0
  %3081 = vmatpush1.msra.mxu0 0.0
  %3082 = vmatprep.subr.mxu0 0.0
  %3083 = vmatpush1.msra.mxu0 0.0
  %3084 = vmatprep.subr.mxu0 0.0
  %3085 = vmatpush1.msra.mxu0 0.0
  %3086 = vmatprep.subr.mxu0 0.0
  %3087 = vmatpush1.msra.mxu0 0.0
  %3088 = vmatprep.subr.mxu0 0.0
  %3089 = vmatpush1.msra.mxu0 0.0
  %3090 = vmatprep.subr.mxu0 0.0
  %3091 = vmatpush1.msra.mxu0 0.0
  %3092 = vmatprep.subr.mxu0 0.0
  %3093 = vmatpush1.msra.mxu0 0.0
  %3094 = vmatprep.subr.mxu0 0.0
  %3095 = vmatpush1.msra.mxu0 0.0
  %3096 = vmatprep.subr.mxu0 0.0
  %3097 = vmatpush1.msra.mxu0 0.0
  %3098 = vmatprep.subr.mxu0 0.0
  %3099 = vmatpush1.msra.mxu0 0.0
  %3100 = vmatprep.subr.mxu0 0.0
  %3101 = vmatpush1.msra.mxu0 0.0
  %3102 = vmatprep.subr.mxu0 0.0
  %3103 = vmatpush1.msra.mxu0 0.0
  %3104 = vmatprep.subr.mxu0 0.0
  %3105 = vmatpush1.msra.mxu0 0.0
  %3106 = vmatprep.subr.mxu0 0.0
  %3107 = vmatpush1.msra.mxu0 0.0
  %3108 = vmatprep.subr.mxu0 0.0
  %3109 = vmatpush1.msra.mxu0 0.0
  %3110 = vmatprep.subr.mxu0 0.0
  %3111 = vmatpush1.msra.mxu0 0.0
  %3112 = vmatprep.subr.mxu0 0.0
  %3113 = vmatpush1.msra.mxu0 0.0
  %3114 = vmatprep.subr.mxu0 0.0
  %3115 = vmatpush1.msra.mxu0 0.0
  %3116 = vmatprep.subr.mxu0 0.0
  %3117 = vmatpush1.msra.mxu0 0.0
  %3118 = vmatprep.subr.mxu0 0.0
  %3119 = vmatpush1.msra.mxu0 0.0
  %3120 = vmatprep.subr.mxu0 0.0
  %3121 = vmatpush1.msra.mxu0 0.0
  %3122 = vmatprep.subr.mxu0 0.0
  %3123 = vmatpush1.msra.mxu0 0.0
  %3124 = vmatprep.mubr.f32.mxu0 0.0
  %3125 = vmatmul.mubr.f32.gmra.mrb[0].mxu0 %v3058
  %v3126 = vpop.f32.mrb[0].mxu0
  %v3127 = vadd.f32 %v3055, %v3126
  %v3128 = vpop.f32.mrb[0].mxu0
  %3129 = vdwg.mxu0
  %vm3130 = vcmask 64512
  %3131 = vst.msk [vmem:[%s24] sm:$0xff] %vm3130, %v3127
  // Predicated region
  $region98: #{wdmcnet_forward.1} parent=0 // pred_check
    _
  $region99: #{wdmcnet_forward.1} parent=0 // pred_check_branch
    %3133 = sbr.rel (0) target = $region101
  $region100: #{wdmcnet_forward.1} parent=0 // pred_region
    _
  $region101: #{wdmcnet_forward.1} parent=0 // pred_fallthru
    _
  // Predicated region
  $region102: #{wdmcnet_forward.1} parent=0 // pred_check
    _
  $region103: #{wdmcnet_forward.1} parent=0 // pred_check_branch
    %3135 = sbr.rel (0) target = $region105
  $region104: #{wdmcnet_forward.1} parent=0 // pred_region
    _
  $region105: #{wdmcnet_forward.1} parent=0 // pred_fallthru
    _

</llo_original>
